<compile_context>
chip_gen: v5e
topology: v5e:2x2
jax: 0.10.0
libtpu: 0.0.40
codegen_flags: <defaults>
</compile_context>

<pallas_src>
import functools
import math

import jax
import jax.numpy as jnp
from jax.experimental import pallas as pl
from jax.experimental.pallas import tpu as pltpu


def transformer_block_kernel(
    x_ref,
    wq_ref, bq_ref, wkv_ref, bkv_ref,
    wout_ref, bout_ref,
    ln1_g_ref, ln1_b_ref,
    w1_ref, b1_ref, w2_ref, b2_ref,
    ln2_g_ref, ln2_b_ref,
    o_ref,
    kT_scr, vT_scr,
    *, nhead, q_tile):
    """One (batch, q-tile) grid step of the transformer block.

    Host-side pre-transposed layouts (kernel never re-lays-out weights):
      wq  : (D, D)  = W_q.T (1/sqrt(E) folded in), rows ordered (head, head_dim) [bf16]
      wkv : (2D, D) = [W_k.T ; W_v.T] stacked                                    [bf16]
      bq  : (D, 1), bkv : (2D, 1)                                                [f32]
      wout: (D, D)  output projection (concat-head input rows)                   [bf16]
      w1  : (D, F), w2 : (F, D)                                                  [bf16]
    """
    eps = 1e-5
    H = nhead
    tS = q_tile
    S = x_ref.shape[1]
    D = x_ref.shape[2]
    E = D // H
    bf16 = jnp.bfloat16

    # ---- fused K/V projection: once per batch element (q-tile 0); result kept
    # in bf16 VMEM scratch across the (arbitrary) q-tile grid axis. -------------
    @pl.when(pl.program_id(1) == 0)
    def _():
        x_kv = x_ref[0].astype(bf16)                                  # (S, D)
        kvT = jax.lax.dot_general(                                    # (2D, S)
            wkv_ref[...], x_kv, (((1,), (1,)), ((), ())),
            preferred_element_type=jnp.float32)
        kvT = kvT + bkv_ref[...]
        kT_scr[...] = kvT[:D].reshape(H, E, S).astype(kT_scr.dtype)   # (H, E, S)
        vT_scr[...] = kvT[D:].reshape(H, E, S).astype(vT_scr.dtype)   # (H, E, S)

    # ---- query tile sliced in-kernel from the per-batch block (f32 residual) --
    q_start = pl.multiple_of(pl.program_id(1) * tS, tS)
    x_q = x_ref[0, pl.ds(q_start, tS), :]                             # (tS, D) f32

    # ---- Q projection (1/sqrt(E) scale already folded into wq/bq) -------------
    qT = jax.lax.dot_general(                                         # (D, tS)
        wq_ref[...], x_q.astype(bf16), (((1,), (1,)), ((), ())),
        preferred_element_type=jnp.float32)
    qT = (qT + bq_ref[...]).reshape(H, E, tS)                         # (H, E, tS)

    # ---- scores + softmax, batched over heads on the MXU ----------------------
    scores = jax.lax.dot_general(                                     # (H, tS, S)
        qT.astype(bf16), kT_scr[...],
        (((1,), (1,)), ((0,), (0,))),
        preferred_element_type=jnp.float32)
    scores = scores - jnp.max(scores, axis=-1, keepdims=True)
    p = jnp.exp(scores)
    # Approximate reciprocal rides the EUP slot; rows sum to 1 within ~1e-3.
    p = p * pl.reciprocal(jnp.sum(p, axis=-1, keepdims=True), approx=True)

    # ---- attention output in (H, E, tS), merged to (D, tS) for free, then one
    # dense (tS, D) x (D, D) output projection (full-D MXU contraction). --------
    oT = jax.lax.dot_general(                                         # (H, E, tS)
        vT_scr[...], p.astype(bf16),
        (((2,), (2,)), ((0,), (0,))),
        preferred_element_type=jnp.float32)
    o_flat = oT.reshape(D, tS).T                                      # (tS, D) via XLU
    attn = jnp.dot(o_flat.astype(bf16), wout_ref[...],                # (tS, D)
                   preferred_element_type=jnp.float32) + bout_ref[...]

    # ---- residual + LayerNorm1 (dropout = identity in eval mode) --------------
    y = x_q + attn
    mu = jnp.mean(y, axis=-1, keepdims=True)
    var = jnp.mean((y - mu) ** 2, axis=-1, keepdims=True)
    y = (y - mu) * jax.lax.rsqrt(var + eps) * ln1_g_ref[...] + ln1_b_ref[...]

    # ---- feed-forward (exact erf GELU, matching nn.GELU default) --------------
    h1 = jnp.dot(y.astype(bf16), w1_ref[...],
                 preferred_element_type=jnp.float32) + b1_ref[...]
    h1 = 0.5 * h1 * (1.0 + jax.lax.erf(h1 * (1.0 / math.sqrt(2.0))))
    ff = jnp.dot(h1.astype(bf16), w2_ref[...],
                 preferred_element_type=jnp.float32) + b2_ref[...]

    # ---- residual + LayerNorm2 -------------------------------------------------
    z = y + ff
    mu2 = jnp.mean(z, axis=-1, keepdims=True)
    var2 = jnp.mean((z - mu2) ** 2, axis=-1, keepdims=True)
    z = (z - mu2) * jax.lax.rsqrt(var2 + eps) * ln2_g_ref[...] + ln2_b_ref[...]

    o_ref[0] = z.astype(o_ref.dtype)


def _vmem_bytes_estimate(tS, S, D, H, F, single_buffer_weights=True):
    """Rough working-set estimate for tile selection / vmem_limit_bytes."""
    wmul = 1 if single_buffer_weights else 2
    weight_b = 2 * (4 * D * D + 2 * D * F) * wmul        # bf16 weights
    bias_b = 4 * (10 * D + F) * wmul                     # f32 biases / LN params
    x_blk = 2 * 4 * S * D                                # f32 x block (double-buffered)
    out_blk = 2 * 4 * tS * D                             # f32 out tile (double-buffered)
    kv_scr = 2 * 2 * D * S                               # bf16 K^T / V^T scratch
    interm = 4 * (2 * H * tS * S + 2 * D * tS + tS * F + 6 * tS * D)
    return weight_b + bias_b + x_blk + out_blk + kv_scr + interm


def _choose_q_tile(S, D, H, F, vmem_budget):
    """Largest q-tile (<= 512, dividing S) whose working set fits the budget."""
    cands = [t for t in (512, 256, 128, 64, 32, 16, 8) if t <= S and S % t == 0]
    if S <= 512 and S not in cands:
        cands.insert(0, S)
    if not cands:
        # TODO(synk): ragged / awkward S with no divisor <= 512 — no sub-tiling.
        cands = [S]
    for t in cands:
        if _vmem_bytes_estimate(t, S, D, H, F) <= vmem_budget:
            return t
    return cands[-1]


def transformer_block(x, params, nhead):
    B, S, D = x.shape
    assert D % nhead == 0, "d_model must be divisible by nhead"
    H = nhead
    E = D // H
    F = params["w1"].shape[1]
    scale = 1.0 / math.sqrt(E)
    f32, bf16 = jnp.float32, jnp.bfloat16

    # ---- generation-aware VMEM budget -----------------------------------------
    try:
        vmem_cap = int(pltpu.get_tpu_info().vmem_capacity_bytes)
    except Exception:
        vmem_cap = 64 * 1024 * 1024          # conservative (v7x per-core) fallback
    vmem_budget = int(0.85 * vmem_cap)
    tS = _choose_q_tile(S, D, H, F, vmem_budget)
    nq = S // tS
    need = _vmem_bytes_estimate(tS, S, D, H, F)
    vmem_limit = int(min(max(32 * 1024 * 1024, int(1.25 * need)), vmem_budget))

    # ---- host-side weight re-layout / pre-scaling / bf16 cast -----------------
    w_qkv = params["w_qkv"].astype(f32)                      # (D, 3D)
    b_qkv = params["b_qkv"].reshape(3 * D).astype(f32)
    wq_t = (w_qkv[:, :D] * scale).T.astype(bf16)             # (D, D) rows=(h, e)
    bq = (b_qkv[:D] * scale).reshape(D, 1).astype(f32)
    wkv_t = w_qkv[:, D:].T.astype(bf16)                      # (2D, D): [K ; V] rows
    bkv = b_qkv[D:].reshape(2 * D, 1).astype(f32)
    wout = params["w_out"].astype(bf16)                      # (D, D) concat-head rows
    b_out = params["b_out"].reshape(1, D).astype(f32)
    w1 = params["w1"].astype(bf16)
    b1 = params["b1"].reshape(1, F).astype(f32)
    w2 = params["w2"].astype(bf16)
    b2 = params["b2"].reshape(1, D).astype(f32)
    ln1_g = params["ln1_g"].reshape(1, D).astype(f32)
    ln1_b = params["ln1_b"].reshape(1, D).astype(f32)
    ln2_g = params["ln2_g"].reshape(1, D).astype(f32)
    ln2_b = params["ln2_b"].reshape(1, D).astype(f32)

    args = (x, wq_t, bq, wkv_t, bkv, wout, b_out,
            ln1_g, ln1_b, w1, b1, w2, b2, ln2_g, ln2_b)

    def run(single_buffer_weights):
        def const_spec(shape):
            zeros = (0,) * len(shape)
            if single_buffer_weights:
                # Block index never changes -> one resident VMEM copy is enough.
                return pl.BlockSpec(shape, lambda b, q: zeros,
                                    pipeline_mode=pl.Buffered(1))
            return pl.BlockSpec(shape, lambda b, q: zeros)

        in_specs = [
            pl.BlockSpec((1, S, D), lambda b, q: (b, 0, 0)),   # x (q tile sliced in-kernel)
            const_spec((D, D)), const_spec((D, 1)),            # q proj
            const_spec((2 * D, D)), const_spec((2 * D, 1)),    # fused k/v proj
            const_spec((D, D)), const_spec((1, D)),            # out proj
            const_spec((1, D)), const_spec((1, D)),            # ln1 gamma/beta
            const_spec((D, F)), const_spec((1, F)),            # linear1
            const_spec((F, D)), const_spec((1, D)),            # linear2
            const_spec((1, D)), const_spec((1, D)),            # ln2 gamma/beta
        ]
        return pl.pallas_call(
            functools.partial(transformer_block_kernel, nhead=nhead, q_tile=tS),
            out_shape=jax.ShapeDtypeStruct((B, S, D), x.dtype),
            grid=(B, nq),
            in_specs=in_specs,
            out_specs=pl.BlockSpec((1, tS, D), lambda b, q: (b, q, 0)),
            scratch_shapes=[pltpu.VMEM((H, E, S), bf16),       # K^T per head
                            pltpu.VMEM((H, E, S), bf16)],      # V^T per head
            compiler_params=pltpu.CompilerParams(
                dimension_semantics=("parallel", "arbitrary"),
                vmem_limit_bytes=vmem_limit),
        )(*args)

    try:
        return run(True)
    except Exception:
        # If this Pallas build rejects pipeline_mode=pl.Buffered(1) on pallas_call
        # inputs, fall back to the default (double-buffered) invariant weights.
        return run(False)


def ref_forward(x, p, nhead):
    """Pure-JAX reference mirroring PyTorch eval-mode semantics (f32)."""
    B, S, D = x.shape
    Hd = D // nhead
    qkv = x @ p["w_qkv"] + p["b_qkv"]
    q, k, v = qkv[..., :D], qkv[..., D:2 * D], qkv[..., 2 * D:]

    def split(t):
        return t.reshape(B, S, nhead, Hd).transpose(0, 2, 1, 3)

    q, k, v = split(q), split(k), split(v)
    s = jnp.einsum("bhqd,bhkd->bhqk", q, k) / math.sqrt(Hd)
    a = jax.nn.softmax(s, axis=-1)
    o = jnp.einsum("bhqk,bhkd->bhqd", a, v).transpose(0, 2, 1, 3).reshape(B, S, D)
    o = o @ p["w_out"] + p["b_out"]

    def ln(t, g, b):
        mu = jnp.mean(t, axis=-1, keepdims=True)
        var = jnp.mean((t - mu) ** 2, axis=-1, keepdims=True)
        return (t - mu) * jax.lax.rsqrt(var + 1e-5) * g + b

    y = ln(x + o, p["ln1_g"], p["ln1_b"])
    h = jax.nn.gelu(y @ p["w1"] + p["b1"], approximate=False)
    ff = h @ p["w2"] + p["b2"]
    return ln(y + ff, p["ln2_g"], p["ln2_b"])


if __name__ == "__main__":
    B, S = 2, 8
    d_model, nhead, dim_ff = 32, 4, 64

    key = jax.random.PRNGKey(0)
    ks = jax.random.split(key, 12)
    sc = 0.1
    params = {
        "w_qkv": sc * jax.random.normal(ks[0], (d_model, 3 * d_model), jnp.float32),
        "b_qkv": sc * jax.random.normal(ks[1], (1, 3 * d_model), jnp.float32),
        "w_out": sc * jax.random.normal(ks[2], (d_model, d_model), jnp.float32),
        "b_out": sc * jax.random.normal(ks[3], (1, d_model), jnp.float32),
        "ln1_g": 1.0 + 0.05 * jax.random.normal(ks[4], (1, d_model), jnp.float32),
        "ln1_b": 0.05 * jax.random.normal(ks[5], (1, d_model), jnp.float32),
        "w1": sc * jax.random.normal(ks[6], (d_model, dim_ff), jnp.float32),
        "b1": sc * jax.random.normal(ks[7], (1, dim_ff), jnp.float32),
        "w2": sc * jax.random.normal(ks[8], (dim_ff, d_model), jnp.float32),
        "b2": sc * jax.random.normal(ks[9], (1, d_model), jnp.float32),
        "ln2_g": 1.0 + 0.05 * jax.random.normal(ks[10], (1, d_model), jnp.float32),
        "ln2_b": 0.05 * jax.random.normal(ks[11], (1, d_model), jnp.float32),
    }
    x = jax.random.normal(jax.random.PRNGKey(42), (B, S, d_model), jnp.float32)

    out = jax.block_until_ready(transformer_block(x, params, nhead))

    # Accurate f32 reference (scoped precision, not a global config change).
    with jax.default_matmul_precision("highest"):
        ref = jax.block_until_ready(ref_forward(x, params, nhead))

    assert out.shape == (B, S, d_model)
    # Tolerance reflects bf16 MXU matmuls (f32 accumulation) in the kernel.
    assert jnp.allclose(out, ref, atol=3e-2, rtol=3e-2), \
        f"max err {jnp.max(jnp.abs(out - ref))}"

    print("KERNEL_OK")
</pallas_src>

<mosaic_0001>
module attributes {stable_mosaic.version = 11 : i64} {
  func.func @transformer_block_kernel(%arg0: i32, %arg1: i32, %arg2: memref<1x8x32xf32, #tpu.memory_space<vmem>>, %arg3: memref<32x32xbf16, #tpu.memory_space<vmem>>, %arg4: memref<32x1xf32, #tpu.memory_space<vmem>>, %arg5: memref<64x32xbf16, #tpu.memory_space<vmem>>, %arg6: memref<64x1xf32, #tpu.memory_space<vmem>>, %arg7: memref<32x32xbf16, #tpu.memory_space<vmem>>, %arg8: memref<1x32xf32, #tpu.memory_space<vmem>>, %arg9: memref<1x32xf32, #tpu.memory_space<vmem>>, %arg10: memref<1x32xf32, #tpu.memory_space<vmem>>, %arg11: memref<32x64xbf16, #tpu.memory_space<vmem>>, %arg12: memref<1x64xf32, #tpu.memory_space<vmem>>, %arg13: memref<64x32xbf16, #tpu.memory_space<vmem>>, %arg14: memref<1x32xf32, #tpu.memory_space<vmem>>, %arg15: memref<1x32xf32, #tpu.memory_space<vmem>>, %arg16: memref<1x32xf32, #tpu.memory_space<vmem>>, %arg17: memref<1x8x32xf32, #tpu.memory_space<vmem>>, %arg18: memref<4x8x8xbf16, #tpu.memory_space<vmem>>, %arg19: memref<4x8x8xbf16, #tpu.memory_space<vmem>>) attributes {dimension_semantics = [#tpu.dimension_semantics<parallel>, #tpu.dimension_semantics<arbitrary>], iteration_bounds = array<i64: 2, 1>, scalar_prefetch = 0 : i64, scratch_operands = 2 : i64, tpu.core_type = #tpu.core_type<tc>, window_params = [{transform_indices = @transform_0, window_bounds = array<i64: 1, 8, 32>}, {pipeline_mode = #tpu.pipeline_mode<synchronous>, transform_indices = @transform_1, window_bounds = array<i64: 32, 32>}, {pipeline_mode = #tpu.pipeline_mode<synchronous>, transform_indices = @transform_2, window_bounds = array<i64: 32, 1>}, {pipeline_mode = #tpu.pipeline_mode<synchronous>, transform_indices = @transform_3, window_bounds = array<i64: 64, 32>}, {pipeline_mode = #tpu.pipeline_mode<synchronous>, transform_indices = @transform_4, window_bounds = array<i64: 64, 1>}, {pipeline_mode = #tpu.pipeline_mode<synchronous>, transform_indices = @transform_5, window_bounds = array<i64: 32, 32>}, {pipeline_mode = #tpu.pipeline_mode<synchronous>, transform_indices = @transform_6, window_bounds = array<i64: 1, 32>}, {pipeline_mode = #tpu.pipeline_mode<synchronous>, transform_indices = @transform_7, window_bounds = array<i64: 1, 32>}, {pipeline_mode = #tpu.pipeline_mode<synchronous>, transform_indices = @transform_8, window_bounds = array<i64: 1, 32>}, {pipeline_mode = #tpu.pipeline_mode<synchronous>, transform_indices = @transform_9, window_bounds = array<i64: 32, 64>}, {pipeline_mode = #tpu.pipeline_mode<synchronous>, transform_indices = @transform_10, window_bounds = array<i64: 1, 64>}, {pipeline_mode = #tpu.pipeline_mode<synchronous>, transform_indices = @transform_11, window_bounds = array<i64: 64, 32>}, {pipeline_mode = #tpu.pipeline_mode<synchronous>, transform_indices = @transform_12, window_bounds = array<i64: 1, 32>}, {pipeline_mode = #tpu.pipeline_mode<synchronous>, transform_indices = @transform_13, window_bounds = array<i64: 1, 32>}, {pipeline_mode = #tpu.pipeline_mode<synchronous>, transform_indices = @transform_14, window_bounds = array<i64: 1, 32>}, {transform_indices = @transform_15, window_bounds = array<i64: 1, 8, 32>}]} {
    %c0_i32 = arith.constant 0 : i32
    %0 = arith.cmpi eq, %arg1, %c0_i32 : i32
    %1 = arith.extui %0 : i1 to i32
    %c0_i32_0 = arith.constant 0 : i32
    %2 = arith.cmpi ne, %1, %c0_i32_0 : i32
    scf.if %2 {
      %c0_55 = arith.constant 0 : index
      %c0_56 = arith.constant 0 : index
      %c0_57 = arith.constant 0 : index
      %112 = vector.load %arg2[%c0_55, %c0_56, %c0_57] : memref<1x8x32xf32, #tpu.memory_space<vmem>>, vector<1x8x32xf32>
      %113 = vector.shape_cast %112 : vector<1x8x32xf32> to vector<8x32xf32>
      %114 = arith.truncf %113 : vector<8x32xf32> to vector<8x32xbf16>
      %c0_58 = arith.constant 0 : index
      %c0_59 = arith.constant 0 : index
      %115 = vector.load %arg5[%c0_58, %c0_59] : memref<64x32xbf16, #tpu.memory_space<vmem>>, vector<64x32xbf16>
      %cst_60 = arith.constant dense<0.000000e+00> : vector<64x8xf32>
      %116 = tpu.matmul %115, %114, %cst_60 {dimension_numbers = #tpu.dot_dimension_numbers<[1], [1], [0], [0], [0, 0, 1, 0], [], []>} : vector<64x32xbf16>, vector<8x32xbf16>, vector<64x8xf32> -> vector<64x8xf32>
      %c0_61 = arith.constant 0 : index
      %c0_62 = arith.constant 0 : index
      %117 = vector.load %arg6[%c0_61, %c0_62] : memref<64x1xf32, #tpu.memory_space<vmem>>, vector<64x1xf32>
      %118 = vector.broadcast %117 : vector<64x1xf32> to vector<64x8xf32>
      %119 = arith.addf %116, %118 : vector<64x8xf32>
      %120 = vector.extract_strided_slice %119 {offsets = [0, 0], sizes = [32, 8], strides = [1, 1]} : vector<64x8xf32> to vector<32x8xf32>
      %121 = vector.shape_cast %120 : vector<32x8xf32> to vector<4x8x8xf32>
      %122 = arith.truncf %121 : vector<4x8x8xf32> to vector<4x8x8xbf16>
      %c0_63 = arith.constant 0 : index
      %c0_64 = arith.constant 0 : index
      %c0_65 = arith.constant 0 : index
      %123 = vector.load %arg18[%c0_63, %c0_64, %c0_65] : memref<4x8x8xbf16, #tpu.memory_space<vmem>>, vector<4x8x8xbf16>
      tpu.vector_store %arg18[%c0_63, %c0_64, %c0_65], %122 {strides = array<i32>} : memref<4x8x8xbf16, #tpu.memory_space<vmem>>, vector<4x8x8xbf16>,
      %124 = vector.extract_strided_slice %119 {offsets = [32, 0], sizes = [32, 8], strides = [1, 1]} : vector<64x8xf32> to vector<32x8xf32>
      %125 = vector.shape_cast %124 : vector<32x8xf32> to vector<4x8x8xf32>
      %126 = arith.truncf %125 : vector<4x8x8xf32> to vector<4x8x8xbf16>
      %c0_66 = arith.constant 0 : index
      %c0_67 = arith.constant 0 : index
      %c0_68 = arith.constant 0 : index
      %127 = vector.load %arg19[%c0_66, %c0_67, %c0_68] : memref<4x8x8xbf16, #tpu.memory_space<vmem>>, vector<4x8x8xbf16>
      tpu.vector_store %arg19[%c0_66, %c0_67, %c0_68], %126 {strides = array<i32>} : memref<4x8x8xbf16, #tpu.memory_space<vmem>>, vector<4x8x8xbf16>,
    } else {
    }
    %c8_i32 = arith.constant 8 : i32
    %3 = arith.muli %arg1, %c8_i32 : i32
    %4 = tpu.assume_multiple %3, 8 : i32
    %c0 = arith.constant 0 : index
    %5 = arith.index_cast %4 : i32 to index
    %c0_1 = arith.constant 0 : index
    %6 = vector.load %arg2[%c0, %5, %c0_1] : memref<1x8x32xf32, #tpu.memory_space<vmem>>, vector<1x8x32xf32>
    %7 = vector.shape_cast %6 : vector<1x8x32xf32> to vector<8x32xf32>
    %c0_2 = arith.constant 0 : index
    %c0_3 = arith.constant 0 : index
    %8 = vector.load %arg3[%c0_2, %c0_3] : memref<32x32xbf16, #tpu.memory_space<vmem>>, vector<32x32xbf16>
    %9 = arith.truncf %7 : vector<8x32xf32> to vector<8x32xbf16>
    %cst = arith.constant dense<0.000000e+00> : vector<32x8xf32>
    %10 = tpu.matmul %8, %9, %cst {dimension_numbers = #tpu.dot_dimension_numbers<[1], [1], [0], [0], [0, 0, 1, 0], [], []>} : vector<32x32xbf16>, vector<8x32xbf16>, vector<32x8xf32> -> vector<32x8xf32>
    %c0_4 = arith.constant 0 : index
    %c0_5 = arith.constant 0 : index
    %11 = vector.load %arg4[%c0_4, %c0_5] : memref<32x1xf32, #tpu.memory_space<vmem>>, vector<32x1xf32>
    %12 = vector.broadcast %11 : vector<32x1xf32> to vector<32x8xf32>
    %13 = arith.addf %10, %12 : vector<32x8xf32>
    %14 = vector.shape_cast %13 : vector<32x8xf32> to vector<4x8x8xf32>
    %15 = arith.truncf %14 : vector<4x8x8xf32> to vector<4x8x8xbf16>
    %c0_6 = arith.constant 0 : index
    %c0_7 = arith.constant 0 : index
    %c0_8 = arith.constant 0 : index
    %16 = vector.load %arg18[%c0_6, %c0_7, %c0_8] : memref<4x8x8xbf16, #tpu.memory_space<vmem>>, vector<4x8x8xbf16>
    %cst_9 = arith.constant dense<0.000000e+00> : vector<4x8x8xf32>
    %17 = tpu.matmul %15, %16, %cst_9 {dimension_numbers = #tpu.dot_dimension_numbers<[1], [1], [2], [2], [0, 0, 0, 2, 1, 2], [0], [0]>} : vector<4x8x8xbf16>, vector<4x8x8xbf16>, vector<4x8x8xf32> -> vector<4x8x8xf32>
    %cst_10 = arith.constant dense<0xFF800000> : vector<4x8xf32>
    %18 = vector.multi_reduction <maximumf>, %17, %cst_10 [2] : vector<4x8x8xf32> to vector<4x8xf32>
    %19 = vector.shape_cast %18 : vector<4x8xf32> to vector<4x8x1xf32>
    %20 = vector.broadcast %19 : vector<4x8x1xf32> to vector<4x8x8xf32>
    %21 = arith.subf %17, %20 : vector<4x8x8xf32>
    %22 = math.exp %21 : vector<4x8x8xf32>
    %cst_11 = arith.constant dense<0.000000e+00> : vector<4x8xf32>
    %23 = vector.multi_reduction <add>, %22, %cst_11 [2] : vector<4x8x8xf32> to vector<4x8xf32>
    %24 = vector.shape_cast %23 : vector<4x8xf32> to vector<4x8x1xf32>
    %25 = tpu.reciprocal %24 {approx = true} : vector<4x8x1xf32> -> vector<4x8x1xf32>
    %26 = vector.broadcast %25 : vector<4x8x1xf32> to vector<4x8x8xf32>
    %27 = arith.mulf %22, %26 : vector<4x8x8xf32>
    %c0_12 = arith.constant 0 : index
    %c0_13 = arith.constant 0 : index
    %c0_14 = arith.constant 0 : index
    %28 = vector.load %arg19[%c0_12, %c0_13, %c0_14] : memref<4x8x8xbf16, #tpu.memory_space<vmem>>, vector<4x8x8xbf16>
    %29 = arith.truncf %27 : vector<4x8x8xf32> to vector<4x8x8xbf16>
    %cst_15 = arith.constant dense<0.000000e+00> : vector<4x8x8xf32>
    %30 = tpu.matmul %28, %29, %cst_15 {dimension_numbers = #tpu.dot_dimension_numbers<[2], [2], [1], [1], [0, 0, 0, 1, 1, 1], [0], [0]>} : vector<4x8x8xbf16>, vector<4x8x8xbf16>, vector<4x8x8xf32> -> vector<4x8x8xf32>
    %31 = vector.shape_cast %30 : vector<4x8x8xf32> to vector<32x8xf32>
    %32 = tpu.transpose %31, [1, 0] : vector<32x8xf32> -> vector<8x32xf32>
    %33 = arith.truncf %32 : vector<8x32xf32> to vector<8x32xbf16>
    %c0_16 = arith.constant 0 : index
    %c0_17 = arith.constant 0 : index
    %34 = vector.load %arg7[%c0_16, %c0_17] : memref<32x32xbf16, #tpu.memory_space<vmem>>, vector<32x32xbf16>
    %cst_18 = arith.constant dense<0.000000e+00> : vector<8x32xf32>
    %35 = tpu.matmul %33, %34, %cst_18 {dimension_numbers = #tpu.dot_dimension_numbers<[1], [0], [0], [1], [0, 0, 1, 1], [], []>} : vector<8x32xbf16>, vector<32x32xbf16>, vector<8x32xf32> -> vector<8x32xf32>
    %c0_19 = arith.constant 0 : index
    %c0_20 = arith.constant 0 : index
    %36 = vector.load %arg8[%c0_19, %c0_20] : memref<1x32xf32, #tpu.memory_space<vmem>>, vector<1x32xf32>
    %37 = vector.broadcast %36 : vector<1x32xf32> to vector<8x32xf32>
    %38 = arith.addf %35, %37 : vector<8x32xf32>
    %39 = arith.addf %7, %38 : vector<8x32xf32>
    %cst_21 = arith.constant dense<0.000000e+00> : vector<8xf32>
    %40 = vector.multi_reduction <add>, %39, %cst_21 [1] : vector<8x32xf32> to vector<8xf32>
    %41 = vector.shape_cast %40 : vector<8xf32> to vector<8x1xf32>
    %cst_22 = arith.constant 3.200000e+01 : f32
    %42 = vector.broadcast %cst_22 : f32 to vector<8x1xf32>
    %43 = arith.divf %41, %42 : vector<8x1xf32>
    %44 = vector.broadcast %43 : vector<8x1xf32> to vector<8x32xf32>
    %45 = arith.subf %39, %44 : vector<8x32xf32>
    %46 = arith.mulf %45, %45 : vector<8x32xf32>
    %cst_23 = arith.constant dense<0.000000e+00> : vector<8xf32>
    %47 = vector.multi_reduction <add>, %46, %cst_23 [1] : vector<8x32xf32> to vector<8xf32>
    %48 = vector.shape_cast %47 : vector<8xf32> to vector<8x1xf32>
    %cst_24 = arith.constant 3.200000e+01 : f32
    %49 = vector.broadcast %cst_24 : f32 to vector<8x1xf32>
    %50 = arith.divf %48, %49 : vector<8x1xf32>
    %51 = vector.broadcast %43 : vector<8x1xf32> to vector<8x32xf32>
    %52 = arith.subf %39, %51 : vector<8x32xf32>
    %cst_25 = arith.constant 9.99999974E-6 : f32
    %53 = vector.broadcast %cst_25 : f32 to vector<8x1xf32>
    %54 = arith.addf %50, %53 : vector<8x1xf32>
    %55 = math.rsqrt %54 : vector<8x1xf32>
    %56 = vector.broadcast %55 : vector<8x1xf32> to vector<8x32xf32>
    %57 = arith.mulf %52, %56 : vector<8x32xf32>
    %c0_26 = arith.constant 0 : index
    %c0_27 = arith.constant 0 : index
    %58 = vector.load %arg9[%c0_26, %c0_27] : memref<1x32xf32, #tpu.memory_space<vmem>>, vector<1x32xf32>
    %59 = vector.broadcast %58 : vector<1x32xf32> to vector<8x32xf32>
    %60 = arith.mulf %57, %59 : vector<8x32xf32>
    %c0_28 = arith.constant 0 : index
    %c0_29 = arith.constant 0 : index
    %61 = vector.load %arg10[%c0_28, %c0_29] : memref<1x32xf32, #tpu.memory_space<vmem>>, vector<1x32xf32>
    %62 = vector.broadcast %61 : vector<1x32xf32> to vector<8x32xf32>
    %63 = arith.addf %60, %62 : vector<8x32xf32>
    %64 = arith.truncf %63 : vector<8x32xf32> to vector<8x32xbf16>
    %c0_30 = arith.constant 0 : index
    %c0_31 = arith.constant 0 : index
    %65 = vector.load %arg11[%c0_30, %c0_31] : memref<32x64xbf16, #tpu.memory_space<vmem>>, vector<32x64xbf16>
    %cst_32 = arith.constant dense<0.000000e+00> : vector<8x64xf32>
    %66 = tpu.matmul %64, %65, %cst_32 {dimension_numbers = #tpu.dot_dimension_numbers<[1], [0], [0], [1], [0, 0, 1, 1], [], []>} : vector<8x32xbf16>, vector<32x64xbf16>, vector<8x64xf32> -> vector<8x64xf32>
    %c0_33 = arith.constant 0 : index
    %c0_34 = arith.constant 0 : index
    %67 = vector.load %arg12[%c0_33, %c0_34] : memref<1x64xf32, #tpu.memory_space<vmem>>, vector<1x64xf32>
    %68 = vector.broadcast %67 : vector<1x64xf32> to vector<8x64xf32>
    %69 = arith.addf %66, %68 : vector<8x64xf32>
    %cst_35 = arith.constant 5.000000e-01 : f32
    %70 = vector.broadcast %cst_35 : f32 to vector<8x64xf32>
    %71 = arith.mulf %70, %69 : vector<8x64xf32>
    %cst_36 = arith.constant 0.707106769 : f32
    %72 = vector.broadcast %cst_36 : f32 to vector<8x64xf32>
    %73 = arith.mulf %69, %72 : vector<8x64xf32>
    %74 = math.erf %73 : vector<8x64xf32>
    %cst_37 = arith.constant 1.000000e+00 : f32
    %75 = vector.broadcast %cst_37 : f32 to vector<8x64xf32>
    %76 = arith.addf %75, %74 : vector<8x64xf32>
    %77 = arith.mulf %71, %76 : vector<8x64xf32>
    %78 = arith.truncf %77 : vector<8x64xf32> to vector<8x64xbf16>
    %c0_38 = arith.constant 0 : index
    %c0_39 = arith.constant 0 : index
    %79 = vector.load %arg13[%c0_38, %c0_39] : memref<64x32xbf16, #tpu.memory_space<vmem>>, vector<64x32xbf16>
    %cst_40 = arith.constant dense<0.000000e+00> : vector<8x32xf32>
    %80 = tpu.matmul %78, %79, %cst_40 {dimension_numbers = #tpu.dot_dimension_numbers<[1], [0], [0], [1], [0, 0, 1, 1], [], []>} : vector<8x64xbf16>, vector<64x32xbf16>, vector<8x32xf32> -> vector<8x32xf32>
    %c0_41 = arith.constant 0 : index
    %c0_42 = arith.constant 0 : index
    %81 = vector.load %arg14[%c0_41, %c0_42] : memref<1x32xf32, #tpu.memory_space<vmem>>, vector<1x32xf32>
    %82 = vector.broadcast %81 : vector<1x32xf32> to vector<8x32xf32>
    %83 = arith.addf %80, %82 : vector<8x32xf32>
    %84 = arith.addf %63, %83 : vector<8x32xf32>
    %cst_43 = arith.constant dense<0.000000e+00> : vector<8xf32>
    %85 = vector.multi_reduction <add>, %84, %cst_43 [1] : vector<8x32xf32> to vector<8xf32>
    %86 = vector.shape_cast %85 : vector<8xf32> to vector<8x1xf32>
    %cst_44 = arith.constant 3.200000e+01 : f32
    %87 = vector.broadcast %cst_44 : f32 to vector<8x1xf32>
    %88 = arith.divf %86, %87 : vector<8x1xf32>
    %89 = vector.broadcast %88 : vector<8x1xf32> to vector<8x32xf32>
    %90 = arith.subf %84, %89 : vector<8x32xf32>
    %91 = arith.mulf %90, %90 : vector<8x32xf32>
    %cst_45 = arith.constant dense<0.000000e+00> : vector<8xf32>
    %92 = vector.multi_reduction <add>, %91, %cst_45 [1] : vector<8x32xf32> to vector<8xf32>
    %93 = vector.shape_cast %92 : vector<8xf32> to vector<8x1xf32>
    %cst_46 = arith.constant 3.200000e+01 : f32
    %94 = vector.broadcast %cst_46 : f32 to vector<8x1xf32>
    %95 = arith.divf %93, %94 : vector<8x1xf32>
    %96 = vector.broadcast %88 : vector<8x1xf32> to vector<8x32xf32>
    %97 = arith.subf %84, %96 : vector<8x32xf32>
    %cst_47 = arith.constant 9.99999974E-6 : f32
    %98 = vector.broadcast %cst_47 : f32 to vector<8x1xf32>
    %99 = arith.addf %95, %98 : vector<8x1xf32>
    %100 = math.rsqrt %99 : vector<8x1xf32>
    %101 = vector.broadcast %100 : vector<8x1xf32> to vector<8x32xf32>
    %102 = arith.mulf %97, %101 : vector<8x32xf32>
    %c0_48 = arith.constant 0 : index
    %c0_49 = arith.constant 0 : index
    %103 = vector.load %arg15[%c0_48, %c0_49] : memref<1x32xf32, #tpu.memory_space<vmem>>, vector<1x32xf32>
    %104 = vector.broadcast %103 : vector<1x32xf32> to vector<8x32xf32>
    %105 = arith.mulf %102, %104 : vector<8x32xf32>
    %c0_50 = arith.constant 0 : index
    %c0_51 = arith.constant 0 : index
    %106 = vector.load %arg16[%c0_50, %c0_51] : memref<1x32xf32, #tpu.memory_space<vmem>>, vector<1x32xf32>
    %107 = vector.broadcast %106 : vector<1x32xf32> to vector<8x32xf32>
    %108 = arith.addf %105, %107 : vector<8x32xf32>
    %c0_52 = arith.constant 0 : index
    %c0_53 = arith.constant 0 : index
    %c0_54 = arith.constant 0 : index
    %109 = vector.load %arg17[%c0_52, %c0_53, %c0_54] : memref<1x8x32xf32, #tpu.memory_space<vmem>>, vector<1x8x32xf32>
    %110 = vector.shape_cast %109 : vector<1x8x32xf32> to vector<8x32xf32>
    %111 = vector.shape_cast %108 : vector<8x32xf32> to vector<1x8x32xf32>
    tpu.vector_store %arg17[%c0_52, %c0_53, %c0_54], %111 {strides = array<i32>} : memref<1x8x32xf32, #tpu.memory_space<vmem>>, vector<1x8x32xf32>,
    return
  }
  func.func @transform_0(%arg0: i32, %arg1: i32) -> (i32, i32, i32) {
    %c0_i32 = arith.constant 0 : i32
    %c0_i32_0 = arith.constant 0 : i32
    %c0_i32_1 = arith.constant 0 : i32
    return %arg0, %c0_i32, %c0_i32_0 : i32, i32, i32
  }
  func.func @transform_1(%arg0: i32, %arg1: i32) -> (i32, i32) {
    %c0_i32 = arith.constant 0 : i32
    %c0_i32_0 = arith.constant 0 : i32
    %c0_i32_1 = arith.constant 0 : i32
    return %c0_i32, %c0_i32_0 : i32, i32
  }
  func.func @transform_2(%arg0: i32, %arg1: i32) -> (i32, i32) {
    %c0_i32 = arith.constant 0 : i32
    %c0_i32_0 = arith.constant 0 : i32
    %c0_i32_1 = arith.constant 0 : i32
    return %c0_i32, %c0_i32_0 : i32, i32
  }
  func.func @transform_3(%arg0: i32, %arg1: i32) -> (i32, i32) {
    %c0_i32 = arith.constant 0 : i32
    %c0_i32_0 = arith.constant 0 : i32
    %c0_i32_1 = arith.constant 0 : i32
    return %c0_i32, %c0_i32_0 : i32, i32
  }
  func.func @transform_4(%arg0: i32, %arg1: i32) -> (i32, i32) {
    %c0_i32 = arith.constant 0 : i32
    %c0_i32_0 = arith.constant 0 : i32
    %c0_i32_1 = arith.constant 0 : i32
    return %c0_i32, %c0_i32_0 : i32, i32
  }
  func.func @transform_5(%arg0: i32, %arg1: i32) -> (i32, i32) {
    %c0_i32 = arith.constant 0 : i32
    %c0_i32_0 = arith.constant 0 : i32
    %c0_i32_1 = arith.constant 0 : i32
    return %c0_i32, %c0_i32_0 : i32, i32
  }
  func.func @transform_6(%arg0: i32, %arg1: i32) -> (i32, i32) {
    %c0_i32 = arith.constant 0 : i32
    %c0_i32_0 = arith.constant 0 : i32
    %c0_i32_1 = arith.constant 0 : i32
    return %c0_i32, %c0_i32_0 : i32, i32
  }
  func.func @transform_7(%arg0: i32, %arg1: i32) -> (i32, i32) {
    %c0_i32 = arith.constant 0 : i32
    %c0_i32_0 = arith.constant 0 : i32
    %c0_i32_1 = arith.constant 0 : i32
    return %c0_i32, %c0_i32_0 : i32, i32
  }
  func.func @transform_8(%arg0: i32, %arg1: i32) -> (i32, i32) {
    %c0_i32 = arith.constant 0 : i32
    %c0_i32_0 = arith.constant 0 : i32
    %c0_i32_1 = arith.constant 0 : i32
    return %c0_i32, %c0_i32_0 : i32, i32
  }
  func.func @transform_9(%arg0: i32, %arg1: i32) -> (i32, i32) {
    %c0_i32 = arith.constant 0 : i32
    %c0_i32_0 = arith.constant 0 : i32
    %c0_i32_1 = arith.constant 0 : i32
    return %c0_i32, %c0_i32_0 : i32, i32
  }
  func.func @transform_10(%arg0: i32, %arg1: i32) -> (i32, i32) {
    %c0_i32 = arith.constant 0 : i32
    %c0_i32_0 = arith.constant 0 : i32
    %c0_i32_1 = arith.constant 0 : i32
    return %c0_i32, %c0_i32_0 : i32, i32
  }
  func.func @transform_11(%arg0: i32, %arg1: i32) -> (i32, i32) {
    %c0_i32 = arith.constant 0 : i32
    %c0_i32_0 = arith.constant 0 : i32
    %c0_i32_1 = arith.constant 0 : i32
    return %c0_i32, %c0_i32_0 : i32, i32
  }
  func.func @transform_12(%arg0: i32, %arg1: i32) -> (i32, i32) {
    %c0_i32 = arith.constant 0 : i32
    %c0_i32_0 = arith.constant 0 : i32
    %c0_i32_1 = arith.constant 0 : i32
    return %c0_i32, %c0_i32_0 : i32, i32
  }
  func.func @transform_13(%arg0: i32, %arg1: i32) -> (i32, i32) {
    %c0_i32 = arith.constant 0 : i32
    %c0_i32_0 = arith.constant 0 : i32
    %c0_i32_1 = arith.constant 0 : i32
    return %c0_i32, %c0_i32_0 : i32, i32
  }
  func.func @transform_14(%arg0: i32, %arg1: i32) -> (i32, i32) {
    %c0_i32 = arith.constant 0 : i32
    %c0_i32_0 = arith.constant 0 : i32
    %c0_i32_1 = arith.constant 0 : i32
    return %c0_i32, %c0_i32_0 : i32, i32
  }
  func.func @transform_15(%arg0: i32, %arg1: i32) -> (i32, i32, i32) {
    %c0_i32 = arith.constant 0 : i32
    %c0_i32_0 = arith.constant 0 : i32
    return %arg0, %arg1, %c0_i32 : i32, i32, i32
  }
}

module attributes {stable_mosaic.version = 11 : i64} {
  func.func @transformer_block_kernel(%arg0: i32, %arg1: i32, %arg2: memref<1x8x32xf32, #tpu.memory_space<vmem>>, %arg3: memref<32x32xbf16, #tpu.memory_space<vmem>>, %arg4: memref<32x1xf32, #tpu.memory_space<vmem>>, %arg5: memref<64x32xbf16, #tpu.memory_space<vmem>>, %arg6: memref<64x1xf32, #tpu.memory_space<vmem>>, %arg7: memref<32x32xbf16, #tpu.memory_space<vmem>>, %arg8: memref<1x32xf32, #tpu.memory_space<vmem>>, %arg9: memref<1x32xf32, #tpu.memory_space<vmem>>, %arg10: memref<1x32xf32, #tpu.memory_space<vmem>>, %arg11: memref<32x64xbf16, #tpu.memory_space<vmem>>, %arg12: memref<1x64xf32, #tpu.memory_space<vmem>>, %arg13: memref<64x32xbf16, #tpu.memory_space<vmem>>, %arg14: memref<1x32xf32, #tpu.memory_space<vmem>>, %arg15: memref<1x32xf32, #tpu.memory_space<vmem>>, %arg16: memref<1x32xf32, #tpu.memory_space<vmem>>, %arg17: memref<1x8x32xf32, #tpu.memory_space<vmem>>, %arg18: memref<4x8x8xbf16, #tpu.memory_space<vmem>>, %arg19: memref<4x8x8xbf16, #tpu.memory_space<vmem>>) attributes {dimension_semantics = [#tpu.dimension_semantics<parallel>, #tpu.dimension_semantics<arbitrary>], iteration_bounds = array<i64: 2, 1>, scalar_prefetch = 0 : i64, scratch_operands = 2 : i64, tpu.core_type = #tpu.core_type<tc>, window_params = [{transform_indices = @transform_0, window_bounds = array<i64: 1, 8, 32>}, {pipeline_mode = #tpu.pipeline_mode<synchronous>, transform_indices = @transform_1, window_bounds = array<i64: 32, 32>}, {pipeline_mode = #tpu.pipeline_mode<synchronous>, transform_indices = @transform_2, window_bounds = array<i64: 32, 1>}, {pipeline_mode = #tpu.pipeline_mode<synchronous>, transform_indices = @transform_3, window_bounds = array<i64: 64, 32>}, {pipeline_mode = #tpu.pipeline_mode<synchronous>, transform_indices = @transform_4, window_bounds = array<i64: 64, 1>}, {pipeline_mode = #tpu.pipeline_mode<synchronous>, transform_indices = @transform_5, window_bounds = array<i64: 32, 32>}, {pipeline_mode = #tpu.pipeline_mode<synchronous>, transform_indices = @transform_6, window_bounds = array<i64: 1, 32>}, {pipeline_mode = #tpu.pipeline_mode<synchronous>, transform_indices = @transform_7, window_bounds = array<i64: 1, 32>}, {pipeline_mode = #tpu.pipeline_mode<synchronous>, transform_indices = @transform_8, window_bounds = array<i64: 1, 32>}, {pipeline_mode = #tpu.pipeline_mode<synchronous>, transform_indices = @transform_9, window_bounds = array<i64: 32, 64>}, {pipeline_mode = #tpu.pipeline_mode<synchronous>, transform_indices = @transform_10, window_bounds = array<i64: 1, 64>}, {pipeline_mode = #tpu.pipeline_mode<synchronous>, transform_indices = @transform_11, window_bounds = array<i64: 64, 32>}, {pipeline_mode = #tpu.pipeline_mode<synchronous>, transform_indices = @transform_12, window_bounds = array<i64: 1, 32>}, {pipeline_mode = #tpu.pipeline_mode<synchronous>, transform_indices = @transform_13, window_bounds = array<i64: 1, 32>}, {pipeline_mode = #tpu.pipeline_mode<synchronous>, transform_indices = @transform_14, window_bounds = array<i64: 1, 32>}, {transform_indices = @transform_15, window_bounds = array<i64: 1, 8, 32>}]} {
    %c0_i32 = arith.constant 0 : i32
    %0 = arith.cmpi eq, %arg1, %c0_i32 : i32
    %1 = arith.extui %0 : i1 to i32
    %c0_i32_0 = arith.constant 0 : i32
    %2 = arith.cmpi ne, %1, %c0_i32_0 : i32
    scf.if %2 {
      %c0_55 = arith.constant 0 : index
      %c0_56 = arith.constant 0 : index
      %c0_57 = arith.constant 0 : index
      %112 = vector.load %arg2[%c0_55, %c0_56, %c0_57] : memref<1x8x32xf32, #tpu.memory_space<vmem>>, vector<1x8x32xf32>
      %113 = vector.shape_cast %112 : vector<1x8x32xf32> to vector<8x32xf32>
      %114 = arith.truncf %113 : vector<8x32xf32> to vector<8x32xbf16>
      %c0_58 = arith.constant 0 : index
      %c0_59 = arith.constant 0 : index
      %115 = vector.load %arg5[%c0_58, %c0_59] : memref<64x32xbf16, #tpu.memory_space<vmem>>, vector<64x32xbf16>
      %cst_60 = arith.constant dense<0.000000e+00> : vector<64x8xf32>
      %116 = tpu.matmul %115, %114, %cst_60 {dimension_numbers = #tpu.dot_dimension_numbers<[1], [1], [0], [0], [0, 0, 1, 0], [], []>} : vector<64x32xbf16>, vector<8x32xbf16>, vector<64x8xf32> -> vector<64x8xf32>
      %c0_61 = arith.constant 0 : index
      %c0_62 = arith.constant 0 : index
      %117 = vector.load %arg6[%c0_61, %c0_62] : memref<64x1xf32, #tpu.memory_space<vmem>>, vector<64x1xf32>
      %118 = vector.broadcast %117 : vector<64x1xf32> to vector<64x8xf32>
      %119 = arith.addf %116, %118 : vector<64x8xf32>
      %120 = vector.extract_strided_slice %119 {offsets = [0, 0], sizes = [32, 8], strides = [1, 1]} : vector<64x8xf32> to vector<32x8xf32>
      %121 = vector.shape_cast %120 : vector<32x8xf32> to vector<4x8x8xf32>
      %122 = arith.truncf %121 : vector<4x8x8xf32> to vector<4x8x8xbf16>
      %c0_63 = arith.constant 0 : index
      %c0_64 = arith.constant 0 : index
      %c0_65 = arith.constant 0 : index
      %123 = vector.load %arg18[%c0_63, %c0_64, %c0_65] : memref<4x8x8xbf16, #tpu.memory_space<vmem>>, vector<4x8x8xbf16>
      tpu.vector_store %arg18[%c0_63, %c0_64, %c0_65], %122 {strides = array<i32>} : memref<4x8x8xbf16, #tpu.memory_space<vmem>>, vector<4x8x8xbf16>,
      %124 = vector.extract_strided_slice %119 {offsets = [32, 0], sizes = [32, 8], strides = [1, 1]} : vector<64x8xf32> to vector<32x8xf32>
      %125 = vector.shape_cast %124 : vector<32x8xf32> to vector<4x8x8xf32>
      %126 = arith.truncf %125 : vector<4x8x8xf32> to vector<4x8x8xbf16>
      %c0_66 = arith.constant 0 : index
      %c0_67 = arith.constant 0 : index
      %c0_68 = arith.constant 0 : index
      %127 = vector.load %arg19[%c0_66, %c0_67, %c0_68] : memref<4x8x8xbf16, #tpu.memory_space<vmem>>, vector<4x8x8xbf16>
      tpu.vector_store %arg19[%c0_66, %c0_67, %c0_68], %126 {strides = array<i32>} : memref<4x8x8xbf16, #tpu.memory_space<vmem>>, vector<4x8x8xbf16>,
    } else {
    }
    %c8_i32 = arith.constant 8 : i32
    %3 = arith.muli %arg1, %c8_i32 : i32
    %4 = tpu.assume_multiple %3, 8 : i32
    %c0 = arith.constant 0 : index
    %5 = arith.index_cast %4 : i32 to index
    %c0_1 = arith.constant 0 : index
    %6 = vector.load %arg2[%c0, %5, %c0_1] : memref<1x8x32xf32, #tpu.memory_space<vmem>>, vector<1x8x32xf32>
    %7 = vector.shape_cast %6 : vector<1x8x32xf32> to vector<8x32xf32>
    %c0_2 = arith.constant 0 : index
    %c0_3 = arith.constant 0 : index
    %8 = vector.load %arg3[%c0_2, %c0_3] : memref<32x32xbf16, #tpu.memory_space<vmem>>, vector<32x32xbf16>
    %9 = arith.truncf %7 : vector<8x32xf32> to vector<8x32xbf16>
    %cst = arith.constant dense<0.000000e+00> : vector<32x8xf32>
    %10 = tpu.matmul %8, %9, %cst {dimension_numbers = #tpu.dot_dimension_numbers<[1], [1], [0], [0], [0, 0, 1, 0], [], []>} : vector<32x32xbf16>, vector<8x32xbf16>, vector<32x8xf32> -> vector<32x8xf32>
    %c0_4 = arith.constant 0 : index
    %c0_5 = arith.constant 0 : index
    %11 = vector.load %arg4[%c0_4, %c0_5] : memref<32x1xf32, #tpu.memory_space<vmem>>, vector<32x1xf32>
    %12 = vector.broadcast %11 : vector<32x1xf32> to vector<32x8xf32>
    %13 = arith.addf %10, %12 : vector<32x8xf32>
    %14 = vector.shape_cast %13 : vector<32x8xf32> to vector<4x8x8xf32>
    %15 = arith.truncf %14 : vector<4x8x8xf32> to vector<4x8x8xbf16>
    %c0_6 = arith.constant 0 : index
    %c0_7 = arith.constant 0 : index
    %c0_8 = arith.constant 0 : index
    %16 = vector.load %arg18[%c0_6, %c0_7, %c0_8] : memref<4x8x8xbf16, #tpu.memory_space<vmem>>, vector<4x8x8xbf16>
    %cst_9 = arith.constant dense<0.000000e+00> : vector<4x8x8xf32>
    %17 = tpu.matmul %15, %16, %cst_9 {dimension_numbers = #tpu.dot_dimension_numbers<[1], [1], [2], [2], [0, 0, 0, 2, 1, 2], [0], [0]>} : vector<4x8x8xbf16>, vector<4x8x8xbf16>, vector<4x8x8xf32> -> vector<4x8x8xf32>
    %cst_10 = arith.constant dense<0xFF800000> : vector<4x8xf32>
    %18 = vector.multi_reduction <maximumf>, %17, %cst_10 [2] : vector<4x8x8xf32> to vector<4x8xf32>
    %19 = vector.shape_cast %18 : vector<4x8xf32> to vector<4x8x1xf32>
    %20 = vector.broadcast %19 : vector<4x8x1xf32> to vector<4x8x8xf32>
    %21 = arith.subf %17, %20 : vector<4x8x8xf32>
    %22 = math.exp %21 : vector<4x8x8xf32>
    %cst_11 = arith.constant dense<0.000000e+00> : vector<4x8xf32>
    %23 = vector.multi_reduction <add>, %22, %cst_11 [2] : vector<4x8x8xf32> to vector<4x8xf32>
    %24 = vector.shape_cast %23 : vector<4x8xf32> to vector<4x8x1xf32>
    %25 = tpu.reciprocal %24 {approx = true} : vector<4x8x1xf32> -> vector<4x8x1xf32>
    %26 = vector.broadcast %25 : vector<4x8x1xf32> to vector<4x8x8xf32>
    %27 = arith.mulf %22, %26 : vector<4x8x8xf32>
    %c0_12 = arith.constant 0 : index
    %c0_13 = arith.constant 0 : index
    %c0_14 = arith.constant 0 : index
    %28 = vector.load %arg19[%c0_12, %c0_13, %c0_14] : memref<4x8x8xbf16, #tpu.memory_space<vmem>>, vector<4x8x8xbf16>
    %29 = arith.truncf %27 : vector<4x8x8xf32> to vector<4x8x8xbf16>
    %cst_15 = arith.constant dense<0.000000e+00> : vector<4x8x8xf32>
    %30 = tpu.matmul %28, %29, %cst_15 {dimension_numbers = #tpu.dot_dimension_numbers<[2], [2], [1], [1], [0, 0, 0, 1, 1, 1], [0], [0]>} : vector<4x8x8xbf16>, vector<4x8x8xbf16>, vector<4x8x8xf32> -> vector<4x8x8xf32>
    %31 = vector.shape_cast %30 : vector<4x8x8xf32> to vector<32x8xf32>
    %32 = tpu.transpose %31, [1, 0] : vector<32x8xf32> -> vector<8x32xf32>
    %33 = arith.truncf %32 : vector<8x32xf32> to vector<8x32xbf16>
    %c0_16 = arith.constant 0 : index
    %c0_17 = arith.constant 0 : index
    %34 = vector.load %arg7[%c0_16, %c0_17] : memref<32x32xbf16, #tpu.memory_space<vmem>>, vector<32x32xbf16>
    %cst_18 = arith.constant dense<0.000000e+00> : vector<8x32xf32>
    %35 = tpu.matmul %33, %34, %cst_18 {dimension_numbers = #tpu.dot_dimension_numbers<[1], [0], [0], [1], [0, 0, 1, 1], [], []>} : vector<8x32xbf16>, vector<32x32xbf16>, vector<8x32xf32> -> vector<8x32xf32>
    %c0_19 = arith.constant 0 : index
    %c0_20 = arith.constant 0 : index
    %36 = vector.load %arg8[%c0_19, %c0_20] : memref<1x32xf32, #tpu.memory_space<vmem>>, vector<1x32xf32>
    %37 = vector.broadcast %36 : vector<1x32xf32> to vector<8x32xf32>
    %38 = arith.addf %35, %37 : vector<8x32xf32>
    %39 = arith.addf %7, %38 : vector<8x32xf32>
    %cst_21 = arith.constant dense<0.000000e+00> : vector<8xf32>
    %40 = vector.multi_reduction <add>, %39, %cst_21 [1] : vector<8x32xf32> to vector<8xf32>
    %41 = vector.shape_cast %40 : vector<8xf32> to vector<8x1xf32>
    %cst_22 = arith.constant 3.200000e+01 : f32
    %42 = vector.broadcast %cst_22 : f32 to vector<8x1xf32>
    %43 = arith.divf %41, %42 : vector<8x1xf32>
    %44 = vector.broadcast %43 : vector<8x1xf32> to vector<8x32xf32>
    %45 = arith.subf %39, %44 : vector<8x32xf32>
    %46 = arith.mulf %45, %45 : vector<8x32xf32>
    %cst_23 = arith.constant dense<0.000000e+00> : vector<8xf32>
    %47 = vector.multi_reduction <add>, %46, %cst_23 [1] : vector<8x32xf32> to vector<8xf32>
    %48 = vector.shape_cast %47 : vector<8xf32> to vector<8x1xf32>
    %cst_24 = arith.constant 3.200000e+01 : f32
    %49 = vector.broadcast %cst_24 : f32 to vector<8x1xf32>
    %50 = arith.divf %48, %49 : vector<8x1xf32>
    %51 = vector.broadcast %43 : vector<8x1xf32> to vector<8x32xf32>
    %52 = arith.subf %39, %51 : vector<8x32xf32>
    %cst_25 = arith.constant 9.99999974E-6 : f32
    %53 = vector.broadcast %cst_25 : f32 to vector<8x1xf32>
    %54 = arith.addf %50, %53 : vector<8x1xf32>
    %55 = math.rsqrt %54 : vector<8x1xf32>
    %56 = vector.broadcast %55 : vector<8x1xf32> to vector<8x32xf32>
    %57 = arith.mulf %52, %56 : vector<8x32xf32>
    %c0_26 = arith.constant 0 : index
    %c0_27 = arith.constant 0 : index
    %58 = vector.load %arg9[%c0_26, %c0_27] : memref<1x32xf32, #tpu.memory_space<vmem>>, vector<1x32xf32>
    %59 = vector.broadcast %58 : vector<1x32xf32> to vector<8x32xf32>
    %60 = arith.mulf %57, %59 : vector<8x32xf32>
    %c0_28 = arith.constant 0 : index
    %c0_29 = arith.constant 0 : index
    %61 = vector.load %arg10[%c0_28, %c0_29] : memref<1x32xf32, #tpu.memory_space<vmem>>, vector<1x32xf32>
    %62 = vector.broadcast %61 : vector<1x32xf32> to vector<8x32xf32>
    %63 = arith.addf %60, %62 : vector<8x32xf32>
    %64 = arith.truncf %63 : vector<8x32xf32> to vector<8x32xbf16>
    %c0_30 = arith.constant 0 : index
    %c0_31 = arith.constant 0 : index
    %65 = vector.load %arg11[%c0_30, %c0_31] : memref<32x64xbf16, #tpu.memory_space<vmem>>, vector<32x64xbf16>
    %cst_32 = arith.constant dense<0.000000e+00> : vector<8x64xf32>
    %66 = tpu.matmul %64, %65, %cst_32 {dimension_numbers = #tpu.dot_dimension_numbers<[1], [0], [0], [1], [0, 0, 1, 1], [], []>} : vector<8x32xbf16>, vector<32x64xbf16>, vector<8x64xf32> -> vector<8x64xf32>
    %c0_33 = arith.constant 0 : index
    %c0_34 = arith.constant 0 : index
    %67 = vector.load %arg12[%c0_33, %c0_34] : memref<1x64xf32, #tpu.memory_space<vmem>>, vector<1x64xf32>
    %68 = vector.broadcast %67 : vector<1x64xf32> to vector<8x64xf32>
    %69 = arith.addf %66, %68 : vector<8x64xf32>
    %cst_35 = arith.constant 5.000000e-01 : f32
    %70 = vector.broadcast %cst_35 : f32 to vector<8x64xf32>
    %71 = arith.mulf %70, %69 : vector<8x64xf32>
    %cst_36 = arith.constant 0.707106769 : f32
    %72 = vector.broadcast %cst_36 : f32 to vector<8x64xf32>
    %73 = arith.mulf %69, %72 : vector<8x64xf32>
    %74 = math.erf %73 : vector<8x64xf32>
    %cst_37 = arith.constant 1.000000e+00 : f32
    %75 = vector.broadcast %cst_37 : f32 to vector<8x64xf32>
    %76 = arith.addf %75, %74 : vector<8x64xf32>
    %77 = arith.mulf %71, %76 : vector<8x64xf32>
    %78 = arith.truncf %77 : vector<8x64xf32> to vector<8x64xbf16>
    %c0_38 = arith.constant 0 : index
    %c0_39 = arith.constant 0 : index
    %79 = vector.load %arg13[%c0_38, %c0_39] : memref<64x32xbf16, #tpu.memory_space<vmem>>, vector<64x32xbf16>
    %cst_40 = arith.constant dense<0.000000e+00> : vector<8x32xf32>
    %80 = tpu.matmul %78, %79, %cst_40 {dimension_numbers = #tpu.dot_dimension_numbers<[1], [0], [0], [1], [0, 0, 1, 1], [], []>} : vector<8x64xbf16>, vector<64x32xbf16>, vector<8x32xf32> -> vector<8x32xf32>
    %c0_41 = arith.constant 0 : index
    %c0_42 = arith.constant 0 : index
    %81 = vector.load %arg14[%c0_41, %c0_42] : memref<1x32xf32, #tpu.memory_space<vmem>>, vector<1x32xf32>
    %82 = vector.broadcast %81 : vector<1x32xf32> to vector<8x32xf32>
    %83 = arith.addf %80, %82 : vector<8x32xf32>
    %84 = arith.addf %63, %83 : vector<8x32xf32>
    %cst_43 = arith.constant dense<0.000000e+00> : vector<8xf32>
    %85 = vector.multi_reduction <add>, %84, %cst_43 [1] : vector<8x32xf32> to vector<8xf32>
    %86 = vector.shape_cast %85 : vector<8xf32> to vector<8x1xf32>
    %cst_44 = arith.constant 3.200000e+01 : f32
    %87 = vector.broadcast %cst_44 : f32 to vector<8x1xf32>
    %88 = arith.divf %86, %87 : vector<8x1xf32>
    %89 = vector.broadcast %88 : vector<8x1xf32> to vector<8x32xf32>
    %90 = arith.subf %84, %89 : vector<8x32xf32>
    %91 = arith.mulf %90, %90 : vector<8x32xf32>
    %cst_45 = arith.constant dense<0.000000e+00> : vector<8xf32>
    %92 = vector.multi_reduction <add>, %91, %cst_45 [1] : vector<8x32xf32> to vector<8xf32>
    %93 = vector.shape_cast %92 : vector<8xf32> to vector<8x1xf32>
    %cst_46 = arith.constant 3.200000e+01 : f32
    %94 = vector.broadcast %cst_46 : f32 to vector<8x1xf32>
    %95 = arith.divf %93, %94 : vector<8x1xf32>
    %96 = vector.broadcast %88 : vector<8x1xf32> to vector<8x32xf32>
    %97 = arith.subf %84, %96 : vector<8x32xf32>
    %cst_47 = arith.constant 9.99999974E-6 : f32
    %98 = vector.broadcast %cst_47 : f32 to vector<8x1xf32>
    %99 = arith.addf %95, %98 : vector<8x1xf32>
    %100 = math.rsqrt %99 : vector<8x1xf32>
    %101 = vector.broadcast %100 : vector<8x1xf32> to vector<8x32xf32>
    %102 = arith.mulf %97, %101 : vector<8x32xf32>
    %c0_48 = arith.constant 0 : index
    %c0_49 = arith.constant 0 : index
    %103 = vector.load %arg15[%c0_48, %c0_49] : memref<1x32xf32, #tpu.memory_space<vmem>>, vector<1x32xf32>
    %104 = vector.broadcast %103 : vector<1x32xf32> to vector<8x32xf32>
    %105 = arith.mulf %102, %104 : vector<8x32xf32>
    %c0_50 = arith.constant 0 : index
    %c0_51 = arith.constant 0 : index
    %106 = vector.load %arg16[%c0_50, %c0_51] : memref<1x32xf32, #tpu.memory_space<vmem>>, vector<1x32xf32>
    %107 = vector.broadcast %106 : vector<1x32xf32> to vector<8x32xf32>
    %108 = arith.addf %105, %107 : vector<8x32xf32>
    %c0_52 = arith.constant 0 : index
    %c0_53 = arith.constant 0 : index
    %c0_54 = arith.constant 0 : index
    %109 = vector.load %arg17[%c0_52, %c0_53, %c0_54] : memref<1x8x32xf32, #tpu.memory_space<vmem>>, vector<1x8x32xf32>
    %110 = vector.shape_cast %109 : vector<1x8x32xf32> to vector<8x32xf32>
    %111 = vector.shape_cast %108 : vector<8x32xf32> to vector<1x8x32xf32>
    tpu.vector_store %arg17[%c0_52, %c0_53, %c0_54], %111 {strides = array<i32>} : memref<1x8x32xf32, #tpu.memory_space<vmem>>, vector<1x8x32xf32>,
    return
  }
  func.func @transform_0(%arg0: i32, %arg1: i32) -> (i32, i32, i32) {
    %c0_i32 = arith.constant 0 : i32
    %c0_i32_0 = arith.constant 0 : i32
    %c0_i32_1 = arith.constant 0 : i32
    return %arg0, %c0_i32, %c0_i32_0 : i32, i32, i32
  }
  func.func @transform_1(%arg0: i32, %arg1: i32) -> (i32, i32) {
    %c0_i32 = arith.constant 0 : i32
    %c0_i32_0 = arith.constant 0 : i32
    %c0_i32_1 = arith.constant 0 : i32
    return %c0_i32, %c0_i32_0 : i32, i32
  }
  func.func @transform_2(%arg0: i32, %arg1: i32) -> (i32, i32) {
    %c0_i32 = arith.constant 0 : i32
    %c0_i32_0 = arith.constant 0 : i32
    %c0_i32_1 = arith.constant 0 : i32
    return %c0_i32, %c0_i32_0 : i32, i32
  }
  func.func @transform_3(%arg0: i32, %arg1: i32) -> (i32, i32) {
    %c0_i32 = arith.constant 0 : i32
    %c0_i32_0 = arith.constant 0 : i32
    %c0_i32_1 = arith.constant 0 : i32
    return %c0_i32, %c0_i32_0 : i32, i32
  }
  func.func @transform_4(%arg0: i32, %arg1: i32) -> (i32, i32) {
    %c0_i32 = arith.constant 0 : i32
    %c0_i32_0 = arith.constant 0 : i32
    %c0_i32_1 = arith.constant 0 : i32
    return %c0_i32, %c0_i32_0 : i32, i32
  }
  func.func @transform_5(%arg0: i32, %arg1: i32) -> (i32, i32) {
    %c0_i32 = arith.constant 0 : i32
    %c0_i32_0 = arith.constant 0 : i32
    %c0_i32_1 = arith.constant 0 : i32
    return %c0_i32, %c0_i32_0 : i32, i32
  }
  func.func @transform_6(%arg0: i32, %arg1: i32) -> (i32, i32) {
    %c0_i32 = arith.constant 0 : i32
    %c0_i32_0 = arith.constant 0 : i32
    %c0_i32_1 = arith.constant 0 : i32
    return %c0_i32, %c0_i32_0 : i32, i32
  }
  func.func @transform_7(%arg0: i32, %arg1: i32) -> (i32, i32) {
    %c0_i32 = arith.constant 0 : i32
    %c0_i32_0 = arith.constant 0 : i32
    %c0_i32_1 = arith.constant 0 : i32
    return %c0_i32, %c0_i32_0 : i32, i32
  }
  func.func @transform_8(%arg0: i32, %arg1: i32) -> (i32, i32) {
    %c0_i32 = arith.constant 0 : i32
    %c0_i32_0 = arith.constant 0 : i32
    %c0_i32_1 = arith.constant 0 : i32
    return %c0_i32, %c0_i32_0 : i32, i32
  }
  func.func @transform_9(%arg0: i32, %arg1: i32) -> (i32, i32) {
    %c0_i32 = arith.constant 0 : i32
    %c0_i32_0 = arith.constant 0 : i32
    %c0_i32_1 = arith.constant 0 : i32
    return %c0_i32, %c0_i32_0 : i32, i32
  }
  func.func @transform_10(%arg0: i32, %arg1: i32) -> (i32, i32) {
    %c0_i32 = arith.constant 0 : i32
    %c0_i32_0 = arith.constant 0 : i32
    %c0_i32_1 = arith.constant 0 : i32
    return %c0_i32, %c0_i32_0 : i32, i32
  }
  func.func @transform_11(%arg0: i32, %arg1: i32) -> (i32, i32) {
    %c0_i32 = arith.constant 0 : i32
    %c0_i32_0 = arith.constant 0 : i32
    %c0_i32_1 = arith.constant 0 : i32
    return %c0_i32, %c0_i32_0 : i32, i32
  }
  func.func @transform_12(%arg0: i32, %arg1: i32) -> (i32, i32) {
    %c0_i32 = arith.constant 0 : i32
    %c0_i32_0 = arith.constant 0 : i32
    %c0_i32_1 = arith.constant 0 : i32
    return %c0_i32, %c0_i32_0 : i32, i32
  }
  func.func @transform_13(%arg0: i32, %arg1: i32) -> (i32, i32) {
    %c0_i32 = arith.constant 0 : i32
    %c0_i32_0 = arith.constant 0 : i32
    %c0_i32_1 = arith.constant 0 : i32
    return %c0_i32, %c0_i32_0 : i32, i32
  }
  func.func @transform_14(%arg0: i32, %arg1: i32) -> (i32, i32) {
    %c0_i32 = arith.constant 0 : i32
    %c0_i32_0 = arith.constant 0 : i32
    %c0_i32_1 = arith.constant 0 : i32
    return %c0_i32, %c0_i32_0 : i32, i32
  }
  func.func @transform_15(%arg0: i32, %arg1: i32) -> (i32, i32, i32) {
    %c0_i32 = arith.constant 0 : i32
    %c0_i32_0 = arith.constant 0 : i32
    return %arg0, %arg1, %c0_i32 : i32, i32, i32
  }
}

</mosaic_0001>

<llo_original>
// kernel: tpu_custom_call.1
$region0: #{tpu_custom_call.1}
  #allocation0 [shape = 'u32[]', space=smem, size = 0x4, offset = 0x4, fixed_abs, tag = 'smem constant byte address 0x4 - core index']
  #allocation1 [shape = 'u32[72,128]{1,0:T(1,128)}', space=vmem, size = 0x9000, scoped, tag = 'internal scratch']
  #allocation2 [shape = 'bf16[4,8,8]{2,1,0:T(8,128)(2,1)}', space=vmem, size = 0x2000, scoped, tag = 'scratch operand']
  #allocation3 [shape = 'bf16[4,8,8]{2,1,0:T(8,128)(2,1)}', space=vmem, size = 0x2000, scoped, tag = 'scratch operand']
  %s0 = inlined_call_operand.vmem [shape: f32[2,8,32], index: 0, kind: input, shape index: {}]
  %s1 = inlined_call_operand.vmem [shape: bf16[32,32], index: 1, kind: input, shape index: {}]
  %s2 = inlined_call_operand.vmem [shape: f32[32,1], index: 2, kind: input, shape index: {}]
  %s3 = inlined_call_operand.vmem [shape: bf16[64,32], index: 3, kind: input, shape index: {}]
  %s4 = inlined_call_operand.vmem [shape: f32[64,1], index: 4, kind: input, shape index: {}]
  %s5 = inlined_call_operand.vmem [shape: bf16[32,32], index: 5, kind: input, shape index: {}]
  %s6 = inlined_call_operand.vmem [shape: f32[1,32], index: 6, kind: input, shape index: {}]
  %s7 = inlined_call_operand.vmem [shape: f32[1,32], index: 7, kind: input, shape index: {}]
  %s8 = inlined_call_operand.vmem [shape: f32[1,32], index: 8, kind: input, shape index: {}]
  %s9 = inlined_call_operand.vmem [shape: bf16[32,64], index: 9, kind: input, shape index: {}]
  %s10 = inlined_call_operand.vmem [shape: f32[1,64], index: 10, kind: input, shape index: {}]
  %s11 = inlined_call_operand.vmem [shape: bf16[64,32], index: 11, kind: input, shape index: {}]
  %s12 = inlined_call_operand.vmem [shape: f32[1,32], index: 12, kind: input, shape index: {}]
  %s13 = inlined_call_operand.vmem [shape: f32[1,32], index: 13, kind: input, shape index: {}]
  %s14 = inlined_call_operand.vmem [shape: f32[1,32], index: 14, kind: input, shape index: {}]
  %s15 = inlined_call_operand.hbm [shape: f32[2,8,32], index: 15, kind: output, shape index: {}]
  %s16 = sld [smem:[#allocation0]]
  $region97: #{tpu_custom_call.1} parent=0
    _
  %s18 = ssub.s32 1, %s16
  %s19 = scalar_select 0, %s18, %s16
  $region1: #{tpu_custom_call.1} parent=0
    #allocation4 [shape = 'u8[8192]{0}', space=vmem, size = 0x2000, scoped, tag = 'output window, operand 0']
    #allocation5 [shape = 's32[2]{0}', space=sflag, size = 0x8, scoped, tag = 'scoped memory for tpu_custom_call.1']
    %20 = vsyncpa [#allocation5], 0
    %s21 = scalar_lea.sflag [#allocation5], 1
    %22 = vsyncpa %s21, 0
    loop: start=0, step=1, limit=4
    $region2: #{tpu_custom_call.1} parent=1 // loop_pre_header
      _
    $region3: #{tpu_custom_call.1} parent=1 // loop_header
      %s24 = sphi 0, %s28
      %p25 = scmp.ge.s32.totalorder %s24, 4
      %s31 = sphi 0, %s43
      %s32 = sphi 0, %s39
      %s33 = sphi 0, %s31
      %s34 = sphi 0, %s32
      %s35 = sphi 0, %s33
      %s36 = sphi 0, %s34
      %s46 = sphi 0, %s48
      %s49 = sphi 0, %s46
      %s50 = sphi 0, %s49
      %s66 = sphi 0, %s50
      %s70 = sphi 0, %s70
      %s72 = sphi 0, %s70
      %s73 = sphi 0, %s72
      %s87 = sphi 0, %s73
      %s91 = sphi 0, %s91
      %s93 = sphi 0, %s91
      %s94 = sphi 0, %s93
      %s108 = sphi 0, %s94
      %s112 = sphi 0, %s112
      %s114 = sphi 0, %s112
      %s115 = sphi 0, %s114
      %s129 = sphi 0, %s115
      %s133 = sphi 0, %s133
      %s135 = sphi 0, %s133
      %s136 = sphi 0, %s135
      %s150 = sphi 0, %s136
      %s154 = sphi 0, %s154
      %s156 = sphi 0, %s154
      %s157 = sphi 0, %s156
      %s171 = sphi 0, %s157
      %s175 = sphi 0, %s175
      %s177 = sphi 0, %s175
      %s178 = sphi 0, %s177
      %s192 = sphi 0, %s178
      %s196 = sphi 0, %s196
      %s198 = sphi 0, %s196
      %s199 = sphi 0, %s198
      %s213 = sphi 0, %s199
      %s217 = sphi 0, %s217
      %s219 = sphi 0, %s217
      %s220 = sphi 0, %s219
      %s234 = sphi 0, %s220
      %s238 = sphi 0, %s238
      %s240 = sphi 0, %s238
      %s241 = sphi 0, %s240
      %s255 = sphi 0, %s241
      %s259 = sphi 0, %s259
      %s261 = sphi 0, %s259
      %s262 = sphi 0, %s261
      %s276 = sphi 0, %s262
      %s280 = sphi 0, %s280
      %s282 = sphi 0, %s280
      %s283 = sphi 0, %s282
      %s297 = sphi 0, %s283
      %s301 = sphi 0, %s301
      %s303 = sphi 0, %s301
      %s304 = sphi 0, %s303
      %s318 = sphi 0, %s304
      %s322 = sphi 0, %s322
      %s324 = sphi 0, %s322
      %s325 = sphi 0, %s324
      %s339 = sphi 0, %s325
      %s343 = sphi 0, %s343
      %s345 = sphi 0, %s343
      %s346 = sphi 0, %s345
      %s360 = sphi 0, %s346
      %s368 = sphi 0, %s370
      %s371 = sphi 0, %s368
      %s372 = sphi 0, %s371
      %s388 = sphi 0, %s372
    $region4: #{tpu_custom_call.1} parent=1 // loop_header_branch
      %27 = sbr.rel (%p25) target = $region8
    $region5: #{tpu_custom_call.1} parent=1 // loop_body
      %s29 = ssub.s32 %s24, 1
      %s30 = ssub.s32 %s24, 2
      %s37 = sadd.s32 1, %s32
      %p38 = scmp.ge.s32.totalorder %s37, 1
      %s39 = scalar_select %p38, 0, %s37
      %s40 = sadd.s32 1, %s31
      %s41 = scalar_select %p38, %s40, %s31
      %p42 = scmp.ge.s32.totalorder %s41, 2
      %s43 = scalar_select %p42, 0, %s41
      %s44 = ssub.s32 %s31, %s43
      %p45 = scmp.eq.s32.totalorder %s44, 0
      %s47 = sadd.s32 %s46, 1
      %s48 = scalar_select %p45, %s46, %s47
      %p51 = pneg %p45
      %p52 = scmp.eq.s32.totalorder %s24, 1
      %p53 = por %p51, %p52
      %p54 = scmp.ne.s32.totalorder %s46, %s49
      %p55 = scmp.eq.s32.totalorder %s24, 0
      %p56 = por %p54, %p55
      %p57 = scmp.ne.s32.totalorder %s46, %s49
      %p58 = scmp.eq.s32.totalorder %s29, 1
      %p59 = por %p57, %p58
      %p60 = scmp.ne.s32.totalorder %s49, %s50
      %p61 = scmp.eq.s32.totalorder %s29, 0
      %p62 = por %p60, %p61
      %p63 = scmp.ne.s32.totalorder %s49, %s50
      %p64 = scmp.eq.s32.totalorder %s30, 1
      %p65 = por %p63, %p64
      %p67 = scmp.ne.s32.totalorder %s50, %s66
      %p68 = scmp.eq.s32.totalorder %s30, 0
      %p69 = por %p67, %p68
      %s71 = sadd.s32 %s70, 1
      %p74 = scmp.eq.s32.totalorder %s24, 1
      %p75 = scmp.ne.s32.totalorder %s70, %s72
      %p76 = scmp.eq.s32.totalorder %s24, 0
      %p77 = por %p75, %p76
      %p78 = scmp.ne.s32.totalorder %s70, %s72
      %p79 = scmp.eq.s32.totalorder %s29, 1
      %p80 = por %p78, %p79
      %p81 = scmp.ne.s32.totalorder %s72, %s73
      %p82 = scmp.eq.s32.totalorder %s29, 0
      %p83 = por %p81, %p82
      %p84 = scmp.ne.s32.totalorder %s72, %s73
      %p85 = scmp.eq.s32.totalorder %s30, 1
      %p86 = por %p84, %p85
      %p88 = scmp.ne.s32.totalorder %s73, %s87
      %p89 = scmp.eq.s32.totalorder %s30, 0
      %p90 = por %p88, %p89
      %s92 = sadd.s32 %s91, 1
      %p95 = scmp.eq.s32.totalorder %s24, 1
      %p96 = scmp.ne.s32.totalorder %s91, %s93
      %p97 = scmp.eq.s32.totalorder %s24, 0
      %p98 = por %p96, %p97
      %p99 = scmp.ne.s32.totalorder %s91, %s93
      %p100 = scmp.eq.s32.totalorder %s29, 1
      %p101 = por %p99, %p100
      %p102 = scmp.ne.s32.totalorder %s93, %s94
      %p103 = scmp.eq.s32.totalorder %s29, 0
      %p104 = por %p102, %p103
      %p105 = scmp.ne.s32.totalorder %s93, %s94
      %p106 = scmp.eq.s32.totalorder %s30, 1
      %p107 = por %p105, %p106
      %p109 = scmp.ne.s32.totalorder %s94, %s108
      %p110 = scmp.eq.s32.totalorder %s30, 0
      %p111 = por %p109, %p110
      %s113 = sadd.s32 %s112, 1
      %p116 = scmp.eq.s32.totalorder %s24, 1
      %p117 = scmp.ne.s32.totalorder %s112, %s114
      %p118 = scmp.eq.s32.totalorder %s24, 0
      %p119 = por %p117, %p118
      %p120 = scmp.ne.s32.totalorder %s112, %s114
      %p121 = scmp.eq.s32.totalorder %s29, 1
      %p122 = por %p120, %p121
      %p123 = scmp.ne.s32.totalorder %s114, %s115
      %p124 = scmp.eq.s32.totalorder %s29, 0
      %p125 = por %p123, %p124
      %p126 = scmp.ne.s32.totalorder %s114, %s115
      %p127 = scmp.eq.s32.totalorder %s30, 1
      %p128 = por %p126, %p127
      %p130 = scmp.ne.s32.totalorder %s115, %s129
      %p131 = scmp.eq.s32.totalorder %s30, 0
      %p132 = por %p130, %p131
      %s134 = sadd.s32 %s133, 1
      %p137 = scmp.eq.s32.totalorder %s24, 1
      %p138 = scmp.ne.s32.totalorder %s133, %s135
      %p139 = scmp.eq.s32.totalorder %s24, 0
      %p140 = por %p138, %p139
      %p141 = scmp.ne.s32.totalorder %s133, %s135
      %p142 = scmp.eq.s32.totalorder %s29, 1
      %p143 = por %p141, %p142
      %p144 = scmp.ne.s32.totalorder %s135, %s136
      %p145 = scmp.eq.s32.totalorder %s29, 0
      %p146 = por %p144, %p145
      %p147 = scmp.ne.s32.totalorder %s135, %s136
      %p148 = scmp.eq.s32.totalorder %s30, 1
      %p149 = por %p147, %p148
      %p151 = scmp.ne.s32.totalorder %s136, %s150
      %p152 = scmp.eq.s32.totalorder %s30, 0
      %p153 = por %p151, %p152
      %s155 = sadd.s32 %s154, 1
      %p158 = scmp.eq.s32.totalorder %s24, 1
      %p159 = scmp.ne.s32.totalorder %s154, %s156
      %p160 = scmp.eq.s32.totalorder %s24, 0
      %p161 = por %p159, %p160
      %p162 = scmp.ne.s32.totalorder %s154, %s156
      %p163 = scmp.eq.s32.totalorder %s29, 1
      %p164 = por %p162, %p163
      %p165 = scmp.ne.s32.totalorder %s156, %s157
      %p166 = scmp.eq.s32.totalorder %s29, 0
      %p167 = por %p165, %p166
      %p168 = scmp.ne.s32.totalorder %s156, %s157
      %p169 = scmp.eq.s32.totalorder %s30, 1
      %p170 = por %p168, %p169
      %p172 = scmp.ne.s32.totalorder %s157, %s171
      %p173 = scmp.eq.s32.totalorder %s30, 0
      %p174 = por %p172, %p173
      %s176 = sadd.s32 %s175, 1
      %p179 = scmp.eq.s32.totalorder %s24, 1
      %p180 = scmp.ne.s32.totalorder %s175, %s177
      %p181 = scmp.eq.s32.totalorder %s24, 0
      %p182 = por %p180, %p181
      %p183 = scmp.ne.s32.totalorder %s175, %s177
      %p184 = scmp.eq.s32.totalorder %s29, 1
      %p185 = por %p183, %p184
      %p186 = scmp.ne.s32.totalorder %s177, %s178
      %p187 = scmp.eq.s32.totalorder %s29, 0
      %p188 = por %p186, %p187
      %p189 = scmp.ne.s32.totalorder %s177, %s178
      %p190 = scmp.eq.s32.totalorder %s30, 1
      %p191 = por %p189, %p190
      %p193 = scmp.ne.s32.totalorder %s178, %s192
      %p194 = scmp.eq.s32.totalorder %s30, 0
      %p195 = por %p193, %p194
      %s197 = sadd.s32 %s196, 1
      %p200 = scmp.eq.s32.totalorder %s24, 1
      %p201 = scmp.ne.s32.totalorder %s196, %s198
      %p202 = scmp.eq.s32.totalorder %s24, 0
      %p203 = por %p201, %p202
      %p204 = scmp.ne.s32.totalorder %s196, %s198
      %p205 = scmp.eq.s32.totalorder %s29, 1
      %p206 = por %p204, %p205
      %p207 = scmp.ne.s32.totalorder %s198, %s199
      %p208 = scmp.eq.s32.totalorder %s29, 0
      %p209 = por %p207, %p208
      %p210 = scmp.ne.s32.totalorder %s198, %s199
      %p211 = scmp.eq.s32.totalorder %s30, 1
      %p212 = por %p210, %p211
      %p214 = scmp.ne.s32.totalorder %s199, %s213
      %p215 = scmp.eq.s32.totalorder %s30, 0
      %p216 = por %p214, %p215
      %s218 = sadd.s32 %s217, 1
      %p221 = scmp.eq.s32.totalorder %s24, 1
      %p222 = scmp.ne.s32.totalorder %s217, %s219
      %p223 = scmp.eq.s32.totalorder %s24, 0
      %p224 = por %p222, %p223
      %p225 = scmp.ne.s32.totalorder %s217, %s219
      %p226 = scmp.eq.s32.totalorder %s29, 1
      %p227 = por %p225, %p226
      %p228 = scmp.ne.s32.totalorder %s219, %s220
      %p229 = scmp.eq.s32.totalorder %s29, 0
      %p230 = por %p228, %p229
      %p231 = scmp.ne.s32.totalorder %s219, %s220
      %p232 = scmp.eq.s32.totalorder %s30, 1
      %p233 = por %p231, %p232
      %p235 = scmp.ne.s32.totalorder %s220, %s234
      %p236 = scmp.eq.s32.totalorder %s30, 0
      %p237 = por %p235, %p236
      %s239 = sadd.s32 %s238, 1
      %p242 = scmp.eq.s32.totalorder %s24, 1
      %p243 = scmp.ne.s32.totalorder %s238, %s240
      %p244 = scmp.eq.s32.totalorder %s24, 0
      %p245 = por %p243, %p244
      %p246 = scmp.ne.s32.totalorder %s238, %s240
      %p247 = scmp.eq.s32.totalorder %s29, 1
      %p248 = por %p246, %p247
      %p249 = scmp.ne.s32.totalorder %s240, %s241
      %p250 = scmp.eq.s32.totalorder %s29, 0
      %p251 = por %p249, %p250
      %p252 = scmp.ne.s32.totalorder %s240, %s241
      %p253 = scmp.eq.s32.totalorder %s30, 1
      %p254 = por %p252, %p253
      %p256 = scmp.ne.s32.totalorder %s241, %s255
      %p257 = scmp.eq.s32.totalorder %s30, 0
      %p258 = por %p256, %p257
      %s260 = sadd.s32 %s259, 1
      %p263 = scmp.eq.s32.totalorder %s24, 1
      %p264 = scmp.ne.s32.totalorder %s259, %s261
      %p265 = scmp.eq.s32.totalorder %s24, 0
      %p266 = por %p264, %p265
      %p267 = scmp.ne.s32.totalorder %s259, %s261
      %p268 = scmp.eq.s32.totalorder %s29, 1
      %p269 = por %p267, %p268
      %p270 = scmp.ne.s32.totalorder %s261, %s262
      %p271 = scmp.eq.s32.totalorder %s29, 0
      %p272 = por %p270, %p271
      %p273 = scmp.ne.s32.totalorder %s261, %s262
      %p274 = scmp.eq.s32.totalorder %s30, 1
      %p275 = por %p273, %p274
      %p277 = scmp.ne.s32.totalorder %s262, %s276
      %p278 = scmp.eq.s32.totalorder %s30, 0
      %p279 = por %p277, %p278
      %s281 = sadd.s32 %s280, 1
      %p284 = scmp.eq.s32.totalorder %s24, 1
      %p285 = scmp.ne.s32.totalorder %s280, %s282
      %p286 = scmp.eq.s32.totalorder %s24, 0
      %p287 = por %p285, %p286
      %p288 = scmp.ne.s32.totalorder %s280, %s282
      %p289 = scmp.eq.s32.totalorder %s29, 1
      %p290 = por %p288, %p289
      %p291 = scmp.ne.s32.totalorder %s282, %s283
      %p292 = scmp.eq.s32.totalorder %s29, 0
      %p293 = por %p291, %p292
      %p294 = scmp.ne.s32.totalorder %s282, %s283
      %p295 = scmp.eq.s32.totalorder %s30, 1
      %p296 = por %p294, %p295
      %p298 = scmp.ne.s32.totalorder %s283, %s297
      %p299 = scmp.eq.s32.totalorder %s30, 0
      %p300 = por %p298, %p299
      %s302 = sadd.s32 %s301, 1
      %p305 = scmp.eq.s32.totalorder %s24, 1
      %p306 = scmp.ne.s32.totalorder %s301, %s303
      %p307 = scmp.eq.s32.totalorder %s24, 0
      %p308 = por %p306, %p307
      %p309 = scmp.ne.s32.totalorder %s301, %s303
      %p310 = scmp.eq.s32.totalorder %s29, 1
      %p311 = por %p309, %p310
      %p312 = scmp.ne.s32.totalorder %s303, %s304
      %p313 = scmp.eq.s32.totalorder %s29, 0
      %p314 = por %p312, %p313
      %p315 = scmp.ne.s32.totalorder %s303, %s304
      %p316 = scmp.eq.s32.totalorder %s30, 1
      %p317 = por %p315, %p316
      %p319 = scmp.ne.s32.totalorder %s304, %s318
      %p320 = scmp.eq.s32.totalorder %s30, 0
      %p321 = por %p319, %p320
      %s323 = sadd.s32 %s322, 1
      %p326 = scmp.eq.s32.totalorder %s24, 1
      %p327 = scmp.ne.s32.totalorder %s322, %s324
      %p328 = scmp.eq.s32.totalorder %s24, 0
      %p329 = por %p327, %p328
      %p330 = scmp.ne.s32.totalorder %s322, %s324
      %p331 = scmp.eq.s32.totalorder %s29, 1
      %p332 = por %p330, %p331
      %p333 = scmp.ne.s32.totalorder %s324, %s325
      %p334 = scmp.eq.s32.totalorder %s29, 0
      %p335 = por %p333, %p334
      %p336 = scmp.ne.s32.totalorder %s324, %s325
      %p337 = scmp.eq.s32.totalorder %s30, 1
      %p338 = por %p336, %p337
      %p340 = scmp.ne.s32.totalorder %s325, %s339
      %p341 = scmp.eq.s32.totalorder %s30, 0
      %p342 = por %p340, %p341
      %s344 = sadd.s32 %s343, 1
      %p347 = scmp.eq.s32.totalorder %s24, 1
      %p348 = scmp.ne.s32.totalorder %s343, %s345
      %p349 = scmp.eq.s32.totalorder %s24, 0
      %p350 = por %p348, %p349
      %p351 = scmp.ne.s32.totalorder %s343, %s345
      %p352 = scmp.eq.s32.totalorder %s29, 1
      %p353 = por %p351, %p352
      %p354 = scmp.ne.s32.totalorder %s345, %s346
      %p355 = scmp.eq.s32.totalorder %s29, 0
      %p356 = por %p354, %p355
      %p357 = scmp.ne.s32.totalorder %s345, %s346
      %p358 = scmp.eq.s32.totalorder %s30, 1
      %p359 = por %p357, %p358
      %p361 = scmp.ne.s32.totalorder %s346, %s360
      %p362 = scmp.eq.s32.totalorder %s30, 0
      %p363 = por %p361, %p362
      %s364 = ssub.s32 %s31, %s43
      %s365 = ssub.s32 %s32, %s39
      %s366 = sor.u32 %s364, %s365
      %p367 = scmp.eq.s32.totalorder %s366, 0
      %s369 = sadd.s32 %s368, 1
      %s370 = scalar_select %p367, %s368, %s369
      %p373 = pneg %p367
      %p374 = scmp.eq.s32.totalorder %s24, 1
      %p375 = por %p373, %p374
      %p376 = scmp.ne.s32.totalorder %s368, %s371
      %p377 = scmp.eq.s32.totalorder %s24, 0
      %p378 = por %p376, %p377
      %p379 = scmp.ne.s32.totalorder %s368, %s371
      %p380 = scmp.eq.s32.totalorder %s29, 1
      %p381 = por %p379, %p380
      %p382 = scmp.ne.s32.totalorder %s371, %s372
      %p383 = scmp.eq.s32.totalorder %s29, 0
      %p384 = por %p382, %p383
      %p385 = scmp.ne.s32.totalorder %s371, %s372
      %p386 = scmp.eq.s32.totalorder %s30, 1
      %p387 = por %p385, %p386
      %p389 = scmp.ne.s32.totalorder %s372, %s388
      %p390 = scmp.eq.s32.totalorder %s30, 0
      %p391 = por %p389, %p390
      %p392 = scmp.le.s32.totalorder 1, %s24
      %p393 = scmp.lt.s32.totalorder %s24, 3
      %p394 = pnand %p392, %p393
      %p395 = pneg %p394
      // Predicated region
      $region9: #{tpu_custom_call.1} parent=5 // pred_check
        _
      $region10: #{tpu_custom_call.1} parent=5 // pred_check_branch
        %397 = sbr.rel (%p394) target = $region12
      $region11: #{tpu_custom_call.1} parent=5 // pred_region
        %s398 = ssub.s32 %s24, 1
        // Predicated region
        $region13: #{tpu_custom_call.1} parent=11 // pred_check
          %p399 = pneg %p83
        $region14: #{tpu_custom_call.1} parent=11 // pred_check_branch
          %401 = sbr.rel (%p399) target = $region16
        $region15: #{tpu_custom_call.1} parent=11 // pred_region
          _
        $region16: #{tpu_custom_call.1} parent=11 // pred_fallthru
          _
        // Predicated region
        $region17: #{tpu_custom_call.1} parent=11 // pred_check
          %p402 = pneg %p104
        $region18: #{tpu_custom_call.1} parent=11 // pred_check_branch
          %404 = sbr.rel (%p402) target = $region20
        $region19: #{tpu_custom_call.1} parent=11 // pred_region
          _
        $region20: #{tpu_custom_call.1} parent=11 // pred_fallthru
          _
        // Predicated region
        $region21: #{tpu_custom_call.1} parent=11 // pred_check
          %p405 = pneg %p125
        $region22: #{tpu_custom_call.1} parent=11 // pred_check_branch
          %407 = sbr.rel (%p405) target = $region24
        $region23: #{tpu_custom_call.1} parent=11 // pred_region
          _
        $region24: #{tpu_custom_call.1} parent=11 // pred_fallthru
          _
        // Predicated region
        $region25: #{tpu_custom_call.1} parent=11 // pred_check
          %p408 = pneg %p146
        $region26: #{tpu_custom_call.1} parent=11 // pred_check_branch
          %410 = sbr.rel (%p408) target = $region28
        $region27: #{tpu_custom_call.1} parent=11 // pred_region
          _
        $region28: #{tpu_custom_call.1} parent=11 // pred_fallthru
          _
        // Predicated region
        $region29: #{tpu_custom_call.1} parent=11 // pred_check
          %p411 = pneg %p167
        $region30: #{tpu_custom_call.1} parent=11 // pred_check_branch
          %413 = sbr.rel (%p411) target = $region32
        $region31: #{tpu_custom_call.1} parent=11 // pred_region
          _
        $region32: #{tpu_custom_call.1} parent=11 // pred_fallthru
          _
        // Predicated region
        $region33: #{tpu_custom_call.1} parent=11 // pred_check
          %p414 = pneg %p188
        $region34: #{tpu_custom_call.1} parent=11 // pred_check_branch
          %416 = sbr.rel (%p414) target = $region36
        $region35: #{tpu_custom_call.1} parent=11 // pred_region
          _
        $region36: #{tpu_custom_call.1} parent=11 // pred_fallthru
          _
        // Predicated region
        $region37: #{tpu_custom_call.1} parent=11 // pred_check
          %p417 = pneg %p209
        $region38: #{tpu_custom_call.1} parent=11 // pred_check_branch
          %419 = sbr.rel (%p417) target = $region40
        $region39: #{tpu_custom_call.1} parent=11 // pred_region
          _
        $region40: #{tpu_custom_call.1} parent=11 // pred_fallthru
          _
        // Predicated region
        $region41: #{tpu_custom_call.1} parent=11 // pred_check
          %p420 = pneg %p230
        $region42: #{tpu_custom_call.1} parent=11 // pred_check_branch
          %422 = sbr.rel (%p420) target = $region44
        $region43: #{tpu_custom_call.1} parent=11 // pred_region
          _
        $region44: #{tpu_custom_call.1} parent=11 // pred_fallthru
          _
        // Predicated region
        $region45: #{tpu_custom_call.1} parent=11 // pred_check
          %p423 = pneg %p251
        $region46: #{tpu_custom_call.1} parent=11 // pred_check_branch
          %425 = sbr.rel (%p423) target = $region48
        $region47: #{tpu_custom_call.1} parent=11 // pred_region
          _
        $region48: #{tpu_custom_call.1} parent=11 // pred_fallthru
          _
        // Predicated region
        $region49: #{tpu_custom_call.1} parent=11 // pred_check
          %p426 = pneg %p272
        $region50: #{tpu_custom_call.1} parent=11 // pred_check_branch
          %428 = sbr.rel (%p426) target = $region52
        $region51: #{tpu_custom_call.1} parent=11 // pred_region
          _
        $region52: #{tpu_custom_call.1} parent=11 // pred_fallthru
          _
        // Predicated region
        $region53: #{tpu_custom_call.1} parent=11 // pred_check
          %p429 = pneg %p293
        $region54: #{tpu_custom_call.1} parent=11 // pred_check_branch
          %431 = sbr.rel (%p429) target = $region56
        $region55: #{tpu_custom_call.1} parent=11 // pred_region
          _
        $region56: #{tpu_custom_call.1} parent=11 // pred_fallthru
          _
        // Predicated region
        $region57: #{tpu_custom_call.1} parent=11 // pred_check
          %p432 = pneg %p314
        $region58: #{tpu_custom_call.1} parent=11 // pred_check_branch
          %434 = sbr.rel (%p432) target = $region60
        $region59: #{tpu_custom_call.1} parent=11 // pred_region
          _
        $region60: #{tpu_custom_call.1} parent=11 // pred_fallthru
          _
        // Predicated region
        $region61: #{tpu_custom_call.1} parent=11 // pred_check
          %p435 = pneg %p335
        $region62: #{tpu_custom_call.1} parent=11 // pred_check_branch
          %437 = sbr.rel (%p435) target = $region64
        $region63: #{tpu_custom_call.1} parent=11 // pred_region
          _
        $region64: #{tpu_custom_call.1} parent=11 // pred_fallthru
          _
        // Predicated region
        $region65: #{tpu_custom_call.1} parent=11 // pred_check
          %p438 = pneg %p356
        $region66: #{tpu_custom_call.1} parent=11 // pred_check_branch
          %440 = sbr.rel (%p438) target = $region68
        $region67: #{tpu_custom_call.1} parent=11 // pred_region
          _
        $region68: #{tpu_custom_call.1} parent=11 // pred_fallthru
          _
      $region12: #{tpu_custom_call.1} parent=5 // pred_fallthru
        _
      %p441 = scmp.lt.s32.totalorder %s24, 2
      // Predicated region
      $region69: #{tpu_custom_call.1} parent=5 // pred_check
        %p442 = pneg %p441
      $region70: #{tpu_custom_call.1} parent=5 // pred_check_branch
        %444 = sbr.rel (%p442) target = $region72
      $region71: #{tpu_custom_call.1} parent=5 // pred_region
        // Predicated region
        $region73: #{tpu_custom_call.1} parent=71 // pred_check
          %p445 = pneg %p56
        $region74: #{tpu_custom_call.1} parent=71 // pred_check_branch
          %447 = sbr.rel (%p445) target = $region76
        $region75: #{tpu_custom_call.1} parent=71 // pred_region
          %p448 = scmp.lt.s32.totalorder %s31, 1
          %s449 = scalar_select %p448, %s31, 1
          %s450 = smul.addr %s449, 8
          %s451 = scalar_lea.vmem %s0, %s450
        $region76: #{tpu_custom_call.1} parent=71 // pred_fallthru
          _
      $region72: #{tpu_custom_call.1} parent=5 // pred_fallthru
        _
      %p452 = scmp.le.s32.totalorder 1, %s24
      %p453 = scmp.lt.s32.totalorder %s24, 3
      %p454 = pnand %p452, %p453
      %p455 = pneg %p454
      // Predicated region
      $region77: #{tpu_custom_call.1} parent=5 // pred_check
        _
      $region78: #{tpu_custom_call.1} parent=5 // pred_check_branch
        %457 = sbr.rel (%p454) target = $region80
      $region79: #{tpu_custom_call.1} parent=5 // pred_region
        %s458 = ssub.s32 %s24, 1
        %p459 = scmp.lt.s32.totalorder %s33, 1
        %s460 = scalar_select %p459, %s33, 1
        %s461 = smul.addr %s460, 8
        %s462 = scalar_lea.vmem %s0, %s461
        %p463 = pneg %p62
        %p464 = pneg %p59
        %p465 = pneg %p83
        %p466 = pneg %p80
        %p467 = pneg %p104
        %p468 = pneg %p101
        %p469 = pneg %p125
        %p470 = pneg %p122
        %p471 = pneg %p146
        %p472 = pneg %p143
        %p473 = pneg %p167
        %p474 = pneg %p164
        %p475 = pneg %p188
        %p476 = pneg %p185
        %p477 = pneg %p209
        %p478 = pneg %p206
        %p479 = pneg %p230
        %p480 = pneg %p227
        %p481 = pneg %p251
        %p482 = pneg %p248
        %p483 = pneg %p272
        %p484 = pneg %p269
        %p485 = pneg %p293
        %p486 = pneg %p290
        %p487 = pneg %p314
        %p488 = pneg %p311
        %p489 = pneg %p335
        %p490 = pneg %p332
        %p491 = pneg %p356
        %p492 = pneg %p353
        %p493 = pneg %p384
        %p494 = pneg %p381
        %s495 = sand.u32 %s371, 1
        %s496 = scalar_lea.sflag [#allocation5], %s495
        %s497 = sand.u32 %s371, 1
        %s498 = smul.addr %s497, 8
        %s499 = scalar_lea.vmem [#allocation4], %s498
        %p500 = scmp.lt.s32.totalorder %s33, 1
        %s501 = scalar_select %p500, %s33, 1
        %s502 = smul.addr %s501, 8
        %s503 = scalar_lea.vmem %s0, %s502
        %p505 = scmp.eq.s32.totalorder %s34, 0
        // Predicated region
        $region81: #{tpu_custom_call.1} parent=79 // pred_check
          %p506 = pneg %p505
        $region82: #{tpu_custom_call.1} parent=79 // pred_check_branch
          %508 = sbr.rel (%p506) target = $region84
        $region83: #{tpu_custom_call.1} parent=79 // pred_region
          %v509 = vld [vmem:[%s503] sm:$0xff]
          %v510 = vpack.c.bf16 %v509, %v509
          %v511 = vld [vmem:[%s3] sm:$0xf]
          %v512 = vld [vmem:[%s3 + $0x4] sm:$0xf]
          %v513 = vld [vmem:[%s3 + $0x8] sm:$0xf]
          %v514 = vld [vmem:[%s3 + $0xc] sm:$0xf]
          %v515 = vld [vmem:[%s3 + $0x10] sm:$0xf]
          %v516 = vld [vmem:[%s3 + $0x14] sm:$0xf]
          %v517 = vld [vmem:[%s3 + $0x18] sm:$0xf]
          %v518 = vld [vmem:[%s3 + $0x1c] sm:$0xf]
          %v519 = vld [vmem:[%s4] sm:$0xff]
          %v520 = vld [vmem:[%s4 + $0x8] sm:$0xff]
          %v521 = vld [vmem:[%s4 + $0x10] sm:$0xff]
          %v522 = vld [vmem:[%s4 + $0x18] sm:$0xff]
          %v523 = vld [vmem:[%s4 + $0x20] sm:$0xff]
          %v524 = vld [vmem:[%s4 + $0x28] sm:$0xff]
          %v525 = vld [vmem:[%s4 + $0x30] sm:$0xff]
          %v526 = vld [vmem:[%s4 + $0x38] sm:$0xff]
          %528 = vset.pattern.permute.xlu0 0
          %529 = vperm.xlu0 %528, %v519
          %v530 = vpop.permute.xlu0 %529
          %533 = vset.pattern.permute.xlu0 0
          %534 = vperm.xlu0 %533, %v520
          %v535 = vpop.permute.xlu0 %534
          %538 = vset.pattern.permute.xlu0 0
          %539 = vperm.xlu0 %538, %v521
          %v540 = vpop.permute.xlu0 %539
          %543 = vset.pattern.permute.xlu0 0
          %544 = vperm.xlu0 %543, %v522
          %v545 = vpop.permute.xlu0 %544
          %548 = vset.pattern.permute.xlu0 0
          %549 = vperm.xlu0 %548, %v523
          %v550 = vpop.permute.xlu0 %549
          %553 = vset.pattern.permute.xlu0 0
          %554 = vperm.xlu0 %553, %v524
          %v555 = vpop.permute.xlu0 %554
          %558 = vset.pattern.permute.xlu0 0
          %559 = vperm.xlu0 %558, %v525
          %v560 = vpop.permute.xlu0 %559
          %563 = vset.pattern.permute.xlu0 0
          %564 = vperm.xlu0 %563, %v526
          %v565 = vpop.permute.xlu0 %564
          %v575 = vunpack.c.l.b16 %v511
          %v576 = vunpack.c.l.b16 %v512
          %v577 = vunpack.c.l.b16 %v513
          %v578 = vunpack.c.l.b16 %v514
          %v579 = vunpack.c.l.b16 %v515
          %v580 = vunpack.c.l.b16 %v516
          %v581 = vunpack.c.l.b16 %v517
          %v582 = vunpack.c.l.b16 %v518
          %v583 = vpack.c.b16 %v576, %v575
          %v584 = vpack.c.b16 %v578, %v577
          %v585 = vpack.c.b16 %v580, %v579
          %v586 = vpack.c.b16 %v582, %v581
          %vm587 = vcmask 261120
          %v589 = vsel %vm587, %v583, 0
          %v592 = vsel %vm587, %v584, 0
          %v595 = vsel %vm587, %v585, 0
          %v598 = vsel %vm587, %v586, 0
          %v601 = vsel %vm587, %v510, 0
          %603 = vmatpush.bf16.xpose.msra.mxu0 0
          %604 = vmatpush.bf16.xpose.msra.mxu0 0
          %605 = vmatpush.bf16.xpose.msra.mxu0 0
          %606 = vmatpush.bf16.xpose.msra.mxu0 0
          %607 = vmatpush.bf16.xpose.msra.mxu0 0
          %608 = vmatpush.bf16.xpose.msra.mxu0 0
          %609 = vmatpush.bf16.xpose.msra.mxu0 0
          %610 = vmatpush.bf16.xpose.msra.mxu0 %v601
          %611 = vmatmul.bf16.gmra.mxu0 %v589
          %v612 = vpop.f32.mrf.mxu0
          %v613 = vadd.f32 %v530, %v612
          %v614 = vpop.f32.mrf.mxu0
          %v615 = vadd.f32 %v535, %v614
          %616 = vmatmul.bf16.gmra.mxu0 %v592
          %v617 = vpop.f32.mrf.mxu0
          %v618 = vadd.f32 %v540, %v617
          %v619 = vpop.f32.mrf.mxu0
          %v620 = vadd.f32 %v545, %v619
          %621 = vmatmul.bf16.gmra.mxu0 %v595
          %v622 = vpop.f32.mrf.mxu0
          %v623 = vadd.f32 %v550, %v622
          %v624 = vpop.f32.mrf.mxu0
          %v625 = vadd.f32 %v555, %v624
          %626 = vmatmul.bf16.gmra.mxu0 %v598
          %v627 = vpop.f32.mrf.mxu0
          %v628 = vadd.f32 %v560, %v627
          %v629 = vpop.f32.mrf.mxu0
          %v630 = vadd.f32 %v565, %v629
          %631 = vdwg.mxu0
          %v632 = vpack.c.bf16 %v613, %v613
          %v633 = vpack.c.bf16 %v615, %v615
          %v634 = vpack.c.bf16 %v618, %v618
          %v635 = vpack.c.bf16 %v620, %v620
          %vm636 = vcmask 60416
          %637 = vst.msk [vmem:[#allocation2] sm:$0xf] %vm636, %v632
          %638 = vst.msk [vmem:[#allocation2 + $0x4] sm:$0xf] %vm636, %v633
          %639 = vst.msk [vmem:[#allocation2 + $0x8] sm:$0xf] %vm636, %v634
          %640 = vst.msk [vmem:[#allocation2 + $0xc] sm:$0xf] %vm636, %v635
          %v641 = vpack.c.bf16 %v623, %v623
          %v642 = vpack.c.bf16 %v625, %v625
          %v643 = vpack.c.bf16 %v628, %v628
          %v644 = vpack.c.bf16 %v630, %v630
          %645 = vst.msk [vmem:[#allocation3] sm:$0xf] %vm636, %v641
          %646 = vst.msk [vmem:[#allocation3 + $0x4] sm:$0xf] %vm636, %v642
          %647 = vst.msk [vmem:[#allocation3 + $0x8] sm:$0xf] %vm636, %v643
          %648 = vst.msk [vmem:[#allocation3 + $0xc] sm:$0xf] %vm636, %v644
        $region84: #{tpu_custom_call.1} parent=79 // pred_fallthru
          _
        %s649 = smul.u32 %s34, 8
        %s650 = scalar_lea.vmem %s503, %s649
        %v651 = vld [vmem:[%s650] sm:$0xff]
        %v652 = vld [vmem:[%s1] sm:$0xf]
        %v653 = vld [vmem:[%s1 + $0x4] sm:$0xf]
        %v654 = vld [vmem:[%s1 + $0x8] sm:$0xf]
        %v655 = vld [vmem:[%s1 + $0xc] sm:$0xf]
        %v656 = vpack.c.bf16 %v651, %v651
        %v657 = vld [vmem:[%s2] sm:$0xff]
        %v658 = vld [vmem:[%s2 + $0x8] sm:$0xff]
        %v659 = vld [vmem:[%s2 + $0x10] sm:$0xff]
        %v660 = vld [vmem:[%s2 + $0x18] sm:$0xff]
        %662 = vset.pattern.permute.xlu0 0
        %663 = vperm.xlu0 %662, %v657
        %v664 = vpop.permute.xlu0 %663
        %667 = vset.pattern.permute.xlu0 0
        %668 = vperm.xlu0 %667, %v658
        %v669 = vpop.permute.xlu0 %668
        %672 = vset.pattern.permute.xlu0 0
        %673 = vperm.xlu0 %672, %v659
        %v674 = vpop.permute.xlu0 %673
        %677 = vset.pattern.permute.xlu0 0
        %678 = vperm.xlu0 %677, %v660
        %v679 = vpop.permute.xlu0 %678
        %v685 = vunpack.c.l.b16 %v652
        %v686 = vunpack.c.l.b16 %v653
        %v687 = vunpack.c.l.b16 %v654
        %v688 = vunpack.c.l.b16 %v655
        %v689 = vpack.c.b16 %v686, %v685
        %v690 = vpack.c.b16 %v688, %v687
        %vm691 = vcmask 261120
        %v693 = vsel %vm691, %v689, 0
        %v696 = vsel %vm691, %v690, 0
        %v699 = vsel %vm691, %v656, 0
        %701 = vmatpush.bf16.xpose.msra.mxu0 0
        %702 = vmatpush.bf16.xpose.msra.mxu0 0
        %703 = vmatpush.bf16.xpose.msra.mxu0 0
        %704 = vmatpush.bf16.xpose.msra.mxu0 0
        %705 = vmatpush.bf16.xpose.msra.mxu0 0
        %706 = vmatpush.bf16.xpose.msra.mxu0 0
        %707 = vmatpush.bf16.xpose.msra.mxu0 0
        %708 = vmatpush.bf16.xpose.msra.mxu0 %v699
        %709 = vmatmul.bf16.gmra.mxu0 %v693
        %v710 = vpop.f32.mrf.mxu0
        %v711 = vadd.f32 %v664, %v710
        %v712 = vpop.f32.mrf.mxu0
        %v713 = vadd.f32 %v669, %v712
        %714 = vmatmul.bf16.gmra.mxu0 %v696
        %v715 = vpop.f32.mrf.mxu0
        %v716 = vadd.f32 %v674, %v715
        %v717 = vpop.f32.mrf.mxu0
        %v718 = vadd.f32 %v679, %v717
        %719 = vdwg.mxu0
        %v720 = vpack.c.bf16 %v711, %v711
        %v721 = vpack.c.bf16 %v713, %v713
        %v722 = vpack.c.bf16 %v716, %v716
        %v723 = vpack.c.bf16 %v718, %v718
        %v724 = vld [vmem:[#allocation2] sm:$0xf]
        %v725 = vld [vmem:[#allocation2 + $0x4] sm:$0xf]
        %v726 = vld [vmem:[#allocation2 + $0x8] sm:$0xf]
        %v727 = vld [vmem:[#allocation2 + $0xc] sm:$0xf]
        %728 = vxpose.xlu0.c.b16.start [1/8] %v720, 128
        %729 = vxpose.xlu0.c.b16.cont [2/8] 0, 128
        %730 = vxpose.xlu0.c.b16.cont [3/8] 0, 128
        %731 = vxpose.xlu0.c.b16.cont [4/8] 0, 128
        %732 = vxpose.xlu0.c.b16.cont [5/8] 0, 128
        %733 = vxpose.xlu0.c.b16.cont [6/8] 0, 128
        %734 = vxpose.xlu0.c.b16.cont [7/8] 0, 128
        %735 = vxpose.xlu0.c.b16.end [8/8] 0, 128
        %v736 = vpop.trf.xlu0
        %v737 = vpop.trf.xlu0
        %v738 = vpop.trf.xlu0
        %v739 = vpop.trf.xlu0
        %v740 = vpop.trf.xlu0
        %v741 = vpop.trf.xlu0
        %v742 = vpop.trf.xlu0
        %v743 = vpop.trf.xlu0
        %vm744 = vcmask 64512
        %v746 = vsel %vm744, %v736, 0
        %vm748 = vcmask 1043456
        %v750 = vsel %vm748, %v724, 0
        %752 = vmatpush.bf16.msra.mxu0 0
        %753 = vmatpush.bf16.msra.mxu0 0
        %754 = vmatpush.bf16.msra.mxu0 0
        %755 = vmatpush.bf16.msra.mxu0 0
        %756 = vmatpush.bf16.msra.mxu0 0
        %757 = vmatpush.bf16.msra.mxu0 0
        %758 = vmatpush.bf16.msra.mxu0 0
        %759 = vmatpush.bf16.msra.mxu0 %v750
        %760 = vmatmul.bf16.gmra.mxu0 %v746
        %v761 = vpop.f32.mrf.mxu0
        %v762 = vadd.f32 0.0, %v761
        %v763 = vpop.f32.mrf.mxu0
        %764 = vdwg.mxu0
        %765 = vxpose.xlu0.c.b16.start [1/8] %v721, 128
        %766 = vxpose.xlu0.c.b16.cont [2/8] 0, 128
        %767 = vxpose.xlu0.c.b16.cont [3/8] 0, 128
        %768 = vxpose.xlu0.c.b16.cont [4/8] 0, 128
        %769 = vxpose.xlu0.c.b16.cont [5/8] 0, 128
        %770 = vxpose.xlu0.c.b16.cont [6/8] 0, 128
        %771 = vxpose.xlu0.c.b16.cont [7/8] 0, 128
        %772 = vxpose.xlu0.c.b16.end [8/8] 0, 128
        %v773 = vpop.trf.xlu0
        %v774 = vpop.trf.xlu0
        %v775 = vpop.trf.xlu0
        %v776 = vpop.trf.xlu0
        %v777 = vpop.trf.xlu0
        %v778 = vpop.trf.xlu0
        %v779 = vpop.trf.xlu0
        %v780 = vpop.trf.xlu0
        %v782 = vsel %vm744, %v773, 0
        %v785 = vsel %vm748, %v725, 0
        %787 = vmatpush.bf16.msra.mxu0 0
        %788 = vmatpush.bf16.msra.mxu0 0
        %789 = vmatpush.bf16.msra.mxu0 0
        %790 = vmatpush.bf16.msra.mxu0 0
        %791 = vmatpush.bf16.msra.mxu0 0
        %792 = vmatpush.bf16.msra.mxu0 0
        %793 = vmatpush.bf16.msra.mxu0 0
        %794 = vmatpush.bf16.msra.mxu0 %v785
        %795 = vmatmul.bf16.gmra.mxu0 %v782
        %v796 = vpop.f32.mrf.mxu0
        %v797 = vadd.f32 0.0, %v796
        %v798 = vpop.f32.mrf.mxu0
        %799 = vdwg.mxu0
        %800 = vxpose.xlu0.c.b16.start [1/8] %v722, 128
        %801 = vxpose.xlu0.c.b16.cont [2/8] 0, 128
        %802 = vxpose.xlu0.c.b16.cont [3/8] 0, 128
        %803 = vxpose.xlu0.c.b16.cont [4/8] 0, 128
        %804 = vxpose.xlu0.c.b16.cont [5/8] 0, 128
        %805 = vxpose.xlu0.c.b16.cont [6/8] 0, 128
        %806 = vxpose.xlu0.c.b16.cont [7/8] 0, 128
        %807 = vxpose.xlu0.c.b16.end [8/8] 0, 128
        %v808 = vpop.trf.xlu0
        %v809 = vpop.trf.xlu0
        %v810 = vpop.trf.xlu0
        %v811 = vpop.trf.xlu0
        %v812 = vpop.trf.xlu0
        %v813 = vpop.trf.xlu0
        %v814 = vpop.trf.xlu0
        %v815 = vpop.trf.xlu0
        %v817 = vsel %vm744, %v808, 0
        %v820 = vsel %vm748, %v726, 0
        %822 = vmatpush.bf16.msra.mxu0 0
        %823 = vmatpush.bf16.msra.mxu0 0
        %824 = vmatpush.bf16.msra.mxu0 0
        %825 = vmatpush.bf16.msra.mxu0 0
        %826 = vmatpush.bf16.msra.mxu0 0
        %827 = vmatpush.bf16.msra.mxu0 0
        %828 = vmatpush.bf16.msra.mxu0 0
        %829 = vmatpush.bf16.msra.mxu0 %v820
        %830 = vmatmul.bf16.gmra.mxu0 %v817
        %v831 = vpop.f32.mrf.mxu0
        %v832 = vadd.f32 0.0, %v831
        %v833 = vpop.f32.mrf.mxu0
        %834 = vdwg.mxu0
        %835 = vxpose.xlu0.c.b16.start [1/8] %v723, 128
        %836 = vxpose.xlu0.c.b16.cont [2/8] 0, 128
        %837 = vxpose.xlu0.c.b16.cont [3/8] 0, 128
        %838 = vxpose.xlu0.c.b16.cont [4/8] 0, 128
        %839 = vxpose.xlu0.c.b16.cont [5/8] 0, 128
        %840 = vxpose.xlu0.c.b16.cont [6/8] 0, 128
        %841 = vxpose.xlu0.c.b16.cont [7/8] 0, 128
        %842 = vxpose.xlu0.c.b16.end [8/8] 0, 128
        %v843 = vpop.trf.xlu0
        %v844 = vpop.trf.xlu0
        %v845 = vpop.trf.xlu0
        %v846 = vpop.trf.xlu0
        %v847 = vpop.trf.xlu0
        %v848 = vpop.trf.xlu0
        %v849 = vpop.trf.xlu0
        %v850 = vpop.trf.xlu0
        %v852 = vsel %vm744, %v843, 0
        %v855 = vsel %vm748, %v727, 0
        %857 = vmatpush.bf16.msra.mxu0 0
        %858 = vmatpush.bf16.msra.mxu0 0
        %859 = vmatpush.bf16.msra.mxu0 0
        %860 = vmatpush.bf16.msra.mxu0 0
        %861 = vmatpush.bf16.msra.mxu0 0
        %862 = vmatpush.bf16.msra.mxu0 0
        %863 = vmatpush.bf16.msra.mxu0 0
        %864 = vmatpush.bf16.msra.mxu0 %v855
        %865 = vmatmul.bf16.gmra.mxu0 %v852
        %v866 = vpop.f32.mrf.mxu0
        %v867 = vadd.f32 0.0, %v866
        %v868 = vpop.f32.mrf.mxu0
        %869 = vdwg.mxu0
        %v870 = vsel %vm744, %v762, -inf
        %871 = vmax.xlane.f32.xlu0 %v870
        %v872 = vpop.xlane.xlu0 %871
        %v873 = vsel %vm744, %v797, -inf
        %874 = vmax.xlane.f32.xlu0 %v873
        %v875 = vpop.xlane.xlu0 %874
        %v876 = vsel %vm744, %v832, -inf
        %877 = vmax.xlane.f32.xlu0 %v876
        %v878 = vpop.xlane.xlu0 %877
        %v879 = vsel %vm744, %v867, -inf
        %880 = vmax.xlane.f32.xlu0 %v879
        %v881 = vpop.xlane.xlu0 %880
        %v882 = vsub.f32 %v762, %v872
        %v883 = vsub.f32 %v797, %v875
        %v884 = vsub.f32 %v832, %v878
        %v885 = vsub.f32 %v867, %v881
        %v886 = vmul.f32 %v882, 1.442695
        %v887 = vpow.pop %v886
        %v888 = vmul.f32 %v883, 1.442695
        %v889 = vpow.pop %v888
        %v890 = vmul.f32 %v884, 1.442695
        %v891 = vpow.pop %v890
        %v892 = vmul.f32 %v885, 1.442695
        %v893 = vpow.pop %v892
        %v894 = vsel %vm744, %v887, 0.0
        %895 = vadd.xlane.f32.xlu0 %v894
        %v896 = vpop.xlane.xlu0 %895
        %v897 = vsel %vm744, %v889, 0.0
        %898 = vadd.xlane.f32.xlu0 %v897
        %v899 = vpop.xlane.xlu0 %898
        %v900 = vsel %vm744, %v891, 0.0
        %901 = vadd.xlane.f32.xlu0 %v900
        %v902 = vpop.xlane.xlu0 %901
        %v903 = vsel %vm744, %v893, 0.0
        %904 = vadd.xlane.f32.xlu0 %v903
        %v905 = vpop.xlane.xlu0 %904
        %v906 = vrcp.pop %v896
        %v907 = vrcp.pop %v899
        %v908 = vrcp.pop %v902
        %v909 = vrcp.pop %v905
        %v910 = vmul.f32 %v887, %v906
        %v911 = vmul.f32 %v889, %v907
        %v912 = vmul.f32 %v891, %v908
        %v913 = vmul.f32 %v893, %v909
        %v914 = vld [vmem:[#allocation3] sm:$0xf]
        %v915 = vld [vmem:[#allocation3 + $0x4] sm:$0xf]
        %v916 = vld [vmem:[#allocation3 + $0x8] sm:$0xf]
        %v917 = vld [vmem:[#allocation3 + $0xc] sm:$0xf]
        %v918 = vpack.c.bf16 %v910, %v910
        %v919 = vpack.c.bf16 %v911, %v911
        %v920 = vpack.c.bf16 %v912, %v912
        %v921 = vpack.c.bf16 %v913, %v913
        %v923 = vsel %vm744, %v914, 0
        %v926 = vsel %vm744, %v918, 0
        %928 = vmatpush.bf16.xpose.msra.mxu0 0
        %929 = vmatpush.bf16.xpose.msra.mxu0 0
        %930 = vmatpush.bf16.xpose.msra.mxu0 0
        %931 = vmatpush.bf16.xpose.msra.mxu0 0
        %932 = vmatpush.bf16.xpose.msra.mxu0 0
        %933 = vmatpush.bf16.xpose.msra.mxu0 0
        %934 = vmatpush.bf16.xpose.msra.mxu0 0
        %935 = vmatpush.bf16.xpose.msra.mxu0 %v926
        %936 = vmatmul.bf16.gmra.mxu0 %v923
        %v937 = vpop.f32.mrf.mxu0
        %v938 = vadd.f32 0.0, %v937
        %v939 = vpop.f32.mrf.mxu0
        %940 = vdwg.mxu0
        %v942 = vsel %vm744, %v915, 0
        %v945 = vsel %vm744, %v919, 0
        %947 = vmatpush.bf16.xpose.msra.mxu0 0
        %948 = vmatpush.bf16.xpose.msra.mxu0 0
        %949 = vmatpush.bf16.xpose.msra.mxu0 0
        %950 = vmatpush.bf16.xpose.msra.mxu0 0
        %951 = vmatpush.bf16.xpose.msra.mxu0 0
        %952 = vmatpush.bf16.xpose.msra.mxu0 0
        %953 = vmatpush.bf16.xpose.msra.mxu0 0
        %954 = vmatpush.bf16.xpose.msra.mxu0 %v945
        %955 = vmatmul.bf16.gmra.mxu0 %v942
        %v956 = vpop.f32.mrf.mxu0
        %v957 = vadd.f32 0.0, %v956
        %v958 = vpop.f32.mrf.mxu0
        %959 = vdwg.mxu0
        %v961 = vsel %vm744, %v916, 0
        %v964 = vsel %vm744, %v920, 0
        %966 = vmatpush.bf16.xpose.msra.mxu0 0
        %967 = vmatpush.bf16.xpose.msra.mxu0 0
        %968 = vmatpush.bf16.xpose.msra.mxu0 0
        %969 = vmatpush.bf16.xpose.msra.mxu0 0
        %970 = vmatpush.bf16.xpose.msra.mxu0 0
        %971 = vmatpush.bf16.xpose.msra.mxu0 0
        %972 = vmatpush.bf16.xpose.msra.mxu0 0
        %973 = vmatpush.bf16.xpose.msra.mxu0 %v964
        %974 = vmatmul.bf16.gmra.mxu0 %v961
        %v975 = vpop.f32.mrf.mxu0
        %v976 = vadd.f32 0.0, %v975
        %v977 = vpop.f32.mrf.mxu0
        %978 = vdwg.mxu0
        %v980 = vsel %vm744, %v917, 0
        %v983 = vsel %vm744, %v921, 0
        %985 = vmatpush.bf16.xpose.msra.mxu0 0
        %986 = vmatpush.bf16.xpose.msra.mxu0 0
        %987 = vmatpush.bf16.xpose.msra.mxu0 0
        %988 = vmatpush.bf16.xpose.msra.mxu0 0
        %989 = vmatpush.bf16.xpose.msra.mxu0 0
        %990 = vmatpush.bf16.xpose.msra.mxu0 0
        %991 = vmatpush.bf16.xpose.msra.mxu0 0
        %992 = vmatpush.bf16.xpose.msra.mxu0 %v983
        %993 = vmatmul.bf16.gmra.mxu0 %v980
        %v994 = vpop.f32.mrf.mxu0
        %v995 = vadd.f32 0.0, %v994
        %v996 = vpop.f32.mrf.mxu0
        %997 = vdwg.mxu0
        %998 = vxpose.xlu0.b32.start [1/16] %v938, 128
        %999 = vxpose.xlu0.b32.cont [2/16] %v957, 128
        %1000 = vxpose.xlu0.b32.cont [3/16] %v976, 128
        %1001 = vxpose.xlu0.b32.cont [4/16] %v995, 128
        %1002 = vxpose.xlu0.b32.cont [5/16] 0.0, 128
        %1003 = vxpose.xlu0.b32.cont [6/16] 0.0, 128
        %1004 = vxpose.xlu0.b32.cont [7/16] 0.0, 128
        %1005 = vxpose.xlu0.b32.cont [8/16] 0.0, 128
        %1006 = vxpose.xlu0.b32.cont [9/16] 0.0, 128
        %1007 = vxpose.xlu0.b32.cont [10/16] 0.0, 128
        %1008 = vxpose.xlu0.b32.cont [11/16] 0.0, 128
        %1009 = vxpose.xlu0.b32.cont [12/16] 0.0, 128
        %1010 = vxpose.xlu0.b32.cont [13/16] 0.0, 128
        %1011 = vxpose.xlu0.b32.cont [14/16] 0.0, 128
        %1012 = vxpose.xlu0.b32.cont [15/16] 0.0, 128
        %1013 = vxpose.xlu0.b32.end [16/16] 0.0, 128
        %v1014 = vpop.trf.xlu0
        %v1015 = vpop.trf.xlu0
        %v1016 = vpop.trf.xlu0
        %v1017 = vpop.trf.xlu0
        %v1018 = vpop.trf.xlu0
        %v1019 = vpop.trf.xlu0
        %v1020 = vpop.trf.xlu0
        %v1021 = vpop.trf.xlu0
        %v1022 = vpop.trf.xlu0
        %v1023 = vpop.trf.xlu0
        %v1024 = vpop.trf.xlu0
        %v1025 = vpop.trf.xlu0
        %v1026 = vpop.trf.xlu0
        %v1027 = vpop.trf.xlu0
        %v1028 = vpop.trf.xlu0
        %v1029 = vpop.trf.xlu0
        %v1030 = vpack.c.bf16 %v1014, %v1014
        %v1031 = vld [vmem:[%s5] sm:$0xf]
        %v1032 = vld [vmem:[%s5 + $0x4] sm:$0xf]
        %v1033 = vld [vmem:[%s5 + $0x8] sm:$0xf]
        %v1034 = vld [vmem:[%s5 + $0xc] sm:$0xf]
        %v1035 = vld [vmem:[%s6] sm:$0x1]
        %v1037 = vperm.slane %v1035, 0
        %v1043 = vunpack.c.l.b16 %v1031
        %v1044 = vunpack.c.l.b16 %v1032
        %v1045 = vunpack.c.l.b16 %v1033
        %v1046 = vunpack.c.l.b16 %v1034
        %v1047 = vpack.c.b16 %v1044, %v1043
        %v1048 = vpack.c.b16 %v1046, %v1045
        %v1052 = vsel %vm691, %v1030, 0
        %1054 = vmatpush.bf16.msra.mxu0 0
        %1055 = vmatpush.bf16.msra.mxu0 0
        %1056 = vmatpush.bf16.msra.mxu0 0
        %1057 = vmatpush.bf16.msra.mxu0 0
        %1058 = vmatpush.bf16.msra.mxu0 0
        %1059 = vmatpush.bf16.msra.mxu0 0
        %1060 = vmatpush.bf16.msra.mxu0 %v1048
        %1061 = vmatpush.bf16.msra.mxu0 %v1047
        %1062 = vmatmul.bf16.gmra.mxu0 %v1052
        %v1063 = vpop.f32.mrf.mxu0
        %v1064 = vadd.f32 %v1037, %v1063
        %v1065 = vpop.f32.mrf.mxu0
        %1066 = vdwg.mxu0
        %v1067 = vadd.f32 %v651, %v1064
        %v1068 = vsel %vm691, %v1067, 0.0
        %1069 = vadd.xlane.f32.xlu0 %v1068
        %v1070 = vpop.xlane.xlu0 %1069
        %v1071 = vrcp.pop 32.0
        %v1072 = vmul.f32 32.0, %v1071
        %v1073 = vsub.f32 1.0, %v1072
        %v1074 = vmul.f32 %v1071, %v1073
        %v1075 = vadd.f32 %v1071, %v1074
        %vm1076 = vweird.f32 %v1071
        %v1077 = vsel %vm1076, %v1071, %v1075
        %v1078 = vmul.f32 %v1070, %v1077
        %v1079 = vsub.f32 %v1067, %v1078
        %v1080 = vmul.f32 %v1079, %v1079
        %v1081 = vsel %vm691, %v1080, 0.0
        %1082 = vadd.xlane.f32.xlu0 %v1081
        %v1083 = vpop.xlane.xlu0 %1082
        %v1084 = vmul.f32 %v1083, %v1077
        %v1085 = vadd.f32 %v1084, 1e-05
        %v1086 = vrsqrt.pop %v1085
        %v1087 = vmul.f32 %v1086, %v1085
        %v1088 = vmul.f32 %v1087, %v1086
        %v1089 = vmul.f32 0.5, %v1088
        %v1090 = vsub.f32 1.5, %v1089
        %v1091 = vmul.f32 %v1086, %v1090
        %vm1092 = vweird.f32 %v1085
        %vm1093 = vweird.f32 %v1086
        %vm1094 = vmor %vm1092, %vm1093
        %v1095 = vsel %vm1094, %v1086, %v1091
        %v1096 = vmul.f32 %v1079, %v1095
        %v1097 = vld [vmem:[%s7] sm:$0x1]
        %v1099 = vperm.slane %v1097, 0
        %v1101 = vmul.f32 %v1096, %v1099
        %v1102 = vld [vmem:[%s8] sm:$0x1]
        %v1104 = vperm.slane %v1102, 0
        %v1106 = vadd.f32 %v1101, %v1104
        %v1107 = vpack.c.bf16 %v1106, %v1106
        %v1108 = vld [vmem:[%s9] sm:$0xf]
        %v1109 = vld [vmem:[%s9 + $0x4] sm:$0xf]
        %v1110 = vld [vmem:[%s9 + $0x8] sm:$0xf]
        %v1111 = vld [vmem:[%s9 + $0xc] sm:$0xf]
        %v1112 = vld [vmem:[%s10] sm:$0x1]
        %v1114 = vperm.slane %v1112, 0
        %v1120 = vunpack.c.l.b16 %v1108
        %v1121 = vunpack.c.l.b16 %v1109
        %v1122 = vunpack.c.l.b16 %v1110
        %v1123 = vunpack.c.l.b16 %v1111
        %v1124 = vpack.c.b16 %v1121, %v1120
        %v1125 = vpack.c.b16 %v1123, %v1122
        %v1129 = vsel %vm691, %v1107, 0
        %1131 = vmatpush.bf16.msra.mxu0 0
        %1132 = vmatpush.bf16.msra.mxu0 0
        %1133 = vmatpush.bf16.msra.mxu0 0
        %1134 = vmatpush.bf16.msra.mxu0 0
        %1135 = vmatpush.bf16.msra.mxu0 0
        %1136 = vmatpush.bf16.msra.mxu0 0
        %1137 = vmatpush.bf16.msra.mxu0 %v1125
        %1138 = vmatpush.bf16.msra.mxu0 %v1124
        %1139 = vmatmul.bf16.gmra.mxu0 %v1129
        %v1140 = vpop.f32.mrf.mxu0
        %v1141 = vadd.f32 %v1114, %v1140
        %v1142 = vpop.f32.mrf.mxu0
        %1143 = vdwg.mxu0
        %v1144 = vmul.f32 %v1141, 0.5
        %v1145 = vmul.f32 %v1141, 0.70710677
        %v1146 = vmul.f32 %v1145, %v1145
        %v1147 = vmin.f32 16.0, %v1146
        %v1148 = vmul.f32 %v1147, 2.1237322e-06
        %v1149 = vadd.f32 %v1148, 0.00028619796
        %v1150 = vmul.f32 %v1147, %v1149
        %v1151 = vadd.f32 %v1150, 0.0036580483
        %v1152 = vmul.f32 %v1147, %v1151
        %v1153 = vadd.f32 %v1152, 0.05243302
        %v1154 = vmul.f32 %v1147, %v1153
        %v1155 = vadd.f32 %v1154, 0.18741608
        %v1156 = vmul.f32 %v1147, %v1155
        %v1157 = vadd.f32 %v1156, 1.1283791
        %v1158 = vmul.f32 %v1145, %v1157
        %v1159 = vmul.f32 %v1147, 3.8918573e-05
        %v1160 = vadd.f32 %v1159, 0.001143296
        %v1161 = vmul.f32 %v1147, %v1160
        %v1162 = vadd.f32 %v1161, 0.014752088
        %v1163 = vmul.f32 %v1147, %v1162
        %v1164 = vadd.f32 %v1163, 0.112945676
        %v1165 = vmul.f32 %v1147, %v1164
        %v1166 = vadd.f32 %v1165, 0.4994258
        %v1167 = vmul.f32 %v1147, %v1166
        %v1168 = vadd.f32 %v1167, 1.0
        %v1169 = vrcp.pop %v1168
        %v1170 = vmul.f32 %v1168, %v1169
        %v1171 = vsub.f32 1.0, %v1170
        %v1172 = vmul.f32 %v1169, %v1171
        %v1173 = vadd.f32 %v1169, %v1172
        %vm1174 = vweird.f32 %v1168
        %vm1175 = vweird.f32 %v1169
        %vm1176 = vmor %vm1174, %vm1175
        %v1177 = vsel %vm1176, %v1169, %v1173
        %v1178 = vand.u32 2147483647, %v1168
        %vm1179 = vcmp.eq.f32.partialorder %v1178, 8.507059e+37
        %v1180 = vand.u32 %v1168, 2147483648
        %v1181 = vor.u32 1.1754944e-38, %v1180
        %v1182 = vsel %vm1179, %v1181, %v1177
        %v1183 = vmul.f32 %v1158, %v1182
        %v1184 = vmin.f32 %v1183, 1.0
        %v1185 = vmax.f32 %v1184, -1.0
        %v1186 = vadd.f32 %v1185, 1.0
        %v1187 = vmul.f32 %v1144, %v1186
        %v1188 = vpack.c.bf16 %v1187, %v1187
        %v1189 = vld [vmem:[%s11] sm:$0xf]
        %v1190 = vld [vmem:[%s11 + $0x4] sm:$0xf]
        %v1191 = vld [vmem:[%s11 + $0x8] sm:$0xf]
        %v1192 = vld [vmem:[%s11 + $0xc] sm:$0xf]
        %v1193 = vld [vmem:[%s11 + $0x10] sm:$0xf]
        %v1194 = vld [vmem:[%s11 + $0x14] sm:$0xf]
        %v1195 = vld [vmem:[%s11 + $0x18] sm:$0xf]
        %v1196 = vld [vmem:[%s11 + $0x1c] sm:$0xf]
        %v1197 = vld [vmem:[%s12] sm:$0x1]
        %v1199 = vperm.slane %v1197, 0
        %v1209 = vunpack.c.l.b16 %v1189
        %v1210 = vunpack.c.l.b16 %v1190
        %v1211 = vunpack.c.l.b16 %v1191
        %v1212 = vunpack.c.l.b16 %v1192
        %v1213 = vunpack.c.l.b16 %v1193
        %v1214 = vunpack.c.l.b16 %v1194
        %v1215 = vunpack.c.l.b16 %v1195
        %v1216 = vunpack.c.l.b16 %v1196
        %v1217 = vpack.c.b16 %v1210, %v1209
        %v1218 = vpack.c.b16 %v1212, %v1211
        %v1219 = vpack.c.b16 %v1214, %v1213
        %v1220 = vpack.c.b16 %v1216, %v1215
        %vm1225 = vcmask 523264
        %v1227 = vsel %vm1225, %v1188, 0
        %1229 = vmatpush.bf16.msra.mxu0 0
        %1230 = vmatpush.bf16.msra.mxu0 0
        %1231 = vmatpush.bf16.msra.mxu0 0
        %1232 = vmatpush.bf16.msra.mxu0 0
        %1233 = vmatpush.bf16.msra.mxu0 %v1220
        %1234 = vmatpush.bf16.msra.mxu0 %v1219
        %1235 = vmatpush.bf16.msra.mxu0 %v1218
        %1236 = vmatpush.bf16.msra.mxu0 %v1217
        %1237 = vmatmul.bf16.gmra.mxu0 %v1227
        %v1238 = vpop.f32.mrf.mxu0
        %v1239 = vadd.f32 %v1199, %v1238
        %v1240 = vpop.f32.mrf.mxu0
        %1241 = vdwg.mxu0
        %v1242 = vadd.f32 %v1106, %v1239
        %v1243 = vsel %vm691, %v1242, 0.0
        %1244 = vadd.xlane.f32.xlu0 %v1243
        %v1245 = vpop.xlane.xlu0 %1244
        %v1246 = vmul.f32 %v1245, %v1077
        %v1247 = vsub.f32 %v1242, %v1246
        %v1248 = vmul.f32 %v1247, %v1247
        %v1249 = vsel %vm691, %v1248, 0.0
        %1250 = vadd.xlane.f32.xlu0 %v1249
        %v1251 = vpop.xlane.xlu0 %1250
        %v1252 = vmul.f32 %v1251, %v1077
        %v1253 = vadd.f32 %v1252, 1e-05
        %v1254 = vrsqrt.pop %v1253
        %v1255 = vmul.f32 %v1254, %v1253
        %v1256 = vmul.f32 %v1255, %v1254
        %v1257 = vmul.f32 0.5, %v1256
        %v1258 = vsub.f32 1.5, %v1257
        %v1259 = vmul.f32 %v1254, %v1258
        %vm1260 = vweird.f32 %v1253
        %vm1261 = vweird.f32 %v1254
        %vm1262 = vmor %vm1260, %vm1261
        %v1263 = vsel %vm1262, %v1254, %v1259
        %v1264 = vmul.f32 %v1247, %v1263
        %v1265 = vld [vmem:[%s13] sm:$0x1]
        %v1267 = vperm.slane %v1265, 0
        %v1269 = vmul.f32 %v1264, %v1267
        %v1270 = vld [vmem:[%s14] sm:$0x1]
        %v1272 = vperm.slane %v1270, 0
        %v1274 = vadd.f32 %v1269, %v1272
        %1275 = vst.msk [vmem:[%s499] sm:$0xff] %vm691, %v1274
        %s1276 = sand.u32 %s371, 1
        %s1277 = scalar_lea.sflag [#allocation5], %s1276
        %s1278 = sand.u32 %s371, 1
        %s1279 = smul.addr %s1278, 8
        %s1280 = scalar_lea.vmem [#allocation4], %s1279
        // Predicated region
        $region85: #{tpu_custom_call.1} parent=79 // pred_check
          %p1281 = pneg %p381
        $region86: #{tpu_custom_call.1} parent=79 // pred_check_branch
          %1283 = sbr.rel (%p1281) target = $region88
        $region87: #{tpu_custom_call.1} parent=79 // pred_region
          %1285 = vsyncadd %s1277, 0
          %s1286 = sadd.s32 %s34, %s33
          %s1287 = smul.addr %s1286, 8
          %s1288 = scalar_lea.hbm %s15, %s1287
          %s1290 = sshll.u32 %s1280, 4
          %s1291 = int_to_ptr.vmem [resolvable:$true] %s1290
          %s1292 = sshll.u32 %s1288, 4
          %s1293 = int_to_ptr.hbm [resolvable:$true] %s1292
          %1295 = dma.vmem_to_hbm [thread:$0]  %s1291, 128, %s1293, %s1277
        $region88: #{tpu_custom_call.1} parent=79 // pred_fallthru
          _
      $region80: #{tpu_custom_call.1} parent=5 // pred_fallthru
        _
      %p1296 = scmp.le.s32.totalorder 2, %s24
      // Predicated region
      $region89: #{tpu_custom_call.1} parent=5 // pred_check
        %p1297 = pneg %p1296
      $region90: #{tpu_custom_call.1} parent=5 // pred_check_branch
        %1299 = sbr.rel (%p1297) target = $region92
      $region91: #{tpu_custom_call.1} parent=5 // pred_region
        %s1300 = ssub.s32 %s24, 2
        // Predicated region
        $region93: #{tpu_custom_call.1} parent=91 // pred_check
          %p1301 = pneg %p387
        $region94: #{tpu_custom_call.1} parent=91 // pred_check_branch
          %1303 = sbr.rel (%p1301) target = $region96
        $region95: #{tpu_custom_call.1} parent=91 // pred_region
          %s1304 = sand.u32 %s372, 1
          %s1305 = scalar_lea.sflag [#allocation5], %s1304
          %s1306 = sand.u32 %s372, 1
          %s1307 = smul.addr %s1306, 8
          %s1308 = scalar_lea.vmem [#allocation4], %s1307
          %1310 = dma.done %s1305, 128
        $region96: #{tpu_custom_call.1} parent=91 // pred_fallthru
          _
      $region92: #{tpu_custom_call.1} parent=5 // pred_fallthru
        _
    $region6: #{tpu_custom_call.1} parent=1 // loop_footer
      %s28 = sadd.s32 1, %s24
    $region7: #{tpu_custom_call.1} parent=1 // loop_footer_branch
      %23 = sbr.rel target = $region3
    $region8: #{tpu_custom_call.1} parent=1 // loop_exit
      _
    %1311 = vsyncpa [#allocation5], 1
    %s1312 = scalar_lea.sflag [#allocation5], 1
    %1313 = vsyncpa %s1312, 1

// kernel: tpu_custom_call.1
$region0: #{tpu_custom_call.1}
  #allocation0 [shape = 'u32[]', space=smem, size = 0x4, offset = 0x4, fixed_abs, tag = 'smem constant byte address 0x4 - core index']
  #allocation1 [shape = 'u32[72,128]{1,0:T(1,128)}', space=vmem, size = 0x9000, scoped, tag = 'internal scratch']
  #allocation2 [shape = 'bf16[4,8,8]{2,1,0:T(8,128)(2,1)}', space=vmem, size = 0x2000, scoped, tag = 'scratch operand']
  #allocation3 [shape = 'bf16[4,8,8]{2,1,0:T(8,128)(2,1)}', space=vmem, size = 0x2000, scoped, tag = 'scratch operand']
  %s0 = inlined_call_operand.vmem [shape: f32[2,8,32], index: 0, kind: input, shape index: {}]
  %s1 = inlined_call_operand.vmem [shape: bf16[32,32], index: 1, kind: input, shape index: {}]
  %s2 = inlined_call_operand.vmem [shape: f32[32,1], index: 2, kind: input, shape index: {}]
  %s3 = inlined_call_operand.vmem [shape: bf16[64,32], index: 3, kind: input, shape index: {}]
  %s4 = inlined_call_operand.vmem [shape: f32[64,1], index: 4, kind: input, shape index: {}]
  %s5 = inlined_call_operand.vmem [shape: bf16[32,32], index: 5, kind: input, shape index: {}]
  %s6 = inlined_call_operand.vmem [shape: f32[1,32], index: 6, kind: input, shape index: {}]
  %s7 = inlined_call_operand.vmem [shape: f32[1,32], index: 7, kind: input, shape index: {}]
  %s8 = inlined_call_operand.vmem [shape: f32[1,32], index: 8, kind: input, shape index: {}]
  %s9 = inlined_call_operand.vmem [shape: bf16[32,64], index: 9, kind: input, shape index: {}]
  %s10 = inlined_call_operand.vmem [shape: f32[1,64], index: 10, kind: input, shape index: {}]
  %s11 = inlined_call_operand.vmem [shape: bf16[64,32], index: 11, kind: input, shape index: {}]
  %s12 = inlined_call_operand.vmem [shape: f32[1,32], index: 12, kind: input, shape index: {}]
  %s13 = inlined_call_operand.vmem [shape: f32[1,32], index: 13, kind: input, shape index: {}]
  %s14 = inlined_call_operand.vmem [shape: f32[1,32], index: 14, kind: input, shape index: {}]
  %s15 = inlined_call_operand.hbm [shape: f32[2,8,32], index: 15, kind: output, shape index: {}]
  %s16 = sld [smem:[#allocation0]]
  $region97: #{tpu_custom_call.1} parent=0
    _
  %s18 = ssub.s32 1, %s16
  %s19 = scalar_select 0, %s18, %s16
  $region1: #{tpu_custom_call.1} parent=0
    #allocation4 [shape = 'u8[8192]{0}', space=vmem, size = 0x2000, scoped, tag = 'output window, operand 0']
    #allocation5 [shape = 's32[2]{0}', space=sflag, size = 0x8, scoped, tag = 'scoped memory for tpu_custom_call.1']
    %20 = vsyncpa [#allocation5], 0
    %s21 = scalar_lea.sflag [#allocation5], 1
    %22 = vsyncpa %s21, 0
    loop: start=0, step=1, limit=4
    $region2: #{tpu_custom_call.1} parent=1 // loop_pre_header
      _
    $region3: #{tpu_custom_call.1} parent=1 // loop_header
      %s24 = sphi 0, %s28
      %p25 = scmp.ge.s32.totalorder %s24, 4
      %s31 = sphi 0, %s43
      %s32 = sphi 0, %s39
      %s33 = sphi 0, %s31
      %s34 = sphi 0, %s32
      %s35 = sphi 0, %s33
      %s36 = sphi 0, %s34
      %s46 = sphi 0, %s48
      %s49 = sphi 0, %s46
      %s50 = sphi 0, %s49
      %s66 = sphi 0, %s50
      %s70 = sphi 0, %s70
      %s72 = sphi 0, %s70
      %s73 = sphi 0, %s72
      %s87 = sphi 0, %s73
      %s91 = sphi 0, %s91
      %s93 = sphi 0, %s91
      %s94 = sphi 0, %s93
      %s108 = sphi 0, %s94
      %s112 = sphi 0, %s112
      %s114 = sphi 0, %s112
      %s115 = sphi 0, %s114
      %s129 = sphi 0, %s115
      %s133 = sphi 0, %s133
      %s135 = sphi 0, %s133
      %s136 = sphi 0, %s135
      %s150 = sphi 0, %s136
      %s154 = sphi 0, %s154
      %s156 = sphi 0, %s154
      %s157 = sphi 0, %s156
      %s171 = sphi 0, %s157
      %s175 = sphi 0, %s175
      %s177 = sphi 0, %s175
      %s178 = sphi 0, %s177
      %s192 = sphi 0, %s178
      %s196 = sphi 0, %s196
      %s198 = sphi 0, %s196
      %s199 = sphi 0, %s198
      %s213 = sphi 0, %s199
      %s217 = sphi 0, %s217
      %s219 = sphi 0, %s217
      %s220 = sphi 0, %s219
      %s234 = sphi 0, %s220
      %s238 = sphi 0, %s238
      %s240 = sphi 0, %s238
      %s241 = sphi 0, %s240
      %s255 = sphi 0, %s241
      %s259 = sphi 0, %s259
      %s261 = sphi 0, %s259
      %s262 = sphi 0, %s261
      %s276 = sphi 0, %s262
      %s280 = sphi 0, %s280
      %s282 = sphi 0, %s280
      %s283 = sphi 0, %s282
      %s297 = sphi 0, %s283
      %s301 = sphi 0, %s301
      %s303 = sphi 0, %s301
      %s304 = sphi 0, %s303
      %s318 = sphi 0, %s304
      %s322 = sphi 0, %s322
      %s324 = sphi 0, %s322
      %s325 = sphi 0, %s324
      %s339 = sphi 0, %s325
      %s343 = sphi 0, %s343
      %s345 = sphi 0, %s343
      %s346 = sphi 0, %s345
      %s360 = sphi 0, %s346
      %s368 = sphi 0, %s370
      %s371 = sphi 0, %s368
      %s372 = sphi 0, %s371
      %s388 = sphi 0, %s372
    $region4: #{tpu_custom_call.1} parent=1 // loop_header_branch
      %27 = sbr.rel (%p25) target = $region8
    $region5: #{tpu_custom_call.1} parent=1 // loop_body
      %s29 = ssub.s32 %s24, 1
      %s30 = ssub.s32 %s24, 2
      %s37 = sadd.s32 1, %s32
      %p38 = scmp.ge.s32.totalorder %s37, 1
      %s39 = scalar_select %p38, 0, %s37
      %s40 = sadd.s32 1, %s31
      %s41 = scalar_select %p38, %s40, %s31
      %p42 = scmp.ge.s32.totalorder %s41, 2
      %s43 = scalar_select %p42, 0, %s41
      %s44 = ssub.s32 %s31, %s43
      %p45 = scmp.eq.s32.totalorder %s44, 0
      %s47 = sadd.s32 %s46, 1
      %s48 = scalar_select %p45, %s46, %s47
      %p51 = pneg %p45
      %p52 = scmp.eq.s32.totalorder %s24, 1
      %p53 = por %p51, %p52
      %p54 = scmp.ne.s32.totalorder %s46, %s49
      %p55 = scmp.eq.s32.totalorder %s24, 0
      %p56 = por %p54, %p55
      %p57 = scmp.ne.s32.totalorder %s46, %s49
      %p58 = scmp.eq.s32.totalorder %s29, 1
      %p59 = por %p57, %p58
      %p60 = scmp.ne.s32.totalorder %s49, %s50
      %p61 = scmp.eq.s32.totalorder %s29, 0
      %p62 = por %p60, %p61
      %p63 = scmp.ne.s32.totalorder %s49, %s50
      %p64 = scmp.eq.s32.totalorder %s30, 1
      %p65 = por %p63, %p64
      %p67 = scmp.ne.s32.totalorder %s50, %s66
      %p68 = scmp.eq.s32.totalorder %s30, 0
      %p69 = por %p67, %p68
      %s71 = sadd.s32 %s70, 1
      %p74 = scmp.eq.s32.totalorder %s24, 1
      %p75 = scmp.ne.s32.totalorder %s70, %s72
      %p76 = scmp.eq.s32.totalorder %s24, 0
      %p77 = por %p75, %p76
      %p78 = scmp.ne.s32.totalorder %s70, %s72
      %p79 = scmp.eq.s32.totalorder %s29, 1
      %p80 = por %p78, %p79
      %p81 = scmp.ne.s32.totalorder %s72, %s73
      %p82 = scmp.eq.s32.totalorder %s29, 0
      %p83 = por %p81, %p82
      %p84 = scmp.ne.s32.totalorder %s72, %s73
      %p85 = scmp.eq.s32.totalorder %s30, 1
      %p86 = por %p84, %p85
      %p88 = scmp.ne.s32.totalorder %s73, %s87
      %p89 = scmp.eq.s32.totalorder %s30, 0
      %p90 = por %p88, %p89
      %s92 = sadd.s32 %s91, 1
      %p95 = scmp.eq.s32.totalorder %s24, 1
      %p96 = scmp.ne.s32.totalorder %s91, %s93
      %p97 = scmp.eq.s32.totalorder %s24, 0
      %p98 = por %p96, %p97
      %p99 = scmp.ne.s32.totalorder %s91, %s93
      %p100 = scmp.eq.s32.totalorder %s29, 1
      %p101 = por %p99, %p100
      %p102 = scmp.ne.s32.totalorder %s93, %s94
      %p103 = scmp.eq.s32.totalorder %s29, 0
      %p104 = por %p102, %p103
      %p105 = scmp.ne.s32.totalorder %s93, %s94
      %p106 = scmp.eq.s32.totalorder %s30, 1
      %p107 = por %p105, %p106
      %p109 = scmp.ne.s32.totalorder %s94, %s108
      %p110 = scmp.eq.s32.totalorder %s30, 0
      %p111 = por %p109, %p110
      %s113 = sadd.s32 %s112, 1
      %p116 = scmp.eq.s32.totalorder %s24, 1
      %p117 = scmp.ne.s32.totalorder %s112, %s114
      %p118 = scmp.eq.s32.totalorder %s24, 0
      %p119 = por %p117, %p118
      %p120 = scmp.ne.s32.totalorder %s112, %s114
      %p121 = scmp.eq.s32.totalorder %s29, 1
      %p122 = por %p120, %p121
      %p123 = scmp.ne.s32.totalorder %s114, %s115
      %p124 = scmp.eq.s32.totalorder %s29, 0
      %p125 = por %p123, %p124
      %p126 = scmp.ne.s32.totalorder %s114, %s115
      %p127 = scmp.eq.s32.totalorder %s30, 1
      %p128 = por %p126, %p127
      %p130 = scmp.ne.s32.totalorder %s115, %s129
      %p131 = scmp.eq.s32.totalorder %s30, 0
      %p132 = por %p130, %p131
      %s134 = sadd.s32 %s133, 1
      %p137 = scmp.eq.s32.totalorder %s24, 1
      %p138 = scmp.ne.s32.totalorder %s133, %s135
      %p139 = scmp.eq.s32.totalorder %s24, 0
      %p140 = por %p138, %p139
      %p141 = scmp.ne.s32.totalorder %s133, %s135
      %p142 = scmp.eq.s32.totalorder %s29, 1
      %p143 = por %p141, %p142
      %p144 = scmp.ne.s32.totalorder %s135, %s136
      %p145 = scmp.eq.s32.totalorder %s29, 0
      %p146 = por %p144, %p145
      %p147 = scmp.ne.s32.totalorder %s135, %s136
      %p148 = scmp.eq.s32.totalorder %s30, 1
      %p149 = por %p147, %p148
      %p151 = scmp.ne.s32.totalorder %s136, %s150
      %p152 = scmp.eq.s32.totalorder %s30, 0
      %p153 = por %p151, %p152
      %s155 = sadd.s32 %s154, 1
      %p158 = scmp.eq.s32.totalorder %s24, 1
      %p159 = scmp.ne.s32.totalorder %s154, %s156
      %p160 = scmp.eq.s32.totalorder %s24, 0
      %p161 = por %p159, %p160
      %p162 = scmp.ne.s32.totalorder %s154, %s156
      %p163 = scmp.eq.s32.totalorder %s29, 1
      %p164 = por %p162, %p163
      %p165 = scmp.ne.s32.totalorder %s156, %s157
      %p166 = scmp.eq.s32.totalorder %s29, 0
      %p167 = por %p165, %p166
      %p168 = scmp.ne.s32.totalorder %s156, %s157
      %p169 = scmp.eq.s32.totalorder %s30, 1
      %p170 = por %p168, %p169
      %p172 = scmp.ne.s32.totalorder %s157, %s171
      %p173 = scmp.eq.s32.totalorder %s30, 0
      %p174 = por %p172, %p173
      %s176 = sadd.s32 %s175, 1
      %p179 = scmp.eq.s32.totalorder %s24, 1
      %p180 = scmp.ne.s32.totalorder %s175, %s177
      %p181 = scmp.eq.s32.totalorder %s24, 0
      %p182 = por %p180, %p181
      %p183 = scmp.ne.s32.totalorder %s175, %s177
      %p184 = scmp.eq.s32.totalorder %s29, 1
      %p185 = por %p183, %p184
      %p186 = scmp.ne.s32.totalorder %s177, %s178
      %p187 = scmp.eq.s32.totalorder %s29, 0
      %p188 = por %p186, %p187
      %p189 = scmp.ne.s32.totalorder %s177, %s178
      %p190 = scmp.eq.s32.totalorder %s30, 1
      %p191 = por %p189, %p190
      %p193 = scmp.ne.s32.totalorder %s178, %s192
      %p194 = scmp.eq.s32.totalorder %s30, 0
      %p195 = por %p193, %p194
      %s197 = sadd.s32 %s196, 1
      %p200 = scmp.eq.s32.totalorder %s24, 1
      %p201 = scmp.ne.s32.totalorder %s196, %s198
      %p202 = scmp.eq.s32.totalorder %s24, 0
      %p203 = por %p201, %p202
      %p204 = scmp.ne.s32.totalorder %s196, %s198
      %p205 = scmp.eq.s32.totalorder %s29, 1
      %p206 = por %p204, %p205
      %p207 = scmp.ne.s32.totalorder %s198, %s199
      %p208 = scmp.eq.s32.totalorder %s29, 0
      %p209 = por %p207, %p208
      %p210 = scmp.ne.s32.totalorder %s198, %s199
      %p211 = scmp.eq.s32.totalorder %s30, 1
      %p212 = por %p210, %p211
      %p214 = scmp.ne.s32.totalorder %s199, %s213
      %p215 = scmp.eq.s32.totalorder %s30, 0
      %p216 = por %p214, %p215
      %s218 = sadd.s32 %s217, 1
      %p221 = scmp.eq.s32.totalorder %s24, 1
      %p222 = scmp.ne.s32.totalorder %s217, %s219
      %p223 = scmp.eq.s32.totalorder %s24, 0
      %p224 = por %p222, %p223
      %p225 = scmp.ne.s32.totalorder %s217, %s219
      %p226 = scmp.eq.s32.totalorder %s29, 1
      %p227 = por %p225, %p226
      %p228 = scmp.ne.s32.totalorder %s219, %s220
      %p229 = scmp.eq.s32.totalorder %s29, 0
      %p230 = por %p228, %p229
      %p231 = scmp.ne.s32.totalorder %s219, %s220
      %p232 = scmp.eq.s32.totalorder %s30, 1
      %p233 = por %p231, %p232
      %p235 = scmp.ne.s32.totalorder %s220, %s234
      %p236 = scmp.eq.s32.totalorder %s30, 0
      %p237 = por %p235, %p236
      %s239 = sadd.s32 %s238, 1
      %p242 = scmp.eq.s32.totalorder %s24, 1
      %p243 = scmp.ne.s32.totalorder %s238, %s240
      %p244 = scmp.eq.s32.totalorder %s24, 0
      %p245 = por %p243, %p244
      %p246 = scmp.ne.s32.totalorder %s238, %s240
      %p247 = scmp.eq.s32.totalorder %s29, 1
      %p248 = por %p246, %p247
      %p249 = scmp.ne.s32.totalorder %s240, %s241
      %p250 = scmp.eq.s32.totalorder %s29, 0
      %p251 = por %p249, %p250
      %p252 = scmp.ne.s32.totalorder %s240, %s241
      %p253 = scmp.eq.s32.totalorder %s30, 1
      %p254 = por %p252, %p253
      %p256 = scmp.ne.s32.totalorder %s241, %s255
      %p257 = scmp.eq.s32.totalorder %s30, 0
      %p258 = por %p256, %p257
      %s260 = sadd.s32 %s259, 1
      %p263 = scmp.eq.s32.totalorder %s24, 1
      %p264 = scmp.ne.s32.totalorder %s259, %s261
      %p265 = scmp.eq.s32.totalorder %s24, 0
      %p266 = por %p264, %p265
      %p267 = scmp.ne.s32.totalorder %s259, %s261
      %p268 = scmp.eq.s32.totalorder %s29, 1
      %p269 = por %p267, %p268
      %p270 = scmp.ne.s32.totalorder %s261, %s262
      %p271 = scmp.eq.s32.totalorder %s29, 0
      %p272 = por %p270, %p271
      %p273 = scmp.ne.s32.totalorder %s261, %s262
      %p274 = scmp.eq.s32.totalorder %s30, 1
      %p275 = por %p273, %p274
      %p277 = scmp.ne.s32.totalorder %s262, %s276
      %p278 = scmp.eq.s32.totalorder %s30, 0
      %p279 = por %p277, %p278
      %s281 = sadd.s32 %s280, 1
      %p284 = scmp.eq.s32.totalorder %s24, 1
      %p285 = scmp.ne.s32.totalorder %s280, %s282
      %p286 = scmp.eq.s32.totalorder %s24, 0
      %p287 = por %p285, %p286
      %p288 = scmp.ne.s32.totalorder %s280, %s282
      %p289 = scmp.eq.s32.totalorder %s29, 1
      %p290 = por %p288, %p289
      %p291 = scmp.ne.s32.totalorder %s282, %s283
      %p292 = scmp.eq.s32.totalorder %s29, 0
      %p293 = por %p291, %p292
      %p294 = scmp.ne.s32.totalorder %s282, %s283
      %p295 = scmp.eq.s32.totalorder %s30, 1
      %p296 = por %p294, %p295
      %p298 = scmp.ne.s32.totalorder %s283, %s297
      %p299 = scmp.eq.s32.totalorder %s30, 0
      %p300 = por %p298, %p299
      %s302 = sadd.s32 %s301, 1
      %p305 = scmp.eq.s32.totalorder %s24, 1
      %p306 = scmp.ne.s32.totalorder %s301, %s303
      %p307 = scmp.eq.s32.totalorder %s24, 0
      %p308 = por %p306, %p307
      %p309 = scmp.ne.s32.totalorder %s301, %s303
      %p310 = scmp.eq.s32.totalorder %s29, 1
      %p311 = por %p309, %p310
      %p312 = scmp.ne.s32.totalorder %s303, %s304
      %p313 = scmp.eq.s32.totalorder %s29, 0
      %p314 = por %p312, %p313
      %p315 = scmp.ne.s32.totalorder %s303, %s304
      %p316 = scmp.eq.s32.totalorder %s30, 1
      %p317 = por %p315, %p316
      %p319 = scmp.ne.s32.totalorder %s304, %s318
      %p320 = scmp.eq.s32.totalorder %s30, 0
      %p321 = por %p319, %p320
      %s323 = sadd.s32 %s322, 1
      %p326 = scmp.eq.s32.totalorder %s24, 1
      %p327 = scmp.ne.s32.totalorder %s322, %s324
      %p328 = scmp.eq.s32.totalorder %s24, 0
      %p329 = por %p327, %p328
      %p330 = scmp.ne.s32.totalorder %s322, %s324
      %p331 = scmp.eq.s32.totalorder %s29, 1
      %p332 = por %p330, %p331
      %p333 = scmp.ne.s32.totalorder %s324, %s325
      %p334 = scmp.eq.s32.totalorder %s29, 0
      %p335 = por %p333, %p334
      %p336 = scmp.ne.s32.totalorder %s324, %s325
      %p337 = scmp.eq.s32.totalorder %s30, 1
      %p338 = por %p336, %p337
      %p340 = scmp.ne.s32.totalorder %s325, %s339
      %p341 = scmp.eq.s32.totalorder %s30, 0
      %p342 = por %p340, %p341
      %s344 = sadd.s32 %s343, 1
      %p347 = scmp.eq.s32.totalorder %s24, 1
      %p348 = scmp.ne.s32.totalorder %s343, %s345
      %p349 = scmp.eq.s32.totalorder %s24, 0
      %p350 = por %p348, %p349
      %p351 = scmp.ne.s32.totalorder %s343, %s345
      %p352 = scmp.eq.s32.totalorder %s29, 1
      %p353 = por %p351, %p352
      %p354 = scmp.ne.s32.totalorder %s345, %s346
      %p355 = scmp.eq.s32.totalorder %s29, 0
      %p356 = por %p354, %p355
      %p357 = scmp.ne.s32.totalorder %s345, %s346
      %p358 = scmp.eq.s32.totalorder %s30, 1
      %p359 = por %p357, %p358
      %p361 = scmp.ne.s32.totalorder %s346, %s360
      %p362 = scmp.eq.s32.totalorder %s30, 0
      %p363 = por %p361, %p362
      %s364 = ssub.s32 %s31, %s43
      %s365 = ssub.s32 %s32, %s39
      %s366 = sor.u32 %s364, %s365
      %p367 = scmp.eq.s32.totalorder %s366, 0
      %s369 = sadd.s32 %s368, 1
      %s370 = scalar_select %p367, %s368, %s369
      %p373 = pneg %p367
      %p374 = scmp.eq.s32.totalorder %s24, 1
      %p375 = por %p373, %p374
      %p376 = scmp.ne.s32.totalorder %s368, %s371
      %p377 = scmp.eq.s32.totalorder %s24, 0
      %p378 = por %p376, %p377
      %p379 = scmp.ne.s32.totalorder %s368, %s371
      %p380 = scmp.eq.s32.totalorder %s29, 1
      %p381 = por %p379, %p380
      %p382 = scmp.ne.s32.totalorder %s371, %s372
      %p383 = scmp.eq.s32.totalorder %s29, 0
      %p384 = por %p382, %p383
      %p385 = scmp.ne.s32.totalorder %s371, %s372
      %p386 = scmp.eq.s32.totalorder %s30, 1
      %p387 = por %p385, %p386
      %p389 = scmp.ne.s32.totalorder %s372, %s388
      %p390 = scmp.eq.s32.totalorder %s30, 0
      %p391 = por %p389, %p390
      %p392 = scmp.le.s32.totalorder 1, %s24
      %p393 = scmp.lt.s32.totalorder %s24, 3
      %p394 = pnand %p392, %p393
      %p395 = pneg %p394
      // Predicated region
      $region9: #{tpu_custom_call.1} parent=5 // pred_check
        _
      $region10: #{tpu_custom_call.1} parent=5 // pred_check_branch
        %397 = sbr.rel (%p394) target = $region12
      $region11: #{tpu_custom_call.1} parent=5 // pred_region
        %s398 = ssub.s32 %s24, 1
        // Predicated region
        $region13: #{tpu_custom_call.1} parent=11 // pred_check
          %p399 = pneg %p83
        $region14: #{tpu_custom_call.1} parent=11 // pred_check_branch
          %401 = sbr.rel (%p399) target = $region16
        $region15: #{tpu_custom_call.1} parent=11 // pred_region
          _
        $region16: #{tpu_custom_call.1} parent=11 // pred_fallthru
          _
        // Predicated region
        $region17: #{tpu_custom_call.1} parent=11 // pred_check
          %p402 = pneg %p104
        $region18: #{tpu_custom_call.1} parent=11 // pred_check_branch
          %404 = sbr.rel (%p402) target = $region20
        $region19: #{tpu_custom_call.1} parent=11 // pred_region
          _
        $region20: #{tpu_custom_call.1} parent=11 // pred_fallthru
          _
        // Predicated region
        $region21: #{tpu_custom_call.1} parent=11 // pred_check
          %p405 = pneg %p125
        $region22: #{tpu_custom_call.1} parent=11 // pred_check_branch
          %407 = sbr.rel (%p405) target = $region24
        $region23: #{tpu_custom_call.1} parent=11 // pred_region
          _
        $region24: #{tpu_custom_call.1} parent=11 // pred_fallthru
          _
        // Predicated region
        $region25: #{tpu_custom_call.1} parent=11 // pred_check
          %p408 = pneg %p146
        $region26: #{tpu_custom_call.1} parent=11 // pred_check_branch
          %410 = sbr.rel (%p408) target = $region28
        $region27: #{tpu_custom_call.1} parent=11 // pred_region
          _
        $region28: #{tpu_custom_call.1} parent=11 // pred_fallthru
          _
        // Predicated region
        $region29: #{tpu_custom_call.1} parent=11 // pred_check
          %p411 = pneg %p167
        $region30: #{tpu_custom_call.1} parent=11 // pred_check_branch
          %413 = sbr.rel (%p411) target = $region32
        $region31: #{tpu_custom_call.1} parent=11 // pred_region
          _
        $region32: #{tpu_custom_call.1} parent=11 // pred_fallthru
          _
        // Predicated region
        $region33: #{tpu_custom_call.1} parent=11 // pred_check
          %p414 = pneg %p188
        $region34: #{tpu_custom_call.1} parent=11 // pred_check_branch
          %416 = sbr.rel (%p414) target = $region36
        $region35: #{tpu_custom_call.1} parent=11 // pred_region
          _
        $region36: #{tpu_custom_call.1} parent=11 // pred_fallthru
          _
        // Predicated region
        $region37: #{tpu_custom_call.1} parent=11 // pred_check
          %p417 = pneg %p209
        $region38: #{tpu_custom_call.1} parent=11 // pred_check_branch
          %419 = sbr.rel (%p417) target = $region40
        $region39: #{tpu_custom_call.1} parent=11 // pred_region
          _
        $region40: #{tpu_custom_call.1} parent=11 // pred_fallthru
          _
        // Predicated region
        $region41: #{tpu_custom_call.1} parent=11 // pred_check
          %p420 = pneg %p230
        $region42: #{tpu_custom_call.1} parent=11 // pred_check_branch
          %422 = sbr.rel (%p420) target = $region44
        $region43: #{tpu_custom_call.1} parent=11 // pred_region
          _
        $region44: #{tpu_custom_call.1} parent=11 // pred_fallthru
          _
        // Predicated region
        $region45: #{tpu_custom_call.1} parent=11 // pred_check
          %p423 = pneg %p251
        $region46: #{tpu_custom_call.1} parent=11 // pred_check_branch
          %425 = sbr.rel (%p423) target = $region48
        $region47: #{tpu_custom_call.1} parent=11 // pred_region
          _
        $region48: #{tpu_custom_call.1} parent=11 // pred_fallthru
          _
        // Predicated region
        $region49: #{tpu_custom_call.1} parent=11 // pred_check
          %p426 = pneg %p272
        $region50: #{tpu_custom_call.1} parent=11 // pred_check_branch
          %428 = sbr.rel (%p426) target = $region52
        $region51: #{tpu_custom_call.1} parent=11 // pred_region
          _
        $region52: #{tpu_custom_call.1} parent=11 // pred_fallthru
          _
        // Predicated region
        $region53: #{tpu_custom_call.1} parent=11 // pred_check
          %p429 = pneg %p293
        $region54: #{tpu_custom_call.1} parent=11 // pred_check_branch
          %431 = sbr.rel (%p429) target = $region56
        $region55: #{tpu_custom_call.1} parent=11 // pred_region
          _
        $region56: #{tpu_custom_call.1} parent=11 // pred_fallthru
          _
        // Predicated region
        $region57: #{tpu_custom_call.1} parent=11 // pred_check
          %p432 = pneg %p314
        $region58: #{tpu_custom_call.1} parent=11 // pred_check_branch
          %434 = sbr.rel (%p432) target = $region60
        $region59: #{tpu_custom_call.1} parent=11 // pred_region
          _
        $region60: #{tpu_custom_call.1} parent=11 // pred_fallthru
          _
        // Predicated region
        $region61: #{tpu_custom_call.1} parent=11 // pred_check
          %p435 = pneg %p335
        $region62: #{tpu_custom_call.1} parent=11 // pred_check_branch
          %437 = sbr.rel (%p435) target = $region64
        $region63: #{tpu_custom_call.1} parent=11 // pred_region
          _
        $region64: #{tpu_custom_call.1} parent=11 // pred_fallthru
          _
        // Predicated region
        $region65: #{tpu_custom_call.1} parent=11 // pred_check
          %p438 = pneg %p356
        $region66: #{tpu_custom_call.1} parent=11 // pred_check_branch
          %440 = sbr.rel (%p438) target = $region68
        $region67: #{tpu_custom_call.1} parent=11 // pred_region
          _
        $region68: #{tpu_custom_call.1} parent=11 // pred_fallthru
          _
      $region12: #{tpu_custom_call.1} parent=5 // pred_fallthru
        _
      %p441 = scmp.lt.s32.totalorder %s24, 2
      // Predicated region
      $region69: #{tpu_custom_call.1} parent=5 // pred_check
        %p442 = pneg %p441
      $region70: #{tpu_custom_call.1} parent=5 // pred_check_branch
        %444 = sbr.rel (%p442) target = $region72
      $region71: #{tpu_custom_call.1} parent=5 // pred_region
        // Predicated region
        $region73: #{tpu_custom_call.1} parent=71 // pred_check
          %p445 = pneg %p56
        $region74: #{tpu_custom_call.1} parent=71 // pred_check_branch
          %447 = sbr.rel (%p445) target = $region76
        $region75: #{tpu_custom_call.1} parent=71 // pred_region
          %p448 = scmp.lt.s32.totalorder %s31, 1
          %s449 = scalar_select %p448, %s31, 1
          %s450 = smul.addr %s449, 8
          %s451 = scalar_lea.vmem %s0, %s450
        $region76: #{tpu_custom_call.1} parent=71 // pred_fallthru
          _
      $region72: #{tpu_custom_call.1} parent=5 // pred_fallthru
        _
      %p452 = scmp.le.s32.totalorder 1, %s24
      %p453 = scmp.lt.s32.totalorder %s24, 3
      %p454 = pnand %p452, %p453
      %p455 = pneg %p454
      // Predicated region
      $region77: #{tpu_custom_call.1} parent=5 // pred_check
        _
      $region78: #{tpu_custom_call.1} parent=5 // pred_check_branch
        %457 = sbr.rel (%p454) target = $region80
      $region79: #{tpu_custom_call.1} parent=5 // pred_region
        %s458 = ssub.s32 %s24, 1
        %p459 = scmp.lt.s32.totalorder %s33, 1
        %s460 = scalar_select %p459, %s33, 1
        %s461 = smul.addr %s460, 8
        %s462 = scalar_lea.vmem %s0, %s461
        %p463 = pneg %p62
        %p464 = pneg %p59
        %p465 = pneg %p83
        %p466 = pneg %p80
        %p467 = pneg %p104
        %p468 = pneg %p101
        %p469 = pneg %p125
        %p470 = pneg %p122
        %p471 = pneg %p146
        %p472 = pneg %p143
        %p473 = pneg %p167
        %p474 = pneg %p164
        %p475 = pneg %p188
        %p476 = pneg %p185
        %p477 = pneg %p209
        %p478 = pneg %p206
        %p479 = pneg %p230
        %p480 = pneg %p227
        %p481 = pneg %p251
        %p482 = pneg %p248
        %p483 = pneg %p272
        %p484 = pneg %p269
        %p485 = pneg %p293
        %p486 = pneg %p290
        %p487 = pneg %p314
        %p488 = pneg %p311
        %p489 = pneg %p335
        %p490 = pneg %p332
        %p491 = pneg %p356
        %p492 = pneg %p353
        %p493 = pneg %p384
        %p494 = pneg %p381
        %s495 = sand.u32 %s371, 1
        %s496 = scalar_lea.sflag [#allocation5], %s495
        %s497 = sand.u32 %s371, 1
        %s498 = smul.addr %s497, 8
        %s499 = scalar_lea.vmem [#allocation4], %s498
        %p500 = scmp.lt.s32.totalorder %s33, 1
        %s501 = scalar_select %p500, %s33, 1
        %s502 = smul.addr %s501, 8
        %s503 = scalar_lea.vmem %s0, %s502
        %p505 = scmp.eq.s32.totalorder %s34, 0
        // Predicated region
        $region81: #{tpu_custom_call.1} parent=79 // pred_check
          %p506 = pneg %p505
        $region82: #{tpu_custom_call.1} parent=79 // pred_check_branch
          %508 = sbr.rel (%p506) target = $region84
        $region83: #{tpu_custom_call.1} parent=79 // pred_region
          %v509 = vld [vmem:[%s503] sm:$0xff]
          %v510 = vpack.c.bf16 %v509, %v509
          %v511 = vld [vmem:[%s3] sm:$0xf]
          %v512 = vld [vmem:[%s3 + $0x4] sm:$0xf]
          %v513 = vld [vmem:[%s3 + $0x8] sm:$0xf]
          %v514 = vld [vmem:[%s3 + $0xc] sm:$0xf]
          %v515 = vld [vmem:[%s3 + $0x10] sm:$0xf]
          %v516 = vld [vmem:[%s3 + $0x14] sm:$0xf]
          %v517 = vld [vmem:[%s3 + $0x18] sm:$0xf]
          %v518 = vld [vmem:[%s3 + $0x1c] sm:$0xf]
          %v519 = vld [vmem:[%s4] sm:$0xff]
          %v520 = vld [vmem:[%s4 + $0x8] sm:$0xff]
          %v521 = vld [vmem:[%s4 + $0x10] sm:$0xff]
          %v522 = vld [vmem:[%s4 + $0x18] sm:$0xff]
          %v523 = vld [vmem:[%s4 + $0x20] sm:$0xff]
          %v524 = vld [vmem:[%s4 + $0x28] sm:$0xff]
          %v525 = vld [vmem:[%s4 + $0x30] sm:$0xff]
          %v526 = vld [vmem:[%s4 + $0x38] sm:$0xff]
          %528 = vset.pattern.permute.xlu0 0
          %529 = vperm.xlu0 %528, %v519
          %v530 = vpop.permute.xlu0 %529
          %533 = vset.pattern.permute.xlu0 0
          %534 = vperm.xlu0 %533, %v520
          %v535 = vpop.permute.xlu0 %534
          %538 = vset.pattern.permute.xlu0 0
          %539 = vperm.xlu0 %538, %v521
          %v540 = vpop.permute.xlu0 %539
          %543 = vset.pattern.permute.xlu0 0
          %544 = vperm.xlu0 %543, %v522
          %v545 = vpop.permute.xlu0 %544
          %548 = vset.pattern.permute.xlu0 0
          %549 = vperm.xlu0 %548, %v523
          %v550 = vpop.permute.xlu0 %549
          %553 = vset.pattern.permute.xlu0 0
          %554 = vperm.xlu0 %553, %v524
          %v555 = vpop.permute.xlu0 %554
          %558 = vset.pattern.permute.xlu0 0
          %559 = vperm.xlu0 %558, %v525
          %v560 = vpop.permute.xlu0 %559
          %563 = vset.pattern.permute.xlu0 0
          %564 = vperm.xlu0 %563, %v526
          %v565 = vpop.permute.xlu0 %564
          %v575 = vunpack.c.l.b16 %v511
          %v576 = vunpack.c.l.b16 %v512
          %v577 = vunpack.c.l.b16 %v513
          %v578 = vunpack.c.l.b16 %v514
          %v579 = vunpack.c.l.b16 %v515
          %v580 = vunpack.c.l.b16 %v516
          %v581 = vunpack.c.l.b16 %v517
          %v582 = vunpack.c.l.b16 %v518
          %v583 = vpack.c.b16 %v576, %v575
          %v584 = vpack.c.b16 %v578, %v577
          %v585 = vpack.c.b16 %v580, %v579
          %v586 = vpack.c.b16 %v582, %v581
          %vm587 = vcmask 261120
          %v589 = vsel %vm587, %v583, 0
          %v592 = vsel %vm587, %v584, 0
          %v595 = vsel %vm587, %v585, 0
          %v598 = vsel %vm587, %v586, 0
          %v601 = vsel %vm587, %v510, 0
          %603 = vmatpush.bf16.xpose.msra.mxu0 0
          %604 = vmatpush.bf16.xpose.msra.mxu0 0
          %605 = vmatpush.bf16.xpose.msra.mxu0 0
          %606 = vmatpush.bf16.xpose.msra.mxu0 0
          %607 = vmatpush.bf16.xpose.msra.mxu0 0
          %608 = vmatpush.bf16.xpose.msra.mxu0 0
          %609 = vmatpush.bf16.xpose.msra.mxu0 0
          %610 = vmatpush.bf16.xpose.msra.mxu0 %v601
          %611 = vmatmul.bf16.gmra.mxu0 %v589
          %v612 = vpop.f32.mrf.mxu0
          %v613 = vadd.f32 %v530, %v612
          %v614 = vpop.f32.mrf.mxu0
          %v615 = vadd.f32 %v535, %v614
          %616 = vmatmul.bf16.gmra.mxu0 %v592
          %v617 = vpop.f32.mrf.mxu0
          %v618 = vadd.f32 %v540, %v617
          %v619 = vpop.f32.mrf.mxu0
          %v620 = vadd.f32 %v545, %v619
          %621 = vmatmul.bf16.gmra.mxu0 %v595
          %v622 = vpop.f32.mrf.mxu0
          %v623 = vadd.f32 %v550, %v622
          %v624 = vpop.f32.mrf.mxu0
          %v625 = vadd.f32 %v555, %v624
          %626 = vmatmul.bf16.gmra.mxu0 %v598
          %v627 = vpop.f32.mrf.mxu0
          %v628 = vadd.f32 %v560, %v627
          %v629 = vpop.f32.mrf.mxu0
          %v630 = vadd.f32 %v565, %v629
          %631 = vdwg.mxu0
          %v632 = vpack.c.bf16 %v613, %v613
          %v633 = vpack.c.bf16 %v615, %v615
          %v634 = vpack.c.bf16 %v618, %v618
          %v635 = vpack.c.bf16 %v620, %v620
          %vm636 = vcmask 60416
          %637 = vst.msk [vmem:[#allocation2] sm:$0xf] %vm636, %v632
          %638 = vst.msk [vmem:[#allocation2 + $0x4] sm:$0xf] %vm636, %v633
          %639 = vst.msk [vmem:[#allocation2 + $0x8] sm:$0xf] %vm636, %v634
          %640 = vst.msk [vmem:[#allocation2 + $0xc] sm:$0xf] %vm636, %v635
          %v641 = vpack.c.bf16 %v623, %v623
          %v642 = vpack.c.bf16 %v625, %v625
          %v643 = vpack.c.bf16 %v628, %v628
          %v644 = vpack.c.bf16 %v630, %v630
          %645 = vst.msk [vmem:[#allocation3] sm:$0xf] %vm636, %v641
          %646 = vst.msk [vmem:[#allocation3 + $0x4] sm:$0xf] %vm636, %v642
          %647 = vst.msk [vmem:[#allocation3 + $0x8] sm:$0xf] %vm636, %v643
          %648 = vst.msk [vmem:[#allocation3 + $0xc] sm:$0xf] %vm636, %v644
        $region84: #{tpu_custom_call.1} parent=79 // pred_fallthru
          _
        %s649 = smul.u32 %s34, 8
        %s650 = scalar_lea.vmem %s503, %s649
        %v651 = vld [vmem:[%s650] sm:$0xff]
        %v652 = vld [vmem:[%s1] sm:$0xf]
        %v653 = vld [vmem:[%s1 + $0x4] sm:$0xf]
        %v654 = vld [vmem:[%s1 + $0x8] sm:$0xf]
        %v655 = vld [vmem:[%s1 + $0xc] sm:$0xf]
        %v656 = vpack.c.bf16 %v651, %v651
        %v657 = vld [vmem:[%s2] sm:$0xff]
        %v658 = vld [vmem:[%s2 + $0x8] sm:$0xff]
        %v659 = vld [vmem:[%s2 + $0x10] sm:$0xff]
        %v660 = vld [vmem:[%s2 + $0x18] sm:$0xff]
        %662 = vset.pattern.permute.xlu0 0
        %663 = vperm.xlu0 %662, %v657
        %v664 = vpop.permute.xlu0 %663
        %667 = vset.pattern.permute.xlu0 0
        %668 = vperm.xlu0 %667, %v658
        %v669 = vpop.permute.xlu0 %668
        %672 = vset.pattern.permute.xlu0 0
        %673 = vperm.xlu0 %672, %v659
        %v674 = vpop.permute.xlu0 %673
        %677 = vset.pattern.permute.xlu0 0
        %678 = vperm.xlu0 %677, %v660
        %v679 = vpop.permute.xlu0 %678
        %v685 = vunpack.c.l.b16 %v652
        %v686 = vunpack.c.l.b16 %v653
        %v687 = vunpack.c.l.b16 %v654
        %v688 = vunpack.c.l.b16 %v655
        %v689 = vpack.c.b16 %v686, %v685
        %v690 = vpack.c.b16 %v688, %v687
        %vm691 = vcmask 261120
        %v693 = vsel %vm691, %v689, 0
        %v696 = vsel %vm691, %v690, 0
        %v699 = vsel %vm691, %v656, 0
        %701 = vmatpush.bf16.xpose.msra.mxu0 0
        %702 = vmatpush.bf16.xpose.msra.mxu0 0
        %703 = vmatpush.bf16.xpose.msra.mxu0 0
        %704 = vmatpush.bf16.xpose.msra.mxu0 0
        %705 = vmatpush.bf16.xpose.msra.mxu0 0
        %706 = vmatpush.bf16.xpose.msra.mxu0 0
        %707 = vmatpush.bf16.xpose.msra.mxu0 0
        %708 = vmatpush.bf16.xpose.msra.mxu0 %v699
        %709 = vmatmul.bf16.gmra.mxu0 %v693
        %v710 = vpop.f32.mrf.mxu0
        %v711 = vadd.f32 %v664, %v710
        %v712 = vpop.f32.mrf.mxu0
        %v713 = vadd.f32 %v669, %v712
        %714 = vmatmul.bf16.gmra.mxu0 %v696
        %v715 = vpop.f32.mrf.mxu0
        %v716 = vadd.f32 %v674, %v715
        %v717 = vpop.f32.mrf.mxu0
        %v718 = vadd.f32 %v679, %v717
        %719 = vdwg.mxu0
        %v720 = vpack.c.bf16 %v711, %v711
        %v721 = vpack.c.bf16 %v713, %v713
        %v722 = vpack.c.bf16 %v716, %v716
        %v723 = vpack.c.bf16 %v718, %v718
        %v724 = vld [vmem:[#allocation2] sm:$0xf]
        %v725 = vld [vmem:[#allocation2 + $0x4] sm:$0xf]
        %v726 = vld [vmem:[#allocation2 + $0x8] sm:$0xf]
        %v727 = vld [vmem:[#allocation2 + $0xc] sm:$0xf]
        %728 = vxpose.xlu0.c.b16.start [1/8] %v720, 128
        %729 = vxpose.xlu0.c.b16.cont [2/8] 0, 128
        %730 = vxpose.xlu0.c.b16.cont [3/8] 0, 128
        %731 = vxpose.xlu0.c.b16.cont [4/8] 0, 128
        %732 = vxpose.xlu0.c.b16.cont [5/8] 0, 128
        %733 = vxpose.xlu0.c.b16.cont [6/8] 0, 128
        %734 = vxpose.xlu0.c.b16.cont [7/8] 0, 128
        %735 = vxpose.xlu0.c.b16.end [8/8] 0, 128
        %v736 = vpop.trf.xlu0
        %v737 = vpop.trf.xlu0
        %v738 = vpop.trf.xlu0
        %v739 = vpop.trf.xlu0
        %v740 = vpop.trf.xlu0
        %v741 = vpop.trf.xlu0
        %v742 = vpop.trf.xlu0
        %v743 = vpop.trf.xlu0
        %vm744 = vcmask 64512
        %v746 = vsel %vm744, %v736, 0
        %vm748 = vcmask 1043456
        %v750 = vsel %vm748, %v724, 0
        %752 = vmatpush.bf16.msra.mxu0 0
        %753 = vmatpush.bf16.msra.mxu0 0
        %754 = vmatpush.bf16.msra.mxu0 0
        %755 = vmatpush.bf16.msra.mxu0 0
        %756 = vmatpush.bf16.msra.mxu0 0
        %757 = vmatpush.bf16.msra.mxu0 0
        %758 = vmatpush.bf16.msra.mxu0 0
        %759 = vmatpush.bf16.msra.mxu0 %v750
        %760 = vmatmul.bf16.gmra.mxu0 %v746
        %v761 = vpop.f32.mrf.mxu0
        %v762 = vadd.f32 0.0, %v761
        %v763 = vpop.f32.mrf.mxu0
        %764 = vdwg.mxu0
        %765 = vxpose.xlu0.c.b16.start [1/8] %v721, 128
        %766 = vxpose.xlu0.c.b16.cont [2/8] 0, 128
        %767 = vxpose.xlu0.c.b16.cont [3/8] 0, 128
        %768 = vxpose.xlu0.c.b16.cont [4/8] 0, 128
        %769 = vxpose.xlu0.c.b16.cont [5/8] 0, 128
        %770 = vxpose.xlu0.c.b16.cont [6/8] 0, 128
        %771 = vxpose.xlu0.c.b16.cont [7/8] 0, 128
        %772 = vxpose.xlu0.c.b16.end [8/8] 0, 128
        %v773 = vpop.trf.xlu0
        %v774 = vpop.trf.xlu0
        %v775 = vpop.trf.xlu0
        %v776 = vpop.trf.xlu0
        %v777 = vpop.trf.xlu0
        %v778 = vpop.trf.xlu0
        %v779 = vpop.trf.xlu0
        %v780 = vpop.trf.xlu0
        %v782 = vsel %vm744, %v773, 0
        %v785 = vsel %vm748, %v725, 0
        %787 = vmatpush.bf16.msra.mxu0 0
        %788 = vmatpush.bf16.msra.mxu0 0
        %789 = vmatpush.bf16.msra.mxu0 0
        %790 = vmatpush.bf16.msra.mxu0 0
        %791 = vmatpush.bf16.msra.mxu0 0
        %792 = vmatpush.bf16.msra.mxu0 0
        %793 = vmatpush.bf16.msra.mxu0 0
        %794 = vmatpush.bf16.msra.mxu0 %v785
        %795 = vmatmul.bf16.gmra.mxu0 %v782
        %v796 = vpop.f32.mrf.mxu0
        %v797 = vadd.f32 0.0, %v796
        %v798 = vpop.f32.mrf.mxu0
        %799 = vdwg.mxu0
        %800 = vxpose.xlu0.c.b16.start [1/8] %v722, 128
        %801 = vxpose.xlu0.c.b16.cont [2/8] 0, 128
        %802 = vxpose.xlu0.c.b16.cont [3/8] 0, 128
        %803 = vxpose.xlu0.c.b16.cont [4/8] 0, 128
        %804 = vxpose.xlu0.c.b16.cont [5/8] 0, 128
        %805 = vxpose.xlu0.c.b16.cont [6/8] 0, 128
        %806 = vxpose.xlu0.c.b16.cont [7/8] 0, 128
        %807 = vxpose.xlu0.c.b16.end [8/8] 0, 128
        %v808 = vpop.trf.xlu0
        %v809 = vpop.trf.xlu0
        %v810 = vpop.trf.xlu0
        %v811 = vpop.trf.xlu0
        %v812 = vpop.trf.xlu0
        %v813 = vpop.trf.xlu0
        %v814 = vpop.trf.xlu0
        %v815 = vpop.trf.xlu0
        %v817 = vsel %vm744, %v808, 0
        %v820 = vsel %vm748, %v726, 0
        %822 = vmatpush.bf16.msra.mxu0 0
        %823 = vmatpush.bf16.msra.mxu0 0
        %824 = vmatpush.bf16.msra.mxu0 0
        %825 = vmatpush.bf16.msra.mxu0 0
        %826 = vmatpush.bf16.msra.mxu0 0
        %827 = vmatpush.bf16.msra.mxu0 0
        %828 = vmatpush.bf16.msra.mxu0 0
        %829 = vmatpush.bf16.msra.mxu0 %v820
        %830 = vmatmul.bf16.gmra.mxu0 %v817
        %v831 = vpop.f32.mrf.mxu0
        %v832 = vadd.f32 0.0, %v831
        %v833 = vpop.f32.mrf.mxu0
        %834 = vdwg.mxu0
        %835 = vxpose.xlu0.c.b16.start [1/8] %v723, 128
        %836 = vxpose.xlu0.c.b16.cont [2/8] 0, 128
        %837 = vxpose.xlu0.c.b16.cont [3/8] 0, 128
        %838 = vxpose.xlu0.c.b16.cont [4/8] 0, 128
        %839 = vxpose.xlu0.c.b16.cont [5/8] 0, 128
        %840 = vxpose.xlu0.c.b16.cont [6/8] 0, 128
        %841 = vxpose.xlu0.c.b16.cont [7/8] 0, 128
        %842 = vxpose.xlu0.c.b16.end [8/8] 0, 128
        %v843 = vpop.trf.xlu0
        %v844 = vpop.trf.xlu0
        %v845 = vpop.trf.xlu0
        %v846 = vpop.trf.xlu0
        %v847 = vpop.trf.xlu0
        %v848 = vpop.trf.xlu0
        %v849 = vpop.trf.xlu0
        %v850 = vpop.trf.xlu0
        %v852 = vsel %vm744, %v843, 0
        %v855 = vsel %vm748, %v727, 0
        %857 = vmatpush.bf16.msra.mxu0 0
        %858 = vmatpush.bf16.msra.mxu0 0
        %859 = vmatpush.bf16.msra.mxu0 0
        %860 = vmatpush.bf16.msra.mxu0 0
        %861 = vmatpush.bf16.msra.mxu0 0
        %862 = vmatpush.bf16.msra.mxu0 0
        %863 = vmatpush.bf16.msra.mxu0 0
        %864 = vmatpush.bf16.msra.mxu0 %v855
        %865 = vmatmul.bf16.gmra.mxu0 %v852
        %v866 = vpop.f32.mrf.mxu0
        %v867 = vadd.f32 0.0, %v866
        %v868 = vpop.f32.mrf.mxu0
        %869 = vdwg.mxu0
        %v870 = vsel %vm744, %v762, -inf
        %871 = vmax.xlane.f32.xlu0 %v870
        %v872 = vpop.xlane.xlu0 %871
        %v873 = vsel %vm744, %v797, -inf
        %874 = vmax.xlane.f32.xlu0 %v873
        %v875 = vpop.xlane.xlu0 %874
        %v876 = vsel %vm744, %v832, -inf
        %877 = vmax.xlane.f32.xlu0 %v876
        %v878 = vpop.xlane.xlu0 %877
        %v879 = vsel %vm744, %v867, -inf
        %880 = vmax.xlane.f32.xlu0 %v879
        %v881 = vpop.xlane.xlu0 %880
        %v882 = vsub.f32 %v762, %v872
        %v883 = vsub.f32 %v797, %v875
        %v884 = vsub.f32 %v832, %v878
        %v885 = vsub.f32 %v867, %v881
        %v886 = vmul.f32 %v882, 1.442695
        %v887 = vpow.pop %v886
        %v888 = vmul.f32 %v883, 1.442695
        %v889 = vpow.pop %v888
        %v890 = vmul.f32 %v884, 1.442695
        %v891 = vpow.pop %v890
        %v892 = vmul.f32 %v885, 1.442695
        %v893 = vpow.pop %v892
        %v894 = vsel %vm744, %v887, 0.0
        %895 = vadd.xlane.f32.xlu0 %v894
        %v896 = vpop.xlane.xlu0 %895
        %v897 = vsel %vm744, %v889, 0.0
        %898 = vadd.xlane.f32.xlu0 %v897
        %v899 = vpop.xlane.xlu0 %898
        %v900 = vsel %vm744, %v891, 0.0
        %901 = vadd.xlane.f32.xlu0 %v900
        %v902 = vpop.xlane.xlu0 %901
        %v903 = vsel %vm744, %v893, 0.0
        %904 = vadd.xlane.f32.xlu0 %v903
        %v905 = vpop.xlane.xlu0 %904
        %v906 = vrcp.pop %v896
        %v907 = vrcp.pop %v899
        %v908 = vrcp.pop %v902
        %v909 = vrcp.pop %v905
        %v910 = vmul.f32 %v887, %v906
        %v911 = vmul.f32 %v889, %v907
        %v912 = vmul.f32 %v891, %v908
        %v913 = vmul.f32 %v893, %v909
        %v914 = vld [vmem:[#allocation3] sm:$0xf]
        %v915 = vld [vmem:[#allocation3 + $0x4] sm:$0xf]
        %v916 = vld [vmem:[#allocation3 + $0x8] sm:$0xf]
        %v917 = vld [vmem:[#allocation3 + $0xc] sm:$0xf]
        %v918 = vpack.c.bf16 %v910, %v910
        %v919 = vpack.c.bf16 %v911, %v911
        %v920 = vpack.c.bf16 %v912, %v912
        %v921 = vpack.c.bf16 %v913, %v913
        %v923 = vsel %vm744, %v914, 0
        %v926 = vsel %vm744, %v918, 0
        %928 = vmatpush.bf16.xpose.msra.mxu0 0
        %929 = vmatpush.bf16.xpose.msra.mxu0 0
        %930 = vmatpush.bf16.xpose.msra.mxu0 0
        %931 = vmatpush.bf16.xpose.msra.mxu0 0
        %932 = vmatpush.bf16.xpose.msra.mxu0 0
        %933 = vmatpush.bf16.xpose.msra.mxu0 0
        %934 = vmatpush.bf16.xpose.msra.mxu0 0
        %935 = vmatpush.bf16.xpose.msra.mxu0 %v926
        %936 = vmatmul.bf16.gmra.mxu0 %v923
        %v937 = vpop.f32.mrf.mxu0
        %v938 = vadd.f32 0.0, %v937
        %v939 = vpop.f32.mrf.mxu0
        %940 = vdwg.mxu0
        %v942 = vsel %vm744, %v915, 0
        %v945 = vsel %vm744, %v919, 0
        %947 = vmatpush.bf16.xpose.msra.mxu0 0
        %948 = vmatpush.bf16.xpose.msra.mxu0 0
        %949 = vmatpush.bf16.xpose.msra.mxu0 0
        %950 = vmatpush.bf16.xpose.msra.mxu0 0
        %951 = vmatpush.bf16.xpose.msra.mxu0 0
        %952 = vmatpush.bf16.xpose.msra.mxu0 0
        %953 = vmatpush.bf16.xpose.msra.mxu0 0
        %954 = vmatpush.bf16.xpose.msra.mxu0 %v945
        %955 = vmatmul.bf16.gmra.mxu0 %v942
        %v956 = vpop.f32.mrf.mxu0
        %v957 = vadd.f32 0.0, %v956
        %v958 = vpop.f32.mrf.mxu0
        %959 = vdwg.mxu0
        %v961 = vsel %vm744, %v916, 0
        %v964 = vsel %vm744, %v920, 0
        %966 = vmatpush.bf16.xpose.msra.mxu0 0
        %967 = vmatpush.bf16.xpose.msra.mxu0 0
        %968 = vmatpush.bf16.xpose.msra.mxu0 0
        %969 = vmatpush.bf16.xpose.msra.mxu0 0
        %970 = vmatpush.bf16.xpose.msra.mxu0 0
        %971 = vmatpush.bf16.xpose.msra.mxu0 0
        %972 = vmatpush.bf16.xpose.msra.mxu0 0
        %973 = vmatpush.bf16.xpose.msra.mxu0 %v964
        %974 = vmatmul.bf16.gmra.mxu0 %v961
        %v975 = vpop.f32.mrf.mxu0
        %v976 = vadd.f32 0.0, %v975
        %v977 = vpop.f32.mrf.mxu0
        %978 = vdwg.mxu0
        %v980 = vsel %vm744, %v917, 0
        %v983 = vsel %vm744, %v921, 0
        %985 = vmatpush.bf16.xpose.msra.mxu0 0
        %986 = vmatpush.bf16.xpose.msra.mxu0 0
        %987 = vmatpush.bf16.xpose.msra.mxu0 0
        %988 = vmatpush.bf16.xpose.msra.mxu0 0
        %989 = vmatpush.bf16.xpose.msra.mxu0 0
        %990 = vmatpush.bf16.xpose.msra.mxu0 0
        %991 = vmatpush.bf16.xpose.msra.mxu0 0
        %992 = vmatpush.bf16.xpose.msra.mxu0 %v983
        %993 = vmatmul.bf16.gmra.mxu0 %v980
        %v994 = vpop.f32.mrf.mxu0
        %v995 = vadd.f32 0.0, %v994
        %v996 = vpop.f32.mrf.mxu0
        %997 = vdwg.mxu0
        %998 = vxpose.xlu0.b32.start [1/16] %v938, 128
        %999 = vxpose.xlu0.b32.cont [2/16] %v957, 128
        %1000 = vxpose.xlu0.b32.cont [3/16] %v976, 128
        %1001 = vxpose.xlu0.b32.cont [4/16] %v995, 128
        %1002 = vxpose.xlu0.b32.cont [5/16] 0.0, 128
        %1003 = vxpose.xlu0.b32.cont [6/16] 0.0, 128
        %1004 = vxpose.xlu0.b32.cont [7/16] 0.0, 128
        %1005 = vxpose.xlu0.b32.cont [8/16] 0.0, 128
        %1006 = vxpose.xlu0.b32.cont [9/16] 0.0, 128
        %1007 = vxpose.xlu0.b32.cont [10/16] 0.0, 128
        %1008 = vxpose.xlu0.b32.cont [11/16] 0.0, 128
        %1009 = vxpose.xlu0.b32.cont [12/16] 0.0, 128
        %1010 = vxpose.xlu0.b32.cont [13/16] 0.0, 128
        %1011 = vxpose.xlu0.b32.cont [14/16] 0.0, 128
        %1012 = vxpose.xlu0.b32.cont [15/16] 0.0, 128
        %1013 = vxpose.xlu0.b32.end [16/16] 0.0, 128
        %v1014 = vpop.trf.xlu0
        %v1015 = vpop.trf.xlu0
        %v1016 = vpop.trf.xlu0
        %v1017 = vpop.trf.xlu0
        %v1018 = vpop.trf.xlu0
        %v1019 = vpop.trf.xlu0
        %v1020 = vpop.trf.xlu0
        %v1021 = vpop.trf.xlu0
        %v1022 = vpop.trf.xlu0
        %v1023 = vpop.trf.xlu0
        %v1024 = vpop.trf.xlu0
        %v1025 = vpop.trf.xlu0
        %v1026 = vpop.trf.xlu0
        %v1027 = vpop.trf.xlu0
        %v1028 = vpop.trf.xlu0
        %v1029 = vpop.trf.xlu0
        %v1030 = vpack.c.bf16 %v1014, %v1014
        %v1031 = vld [vmem:[%s5] sm:$0xf]
        %v1032 = vld [vmem:[%s5 + $0x4] sm:$0xf]
        %v1033 = vld [vmem:[%s5 + $0x8] sm:$0xf]
        %v1034 = vld [vmem:[%s5 + $0xc] sm:$0xf]
        %v1035 = vld [vmem:[%s6] sm:$0x1]
        %v1037 = vperm.slane %v1035, 0
        %v1043 = vunpack.c.l.b16 %v1031
        %v1044 = vunpack.c.l.b16 %v1032
        %v1045 = vunpack.c.l.b16 %v1033
        %v1046 = vunpack.c.l.b16 %v1034
        %v1047 = vpack.c.b16 %v1044, %v1043
        %v1048 = vpack.c.b16 %v1046, %v1045
        %v1052 = vsel %vm691, %v1030, 0
        %1054 = vmatpush.bf16.msra.mxu0 0
        %1055 = vmatpush.bf16.msra.mxu0 0
        %1056 = vmatpush.bf16.msra.mxu0 0
        %1057 = vmatpush.bf16.msra.mxu0 0
        %1058 = vmatpush.bf16.msra.mxu0 0
        %1059 = vmatpush.bf16.msra.mxu0 0
        %1060 = vmatpush.bf16.msra.mxu0 %v1048
        %1061 = vmatpush.bf16.msra.mxu0 %v1047
        %1062 = vmatmul.bf16.gmra.mxu0 %v1052
        %v1063 = vpop.f32.mrf.mxu0
        %v1064 = vadd.f32 %v1037, %v1063
        %v1065 = vpop.f32.mrf.mxu0
        %1066 = vdwg.mxu0
        %v1067 = vadd.f32 %v651, %v1064
        %v1068 = vsel %vm691, %v1067, 0.0
        %1069 = vadd.xlane.f32.xlu0 %v1068
        %v1070 = vpop.xlane.xlu0 %1069
        %v1071 = vrcp.pop 32.0
        %v1072 = vmul.f32 32.0, %v1071
        %v1073 = vsub.f32 1.0, %v1072
        %v1074 = vmul.f32 %v1071, %v1073
        %v1075 = vadd.f32 %v1071, %v1074
        %vm1076 = vweird.f32 %v1071
        %v1077 = vsel %vm1076, %v1071, %v1075
        %v1078 = vmul.f32 %v1070, %v1077
        %v1079 = vsub.f32 %v1067, %v1078
        %v1080 = vmul.f32 %v1079, %v1079
        %v1081 = vsel %vm691, %v1080, 0.0
        %1082 = vadd.xlane.f32.xlu0 %v1081
        %v1083 = vpop.xlane.xlu0 %1082
        %v1084 = vmul.f32 %v1083, %v1077
        %v1085 = vadd.f32 %v1084, 1e-05
        %v1086 = vrsqrt.pop %v1085
        %v1087 = vmul.f32 %v1086, %v1085
        %v1088 = vmul.f32 %v1087, %v1086
        %v1089 = vmul.f32 0.5, %v1088
        %v1090 = vsub.f32 1.5, %v1089
        %v1091 = vmul.f32 %v1086, %v1090
        %vm1092 = vweird.f32 %v1085
        %vm1093 = vweird.f32 %v1086
        %vm1094 = vmor %vm1092, %vm1093
        %v1095 = vsel %vm1094, %v1086, %v1091
        %v1096 = vmul.f32 %v1079, %v1095
        %v1097 = vld [vmem:[%s7] sm:$0x1]
        %v1099 = vperm.slane %v1097, 0
        %v1101 = vmul.f32 %v1096, %v1099
        %v1102 = vld [vmem:[%s8] sm:$0x1]
        %v1104 = vperm.slane %v1102, 0
        %v1106 = vadd.f32 %v1101, %v1104
        %v1107 = vpack.c.bf16 %v1106, %v1106
        %v1108 = vld [vmem:[%s9] sm:$0xf]
        %v1109 = vld [vmem:[%s9 + $0x4] sm:$0xf]
        %v1110 = vld [vmem:[%s9 + $0x8] sm:$0xf]
        %v1111 = vld [vmem:[%s9 + $0xc] sm:$0xf]
        %v1112 = vld [vmem:[%s10] sm:$0x1]
        %v1114 = vperm.slane %v1112, 0
        %v1120 = vunpack.c.l.b16 %v1108
        %v1121 = vunpack.c.l.b16 %v1109
        %v1122 = vunpack.c.l.b16 %v1110
        %v1123 = vunpack.c.l.b16 %v1111
        %v1124 = vpack.c.b16 %v1121, %v1120
        %v1125 = vpack.c.b16 %v1123, %v1122
        %v1129 = vsel %vm691, %v1107, 0
        %1131 = vmatpush.bf16.msra.mxu0 0
        %1132 = vmatpush.bf16.msra.mxu0 0
        %1133 = vmatpush.bf16.msra.mxu0 0
        %1134 = vmatpush.bf16.msra.mxu0 0
        %1135 = vmatpush.bf16.msra.mxu0 0
        %1136 = vmatpush.bf16.msra.mxu0 0
        %1137 = vmatpush.bf16.msra.mxu0 %v1125
        %1138 = vmatpush.bf16.msra.mxu0 %v1124
        %1139 = vmatmul.bf16.gmra.mxu0 %v1129
        %v1140 = vpop.f32.mrf.mxu0
        %v1141 = vadd.f32 %v1114, %v1140
        %v1142 = vpop.f32.mrf.mxu0
        %1143 = vdwg.mxu0
        %v1144 = vmul.f32 %v1141, 0.5
        %v1145 = vmul.f32 %v1141, 0.70710677
        %v1146 = vmul.f32 %v1145, %v1145
        %v1147 = vmin.f32 16.0, %v1146
        %v1148 = vmul.f32 %v1147, 2.1237322e-06
        %v1149 = vadd.f32 %v1148, 0.00028619796
        %v1150 = vmul.f32 %v1147, %v1149
        %v1151 = vadd.f32 %v1150, 0.0036580483
        %v1152 = vmul.f32 %v1147, %v1151
        %v1153 = vadd.f32 %v1152, 0.05243302
        %v1154 = vmul.f32 %v1147, %v1153
        %v1155 = vadd.f32 %v1154, 0.18741608
        %v1156 = vmul.f32 %v1147, %v1155
        %v1157 = vadd.f32 %v1156, 1.1283791
        %v1158 = vmul.f32 %v1145, %v1157
        %v1159 = vmul.f32 %v1147, 3.8918573e-05
        %v1160 = vadd.f32 %v1159, 0.001143296
        %v1161 = vmul.f32 %v1147, %v1160
        %v1162 = vadd.f32 %v1161, 0.014752088
        %v1163 = vmul.f32 %v1147, %v1162
        %v1164 = vadd.f32 %v1163, 0.112945676
        %v1165 = vmul.f32 %v1147, %v1164
        %v1166 = vadd.f32 %v1165, 0.4994258
        %v1167 = vmul.f32 %v1147, %v1166
        %v1168 = vadd.f32 %v1167, 1.0
        %v1169 = vrcp.pop %v1168
        %v1170 = vmul.f32 %v1168, %v1169
        %v1171 = vsub.f32 1.0, %v1170
        %v1172 = vmul.f32 %v1169, %v1171
        %v1173 = vadd.f32 %v1169, %v1172
        %vm1174 = vweird.f32 %v1168
        %vm1175 = vweird.f32 %v1169
        %vm1176 = vmor %vm1174, %vm1175
        %v1177 = vsel %vm1176, %v1169, %v1173
        %v1178 = vand.u32 2147483647, %v1168
        %vm1179 = vcmp.eq.f32.partialorder %v1178, 8.507059e+37
        %v1180 = vand.u32 %v1168, 2147483648
        %v1181 = vor.u32 1.1754944e-38, %v1180
        %v1182 = vsel %vm1179, %v1181, %v1177
        %v1183 = vmul.f32 %v1158, %v1182
        %v1184 = vmin.f32 %v1183, 1.0
        %v1185 = vmax.f32 %v1184, -1.0
        %v1186 = vadd.f32 %v1185, 1.0
        %v1187 = vmul.f32 %v1144, %v1186
        %v1188 = vpack.c.bf16 %v1187, %v1187
        %v1189 = vld [vmem:[%s11] sm:$0xf]
        %v1190 = vld [vmem:[%s11 + $0x4] sm:$0xf]
        %v1191 = vld [vmem:[%s11 + $0x8] sm:$0xf]
        %v1192 = vld [vmem:[%s11 + $0xc] sm:$0xf]
        %v1193 = vld [vmem:[%s11 + $0x10] sm:$0xf]
        %v1194 = vld [vmem:[%s11 + $0x14] sm:$0xf]
        %v1195 = vld [vmem:[%s11 + $0x18] sm:$0xf]
        %v1196 = vld [vmem:[%s11 + $0x1c] sm:$0xf]
        %v1197 = vld [vmem:[%s12] sm:$0x1]
        %v1199 = vperm.slane %v1197, 0
        %v1209 = vunpack.c.l.b16 %v1189
        %v1210 = vunpack.c.l.b16 %v1190
        %v1211 = vunpack.c.l.b16 %v1191
        %v1212 = vunpack.c.l.b16 %v1192
        %v1213 = vunpack.c.l.b16 %v1193
        %v1214 = vunpack.c.l.b16 %v1194
        %v1215 = vunpack.c.l.b16 %v1195
        %v1216 = vunpack.c.l.b16 %v1196
        %v1217 = vpack.c.b16 %v1210, %v1209
        %v1218 = vpack.c.b16 %v1212, %v1211
        %v1219 = vpack.c.b16 %v1214, %v1213
        %v1220 = vpack.c.b16 %v1216, %v1215
        %vm1225 = vcmask 523264
        %v1227 = vsel %vm1225, %v1188, 0
        %1229 = vmatpush.bf16.msra.mxu0 0
        %1230 = vmatpush.bf16.msra.mxu0 0
        %1231 = vmatpush.bf16.msra.mxu0 0
        %1232 = vmatpush.bf16.msra.mxu0 0
        %1233 = vmatpush.bf16.msra.mxu0 %v1220
        %1234 = vmatpush.bf16.msra.mxu0 %v1219
        %1235 = vmatpush.bf16.msra.mxu0 %v1218
        %1236 = vmatpush.bf16.msra.mxu0 %v1217
        %1237 = vmatmul.bf16.gmra.mxu0 %v1227
        %v1238 = vpop.f32.mrf.mxu0
        %v1239 = vadd.f32 %v1199, %v1238
        %v1240 = vpop.f32.mrf.mxu0
        %1241 = vdwg.mxu0
        %v1242 = vadd.f32 %v1106, %v1239
        %v1243 = vsel %vm691, %v1242, 0.0
        %1244 = vadd.xlane.f32.xlu0 %v1243
        %v1245 = vpop.xlane.xlu0 %1244
        %v1246 = vmul.f32 %v1245, %v1077
        %v1247 = vsub.f32 %v1242, %v1246
        %v1248 = vmul.f32 %v1247, %v1247
        %v1249 = vsel %vm691, %v1248, 0.0
        %1250 = vadd.xlane.f32.xlu0 %v1249
        %v1251 = vpop.xlane.xlu0 %1250
        %v1252 = vmul.f32 %v1251, %v1077
        %v1253 = vadd.f32 %v1252, 1e-05
        %v1254 = vrsqrt.pop %v1253
        %v1255 = vmul.f32 %v1254, %v1253
        %v1256 = vmul.f32 %v1255, %v1254
        %v1257 = vmul.f32 0.5, %v1256
        %v1258 = vsub.f32 1.5, %v1257
        %v1259 = vmul.f32 %v1254, %v1258
        %vm1260 = vweird.f32 %v1253
        %vm1261 = vweird.f32 %v1254
        %vm1262 = vmor %vm1260, %vm1261
        %v1263 = vsel %vm1262, %v1254, %v1259
        %v1264 = vmul.f32 %v1247, %v1263
        %v1265 = vld [vmem:[%s13] sm:$0x1]
        %v1267 = vperm.slane %v1265, 0
        %v1269 = vmul.f32 %v1264, %v1267
        %v1270 = vld [vmem:[%s14] sm:$0x1]
        %v1272 = vperm.slane %v1270, 0
        %v1274 = vadd.f32 %v1269, %v1272
        %1275 = vst.msk [vmem:[%s499] sm:$0xff] %vm691, %v1274
        %s1276 = sand.u32 %s371, 1
        %s1277 = scalar_lea.sflag [#allocation5], %s1276
        %s1278 = sand.u32 %s371, 1
        %s1279 = smul.addr %s1278, 8
        %s1280 = scalar_lea.vmem [#allocation4], %s1279
        // Predicated region
        $region85: #{tpu_custom_call.1} parent=79 // pred_check
          %p1281 = pneg %p381
        $region86: #{tpu_custom_call.1} parent=79 // pred_check_branch
          %1283 = sbr.rel (%p1281) target = $region88
        $region87: #{tpu_custom_call.1} parent=79 // pred_region
          %1285 = vsyncadd %s1277, 0
          %s1286 = sadd.s32 %s34, %s33
          %s1287 = smul.addr %s1286, 8
          %s1288 = scalar_lea.hbm %s15, %s1287
          %s1290 = sshll.u32 %s1280, 4
          %s1291 = int_to_ptr.vmem [resolvable:$true] %s1290
          %s1292 = sshll.u32 %s1288, 4
          %s1293 = int_to_ptr.hbm [resolvable:$true] %s1292
          %1295 = dma.vmem_to_hbm [thread:$0]  %s1291, 128, %s1293, %s1277
        $region88: #{tpu_custom_call.1} parent=79 // pred_fallthru
          _
      $region80: #{tpu_custom_call.1} parent=5 // pred_fallthru
        _
      %p1296 = scmp.le.s32.totalorder 2, %s24
      // Predicated region
      $region89: #{tpu_custom_call.1} parent=5 // pred_check
        %p1297 = pneg %p1296
      $region90: #{tpu_custom_call.1} parent=5 // pred_check_branch
        %1299 = sbr.rel (%p1297) target = $region92
      $region91: #{tpu_custom_call.1} parent=5 // pred_region
        %s1300 = ssub.s32 %s24, 2
        // Predicated region
        $region93: #{tpu_custom_call.1} parent=91 // pred_check
          %p1301 = pneg %p387
        $region94: #{tpu_custom_call.1} parent=91 // pred_check_branch
          %1303 = sbr.rel (%p1301) target = $region96
        $region95: #{tpu_custom_call.1} parent=91 // pred_region
          %s1304 = sand.u32 %s372, 1
          %s1305 = scalar_lea.sflag [#allocation5], %s1304
          %s1306 = sand.u32 %s372, 1
          %s1307 = smul.addr %s1306, 8
          %s1308 = scalar_lea.vmem [#allocation4], %s1307
          %1310 = dma.done %s1305, 128
        $region96: #{tpu_custom_call.1} parent=91 // pred_fallthru
          _
      $region92: #{tpu_custom_call.1} parent=5 // pred_fallthru
        _
    $region6: #{tpu_custom_call.1} parent=1 // loop_footer
      %s28 = sadd.s32 1, %s24
    $region7: #{tpu_custom_call.1} parent=1 // loop_footer_branch
      %23 = sbr.rel target = $region3
    $region8: #{tpu_custom_call.1} parent=1 // loop_exit
      _
    %1311 = vsyncpa [#allocation5], 1
    %s1312 = scalar_lea.sflag [#allocation5], 1
    %1313 = vsyncpa %s1312, 1

</llo_original>
